<compile_context>
chip_gen: v5e
topology: v5e:2x2
jax: 0.10.0
libtpu: 0.0.40
codegen_flags: <defaults>
</compile_context>

<pallas_src>
import numpy as np
import jax
import jax.numpy as jnp
from jax import lax
from jax.experimental import pallas as pl
from jax.experimental.pallas import tpu as pltpu

LANE = 128
SUBLANE = 8


def _round_up(x, m):
    return (x + m - 1) // m * m


# ----------------------- fused LSTM-stack Pallas kernel --------------------- #

def make_lstm_stack_kernel(num_layers, seq_len, hp):
    """Kernel: run `num_layers` LSTM layers over the whole time-major sequence
    entirely in VMEM.

    Refs:
      x_ref   : [T1, Bp, D]     bf16  padded input sequence
      wih_ref : [L, D, 4*Hp]    bf16  input-projection weights (transposed, gate-padded)
      whh_ref : [L, Hp, 4*Hp]   bf16  recurrent weights (transposed, gate-padded)
      b_ref   : [L, 1, 4*Hp]    f32   b_ih + b_hh (gate-padded)
      out_ref : [T1, Bp, Hp]    bf16  final-layer hidden sequence
    Scratch:
      seq_a, seq_b : [T1, Bp, Hp] bf16   ping-pong inter-layer buffers
      gx_scr       : [T1, Bp, 4*Hp] f32  hoisted input projection
      h_scr, c_scr : [Bp, Hp] f32
    PyTorch gate order (i, f, g, o); each gate block is Hp lanes wide so the
    gate slices fall on 128-lane vreg boundaries.
    """

    def kernel(x_ref, wih_ref, whh_ref, b_ref, out_ref,
               seq_a, seq_b, gx_scr, h_scr, c_scr):

        def run_layer(layer, src_ref, dst_ref):
            t1, bp, din = src_ref.shape
            # Hoisted input projection + bias: one big MXU matmul over all
            # T1*Bp rows, off the serial critical path of the recurrence.
            x2d = src_ref[...].reshape(t1 * bp, din)
            gx = (jnp.dot(x2d, wih_ref[layer],
                          preferred_element_type=jnp.float32)
                  + b_ref[layer])
            gx_scr[...] = gx.reshape(t1, bp, 4 * hp)

            h_scr[...] = jnp.zeros_like(h_scr)
            c_scr[...] = jnp.zeros_like(c_scr)
            whh_l = whh_ref[layer]                       # hoisted above the loop

            def step(t, carry):
                gates = (jnp.dot(h_scr[...].astype(jnp.bfloat16), whh_l,
                                 preferred_element_type=jnp.float32)
                         + gx_scr[t])                    # [Bp, 4*Hp] f32
                i_g = jax.nn.sigmoid(gates[:, 0 * hp:1 * hp])
                f_g = jax.nn.sigmoid(gates[:, 1 * hp:2 * hp])
                g_g = jnp.tanh(gates[:, 2 * hp:3 * hp])
                o_g = jax.nn.sigmoid(gates[:, 3 * hp:4 * hp])
                c_new = f_g * c_scr[...] + i_g * g_g
                h_new = o_g * jnp.tanh(c_new)
                c_scr[...] = c_new
                h_scr[...] = h_new
                dst_ref[t] = h_new.astype(dst_ref.dtype)
                return carry

            # Short static trip count -> full unroll for scheduler visibility.
            lax.fori_loop(0, seq_len, step, 0, unroll=True)

        src = x_ref
        for layer in range(num_layers):
            dst = out_ref if layer == num_layers - 1 else \
                (seq_a if layer % 2 == 0 else seq_b)
            run_layer(layer, src, dst)
            src = dst

    return kernel


def run_lstm_stack(x, wih, whh, b):
    """x [T1, Bp, D] bf16 -> final-layer hidden states [T1, Bp, Hp] bf16."""
    t1, bp, _ = x.shape
    num_layers, _, g4 = wih.shape
    hp = g4 // 4
    kernel = make_lstm_stack_kernel(num_layers, t1, hp)
    return pl.pallas_call(
        kernel,
        out_shape=jax.ShapeDtypeStruct((t1, bp, hp), jnp.bfloat16),
        in_specs=[pl.BlockSpec(memory_space=pltpu.MemorySpace.VMEM)] * 4,
        out_specs=pl.BlockSpec(memory_space=pltpu.MemorySpace.VMEM),
        scratch_shapes=[
            pltpu.VMEM((t1, bp, hp), jnp.bfloat16),       # seq ping
            pltpu.VMEM((t1, bp, hp), jnp.bfloat16),       # seq pong
            pltpu.VMEM((t1, bp, 4 * hp), jnp.float32),    # hoisted gates_x
            pltpu.VMEM((bp, hp), jnp.float32),            # h
            pltpu.VMEM((bp, hp), jnp.float32),            # c
        ],
    )(x, wih, whh, b)


# ---------------- fused pack-gather + output-projection kernel -------------- #

def fc_gather_kernel(idx_ref, h_ref, w_ref, b_ref, o_ref, gat_scr):
    """Gather the packed (valid) hidden rows and apply the output Linear.

    idx_ref : SMEM [Np] int32   flat row indices into the flattened LSTM output
    h_ref   : [T1*Bp, Hp] bf16  w_ref: [Hp, TV] bf16   b_ref: [1, TV] f32
    o_ref   : [Np, TV] f32      gat_scr: [Np, Hp] bf16
    """
    np_rows = o_ref.shape[0]

    def gather(n, carry):
        row = idx_ref[n]
        gat_scr[pl.ds(n, 1), :] = h_ref[pl.ds(row, 1), :]
        return carry

    lax.fori_loop(0, np_rows, gather, 0, unroll=True)
    o_ref[...] = (jnp.dot(gat_scr[...], w_ref[...],
                          preferred_element_type=jnp.float32)
                  + b_ref[...])


def run_fc_packed(flat_idx, h2d, w, b, np_rows, tv=512):
    """Packed logits [Np, Vp] = gather(h2d, flat_idx) @ w + b, gridded over V."""
    tb, hp = h2d.shape
    vp = w.shape[1]
    tv = min(vp, tv)
    while vp % tv:           # keep TV a lane-multiple divisor of Vp
        tv -= LANE
    return pl.pallas_call(
        fc_gather_kernel,
        out_shape=jax.ShapeDtypeStruct((np_rows, vp), jnp.float32),
        grid_spec=pltpu.PrefetchScalarGridSpec(
            num_scalar_prefetch=1,
            grid=(vp // tv,),
            in_specs=[pl.BlockSpec((tb, hp), lambda j, idx: (0, 0)),
                      pl.BlockSpec((hp, tv), lambda j, idx: (0, j)),
                      pl.BlockSpec((1, tv), lambda j, idx: (0, j))],
            out_specs=pl.BlockSpec((np_rows, tv), lambda j, idx: (0, j)),
            scratch_shapes=[pltpu.VMEM((np_rows, hp), jnp.bfloat16)],
        ),
        compiler_params=pltpu.CompilerParams(
            dimension_semantics=("parallel",)),
    )(flat_idx, h2d, w, b)


# ------------------------------ param prep ---------------------------------- #

def prepare_params(params, no_word_embeddings, hidden_size, vocab_size,
                   num_layers):
    """Pad / transpose / cast weights ONCE (not per forward call).

    Gate blocks are re-laid-out so each of (i,f,g,o) occupies a full Hp-lane
    block; padded hidden units have zero weights and zero bias so they stay
    exactly zero through the recurrence.
    """
    e, h, v, nl = no_word_embeddings, hidden_size, vocab_size, num_layers
    d = max(_round_up(e, LANE), _round_up(h, LANE))   # common padded feature dim
    hp = d                                            # padded hidden dim
    vp = _round_up(v, LANE)

    wih_all = np.zeros((nl, d, 4 * hp), np.float32)
    whh_all = np.zeros((nl, hp, 4 * hp), np.float32)
    b_all = np.zeros((nl, 1, 4 * hp), np.float32)
    for l, (wih, whh, bias) in enumerate(params["lstm"]):
        in_dim = wih.shape[1]
        wih_t = np.asarray(wih, np.float32).T          # [in_dim, 4H]
        whh_t = np.asarray(whh, np.float32).T          # [H, 4H]
        b_np = np.asarray(bias, np.float32)            # [4H]
        for g in range(4):
            wih_all[l, :in_dim, g * hp:g * hp + h] = wih_t[:, g * h:(g + 1) * h]
            whh_all[l, :h, g * hp:g * hp + h] = whh_t[:, g * h:(g + 1) * h]
            b_all[l, 0, g * hp:g * hp + h] = b_np[g * h:(g + 1) * h]

    fc_w = np.zeros((hp, vp), np.float32)
    fc_w[:h, :v] = np.asarray(params["fc_w"], np.float32).T
    fc_b = np.zeros((1, vp), np.float32)
    fc_b[0, :v] = np.asarray(params["fc_b"], np.float32)

    return {
        "emb": jnp.asarray(params["embedding"], jnp.float32),
        "wih": jnp.asarray(wih_all, jnp.bfloat16),
        "whh": jnp.asarray(whh_all, jnp.bfloat16),
        "b": jnp.asarray(b_all, jnp.float32),
        "fc_w": jnp.asarray(fc_w, jnp.bfloat16),
        "fc_b": jnp.asarray(fc_b, jnp.float32),
        "dims": dict(E=e, H=h, V=v, D=d, Hp=hp, Vp=vp, L=nl),
    }


# ------------------------------ forward pass -------------------------------- #

def rnn_forward(image_embeddings, captions, lengths, prepared):
    """Pallas-backed forward pass matching RNN.forward (dropout_prob=0)."""
    dims = prepared["dims"]
    e, v = dims["E"], dims["V"]
    d, hp = dims["D"], dims["Hp"]

    b, t = captions.shape
    t1 = t + 1
    bp = _round_up(b, SUBLANE)

    # --- glue: embedding lookup + concatenated time-major padded sequence ---
    word_emb = prepared["emb"][captions]                       # [B, T, E]
    x = jnp.concatenate(
        [image_embeddings[:, None, :].astype(jnp.float32), word_emb], axis=1)
    x = jnp.transpose(x, (1, 0, 2))                            # [T1, B, E]
    x = jnp.pad(x, ((0, 0), (0, bp - b), (0, d - e))).astype(jnp.bfloat16)

    # --- fused LSTM stack (single kernel, all layers) ---
    lstm_out = run_lstm_stack(x, prepared["wih"], prepared["whh"],
                              prepared["b"])                    # [T1, Bp, Hp]

    # --- pack_padded_sequence ordering (host, static lengths) ---
    ts, bs = [], []
    for s in range(t):
        for bb in range(b):
            if lengths[bb] > s:
                ts.append(s)
                bs.append(bb)
    n = len(ts)
    np_rows = _round_up(n, SUBLANE)
    flat = (np.asarray(ts, np.int32) + 1) * bp + np.asarray(bs, np.int32)
    flat = np.concatenate([flat, np.zeros(np_rows - n, np.int32)])
    flat = jnp.asarray(flat, jnp.int32)

    # --- fused gather + fc_output kernel ---
    h2d = lstm_out.reshape(t1 * bp, hp)
    logits_p = run_fc_packed(flat, h2d, prepared["fc_w"], prepared["fc_b"],
                             np_rows)
    return logits_p[:n, :v]                                    # [N, V]


# ----------------------------- pure-JAX reference --------------------------- #

def rnn_forward_ref(image_embeddings, captions, lengths, params):
    emb_table = params["embedding"]
    lstm_params = params["lstm"]
    fc_w, fc_b = params["fc_w"], params["fc_b"]
    b, t = captions.shape

    word_emb = emb_table[captions]
    x = jnp.concatenate([image_embeddings[:, None, :], word_emb], axis=1)
    x = jnp.transpose(x, (1, 0, 2)).astype(jnp.float32)        # [T+1, B, E]

    for (wih, whh, bias) in lstm_params:
        h_dim = whh.shape[1]

        def step(carry, x_t):
            h, c = carry
            gates = x_t @ wih.T + h @ whh.T + bias
            i = jax.nn.sigmoid(gates[:, :h_dim])
            f = jax.nn.sigmoid(gates[:, h_dim:2 * h_dim])
            g = jnp.tanh(gates[:, 2 * h_dim:3 * h_dim])
            o = jax.nn.sigmoid(gates[:, 3 * h_dim:])
            c = f * c + i * g
            h = o * jnp.tanh(c)
            return (h, c), h

        init = (jnp.zeros((b, h_dim), jnp.float32),
                jnp.zeros((b, h_dim), jnp.float32))
        _, x = lax.scan(step, init, x)

    ts, bs = [], []
    for s in range(t):
        for bb in range(b):
            if lengths[bb] > s:
                ts.append(s)
                bs.append(bb)
    packed_h = x[np.asarray(ts) + 1, np.asarray(bs)]
    return packed_h @ fc_w.T + fc_b


# ----------------------------- main ----------------------------------------- #

if __name__ == "__main__":
    # small shapes consistent with the module
    vocab_size = 64
    no_word_embeddings = 32       # E
    hidden_size = 32              # H
    num_layers = 2
    batch = 4
    seq_len = 8
    lengths = [8, 7, 5, 3]        # sorted descending (pack_padded_sequence req.)

    key = jax.random.PRNGKey(0)
    keys = jax.random.split(key, 16)

    params = {}
    params["embedding"] = 0.1 * jax.random.normal(
        keys[0], (vocab_size, no_word_embeddings), jnp.float32)

    lstm_params = []
    k_idx = 1
    for layer in range(num_layers):
        in_dim = no_word_embeddings if layer == 0 else hidden_size
        scale = 1.0 / np.sqrt(hidden_size)
        w_ih = scale * jax.random.normal(keys[k_idx], (4 * hidden_size, in_dim),
                                         jnp.float32); k_idx += 1
        w_hh = scale * jax.random.normal(keys[k_idx], (4 * hidden_size, hidden_size),
                                         jnp.float32); k_idx += 1
        b_ih = scale * jax.random.normal(keys[k_idx], (4 * hidden_size,),
                                         jnp.float32); k_idx += 1
        b_hh = scale * jax.random.normal(keys[k_idx], (4 * hidden_size,),
                                         jnp.float32); k_idx += 1
        lstm_params.append((w_ih, w_hh, b_ih + b_hh))
    params["lstm"] = lstm_params

    params["fc_w"] = (1.0 / np.sqrt(hidden_size)) * jax.random.normal(
        keys[k_idx], (vocab_size, hidden_size), jnp.float32); k_idx += 1
    params["fc_b"] = (1.0 / np.sqrt(hidden_size)) * jax.random.normal(
        keys[k_idx], (vocab_size,), jnp.float32); k_idx += 1

    image_embeddings = jax.random.normal(
        keys[k_idx], (batch, no_word_embeddings), jnp.float32); k_idx += 1
    captions = jax.random.randint(
        keys[k_idx], (batch, seq_len), 0, vocab_size, jnp.int32)

    prepared = prepare_params(params, no_word_embeddings, hidden_size,
                              vocab_size, num_layers)

    out = rnn_forward(image_embeddings, captions, lengths, prepared)
    out = jax.block_until_ready(out)

    ref = rnn_forward_ref(image_embeddings, captions, lengths, params)
    ref = jax.block_until_ready(ref)

    expected_n = sum(lengths)
    assert out.shape == (expected_n, vocab_size), out.shape
    # bf16 MXU path vs f32 reference -> loosened tolerance (f32 accumulation,
    # f32 gate elementwise; only matmul operands are bf16).
    np.testing.assert_allclose(np.asarray(out), np.asarray(ref),
                               rtol=3e-2, atol=3e-2)

    print("KERNEL_OK")
</pallas_src>

<mosaic_0001>
module attributes {stable_mosaic.version = 11 : i64} {
  func.func @kernel(%arg0: memref<9x8x128xbf16, #tpu.memory_space<vmem>>, %arg1: memref<2x128x512xbf16, #tpu.memory_space<vmem>>, %arg2: memref<2x128x512xbf16, #tpu.memory_space<vmem>>, %arg3: memref<2x1x512xf32, #tpu.memory_space<vmem>>, %arg4: memref<9x8x128xbf16, #tpu.memory_space<vmem>>, %arg5: memref<9x8x128xbf16, #tpu.memory_space<vmem>>, %arg6: memref<9x8x128xbf16, #tpu.memory_space<vmem>>, %arg7: memref<9x8x512xf32, #tpu.memory_space<vmem>>, %arg8: memref<8x128xf32, #tpu.memory_space<vmem>>, %arg9: memref<8x128xf32, #tpu.memory_space<vmem>>) attributes {dimension_semantics = [], scalar_prefetch = 0 : i64, scratch_operands = 5 : i64, tpu.core_type = #tpu.core_type<tc>} {
    %c0 = arith.constant 0 : index
    %c0_0 = arith.constant 0 : index
    %c0_1 = arith.constant 0 : index
    %0 = vector.load %arg0[%c0, %c0_0, %c0_1] : memref<9x8x128xbf16, #tpu.memory_space<vmem>>, vector<9x8x128xbf16>
    %1 = vector.shape_cast %0 : vector<9x8x128xbf16> to vector<72x128xbf16>
    %c0_2 = arith.constant 0 : index
    %c0_3 = arith.constant 0 : index
    %c0_4 = arith.constant 0 : index
    %2 = vector.load %arg1[%c0_2, %c0_3, %c0_4] : memref<2x128x512xbf16, #tpu.memory_space<vmem>>, vector<1x128x512xbf16>
    %3 = vector.shape_cast %2 : vector<1x128x512xbf16> to vector<128x512xbf16>
    %cst = arith.constant dense<0.000000e+00> : vector<72x512xf32>
    %4 = tpu.matmul %1, %3, %cst {dimension_numbers = #tpu.dot_dimension_numbers<[1], [0], [0], [1], [0, 0, 1, 1], [], []>} : vector<72x128xbf16>, vector<128x512xbf16>, vector<72x512xf32> -> vector<72x512xf32>
    %c0_5 = arith.constant 0 : index
    %c0_6 = arith.constant 0 : index
    %c0_7 = arith.constant 0 : index
    %5 = vector.load %arg3[%c0_5, %c0_6, %c0_7] : memref<2x1x512xf32, #tpu.memory_space<vmem>>, vector<1x1x512xf32>
    %6 = vector.shape_cast %5 : vector<1x1x512xf32> to vector<1x512xf32>
    %7 = vector.broadcast %6 : vector<1x512xf32> to vector<72x512xf32>
    %8 = arith.addf %4, %7 : vector<72x512xf32>
    %9 = vector.shape_cast %8 : vector<72x512xf32> to vector<9x8x512xf32>
    %c0_8 = arith.constant 0 : index
    %c0_9 = arith.constant 0 : index
    %c0_10 = arith.constant 0 : index
    %10 = vector.load %arg7[%c0_8, %c0_9, %c0_10] : memref<9x8x512xf32, #tpu.memory_space<vmem>>, vector<9x8x512xf32>
    tpu.vector_store %arg7[%c0_8, %c0_9, %c0_10], %9 {strides = array<i32>} : memref<9x8x512xf32, #tpu.memory_space<vmem>>, vector<9x8x512xf32>,
    %cst_11 = arith.constant 0.000000e+00 : f32
    %11 = vector.broadcast %cst_11 : f32 to vector<8x128xf32>
    %c0_12 = arith.constant 0 : index
    %c0_13 = arith.constant 0 : index
    %12 = vector.load %arg8[%c0_12, %c0_13] : memref<8x128xf32, #tpu.memory_space<vmem>>, vector<8x128xf32>
    tpu.vector_store %arg8[%c0_12, %c0_13], %11 {strides = array<i32>} : memref<8x128xf32, #tpu.memory_space<vmem>>, vector<8x128xf32>,
    %cst_14 = arith.constant 0.000000e+00 : f32
    %13 = vector.broadcast %cst_14 : f32 to vector<8x128xf32>
    %c0_15 = arith.constant 0 : index
    %c0_16 = arith.constant 0 : index
    %14 = vector.load %arg9[%c0_15, %c0_16] : memref<8x128xf32, #tpu.memory_space<vmem>>, vector<8x128xf32>
    tpu.vector_store %arg9[%c0_15, %c0_16], %13 {strides = array<i32>} : memref<8x128xf32, #tpu.memory_space<vmem>>, vector<8x128xf32>,
    %c0_17 = arith.constant 0 : index
    %c0_18 = arith.constant 0 : index
    %c0_19 = arith.constant 0 : index
    %15 = vector.load %arg2[%c0_17, %c0_18, %c0_19] : memref<2x128x512xbf16, #tpu.memory_space<vmem>>, vector<1x128x512xbf16>
    %16 = vector.shape_cast %15 : vector<1x128x512xbf16> to vector<128x512xbf16>
    %c0_i32 = arith.constant 0 : i32
    %c0_20 = arith.constant 0 : index
    %c0_21 = arith.constant 0 : index
    %17 = vector.load %arg8[%c0_20, %c0_21] : memref<8x128xf32, #tpu.memory_space<vmem>>, vector<8x128xf32>
    %18 = arith.truncf %17 : vector<8x128xf32> to vector<8x128xbf16>
    %cst_22 = arith.constant dense<0.000000e+00> : vector<8x512xf32>
    %19 = tpu.matmul %18, %16, %cst_22 {dimension_numbers = #tpu.dot_dimension_numbers<[1], [0], [0], [1], [0, 0, 1, 1], [], []>} : vector<8x128xbf16>, vector<128x512xbf16>, vector<8x512xf32> -> vector<8x512xf32>
    %20 = arith.index_cast %c0_i32 : i32 to index
    %c0_23 = arith.constant 0 : index
    %c0_24 = arith.constant 0 : index
    %21 = vector.load %arg7[%20, %c0_23, %c0_24] : memref<9x8x512xf32, #tpu.memory_space<vmem>>, vector<1x8x512xf32>
    %22 = vector.shape_cast %21 : vector<1x8x512xf32> to vector<8x512xf32>
    %23 = arith.addf %19, %22 : vector<8x512xf32>
    %24 = vector.extract_strided_slice %23 {offsets = [0, 0], sizes = [8, 128], strides = [1, 1]} : vector<8x512xf32> to vector<8x128xf32>
    %25 = arith.negf %24 : vector<8x128xf32>
    %26 = math.exp %25 : vector<8x128xf32>
    %cst_25 = arith.constant 1.000000e+00 : f32
    %27 = vector.broadcast %cst_25 : f32 to vector<8x128xf32>
    %28 = arith.addf %27, %26 : vector<8x128xf32>
    %29 = arith.divf %27, %28 : vector<8x128xf32>
    %30 = vector.extract_strided_slice %23 {offsets = [0, 128], sizes = [8, 128], strides = [1, 1]} : vector<8x512xf32> to vector<8x128xf32>
    %31 = arith.negf %30 : vector<8x128xf32>
    %32 = math.exp %31 : vector<8x128xf32>
    %cst_26 = arith.constant 1.000000e+00 : f32
    %33 = vector.broadcast %cst_26 : f32 to vector<8x128xf32>
    %34 = arith.addf %33, %32 : vector<8x128xf32>
    %35 = arith.divf %33, %34 : vector<8x128xf32>
    %36 = vector.extract_strided_slice %23 {offsets = [0, 256], sizes = [8, 128], strides = [1, 1]} : vector<8x512xf32> to vector<8x128xf32>
    %37 = math.tanh %36 : vector<8x128xf32>
    %38 = vector.extract_strided_slice %23 {offsets = [0, 384], sizes = [8, 128], strides = [1, 1]} : vector<8x512xf32> to vector<8x128xf32>
    %39 = arith.negf %38 : vector<8x128xf32>
    %40 = math.exp %39 : vector<8x128xf32>
    %cst_27 = arith.constant 1.000000e+00 : f32
    %41 = vector.broadcast %cst_27 : f32 to vector<8x128xf32>
    %42 = arith.addf %41, %40 : vector<8x128xf32>
    %43 = arith.divf %41, %42 : vector<8x128xf32>
    %c0_28 = arith.constant 0 : index
    %c0_29 = arith.constant 0 : index
    %44 = vector.load %arg9[%c0_28, %c0_29] : memref<8x128xf32, #tpu.memory_space<vmem>>, vector<8x128xf32>
    %45 = arith.mulf %35, %44 : vector<8x128xf32>
    %46 = arith.mulf %29, %37 : vector<8x128xf32>
    %47 = arith.addf %45, %46 : vector<8x128xf32>
    %48 = math.tanh %47 : vector<8x128xf32>
    %49 = arith.mulf %43, %48 : vector<8x128xf32>
    %c0_30 = arith.constant 0 : index
    %c0_31 = arith.constant 0 : index
    %50 = vector.load %arg9[%c0_30, %c0_31] : memref<8x128xf32, #tpu.memory_space<vmem>>, vector<8x128xf32>
    tpu.vector_store %arg9[%c0_30, %c0_31], %47 {strides = array<i32>} : memref<8x128xf32, #tpu.memory_space<vmem>>, vector<8x128xf32>,
    %c0_32 = arith.constant 0 : index
    %c0_33 = arith.constant 0 : index
    %51 = vector.load %arg8[%c0_32, %c0_33] : memref<8x128xf32, #tpu.memory_space<vmem>>, vector<8x128xf32>
    tpu.vector_store %arg8[%c0_32, %c0_33], %49 {strides = array<i32>} : memref<8x128xf32, #tpu.memory_space<vmem>>, vector<8x128xf32>,
    %52 = arith.truncf %49 : vector<8x128xf32> to vector<8x128xbf16>
    %53 = arith.index_cast %c0_i32 : i32 to index
    %c0_34 = arith.constant 0 : index
    %c0_35 = arith.constant 0 : index
    %54 = vector.load %arg5[%53, %c0_34, %c0_35] : memref<9x8x128xbf16, #tpu.memory_space<vmem>>, vector<1x8x128xbf16>
    %55 = vector.shape_cast %54 : vector<1x8x128xbf16> to vector<8x128xbf16>
    %56 = vector.shape_cast %52 : vector<8x128xbf16> to vector<1x8x128xbf16>
    tpu.vector_store %arg5[%53, %c0_34, %c0_35], %56 {strides = array<i32>} : memref<9x8x128xbf16, #tpu.memory_space<vmem>>, vector<1x8x128xbf16>,
    %c1_i32 = arith.constant 1 : i32
    %c0_36 = arith.constant 0 : index
    %c0_37 = arith.constant 0 : index
    %57 = vector.load %arg8[%c0_36, %c0_37] : memref<8x128xf32, #tpu.memory_space<vmem>>, vector<8x128xf32>
    %58 = arith.truncf %57 : vector<8x128xf32> to vector<8x128xbf16>
    %cst_38 = arith.constant dense<0.000000e+00> : vector<8x512xf32>
    %59 = tpu.matmul %58, %16, %cst_38 {dimension_numbers = #tpu.dot_dimension_numbers<[1], [0], [0], [1], [0, 0, 1, 1], [], []>} : vector<8x128xbf16>, vector<128x512xbf16>, vector<8x512xf32> -> vector<8x512xf32>
    %60 = arith.index_cast %c1_i32 : i32 to index
    %c0_39 = arith.constant 0 : index
    %c0_40 = arith.constant 0 : index
    %61 = vector.load %arg7[%60, %c0_39, %c0_40] : memref<9x8x512xf32, #tpu.memory_space<vmem>>, vector<1x8x512xf32>
    %62 = vector.shape_cast %61 : vector<1x8x512xf32> to vector<8x512xf32>
    %63 = arith.addf %59, %62 : vector<8x512xf32>
    %64 = vector.extract_strided_slice %63 {offsets = [0, 0], sizes = [8, 128], strides = [1, 1]} : vector<8x512xf32> to vector<8x128xf32>
    %65 = arith.negf %64 : vector<8x128xf32>
    %66 = math.exp %65 : vector<8x128xf32>
    %cst_41 = arith.constant 1.000000e+00 : f32
    %67 = vector.broadcast %cst_41 : f32 to vector<8x128xf32>
    %68 = arith.addf %67, %66 : vector<8x128xf32>
    %69 = arith.divf %67, %68 : vector<8x128xf32>
    %70 = vector.extract_strided_slice %63 {offsets = [0, 128], sizes = [8, 128], strides = [1, 1]} : vector<8x512xf32> to vector<8x128xf32>
    %71 = arith.negf %70 : vector<8x128xf32>
    %72 = math.exp %71 : vector<8x128xf32>
    %cst_42 = arith.constant 1.000000e+00 : f32
    %73 = vector.broadcast %cst_42 : f32 to vector<8x128xf32>
    %74 = arith.addf %73, %72 : vector<8x128xf32>
    %75 = arith.divf %73, %74 : vector<8x128xf32>
    %76 = vector.extract_strided_slice %63 {offsets = [0, 256], sizes = [8, 128], strides = [1, 1]} : vector<8x512xf32> to vector<8x128xf32>
    %77 = math.tanh %76 : vector<8x128xf32>
    %78 = vector.extract_strided_slice %63 {offsets = [0, 384], sizes = [8, 128], strides = [1, 1]} : vector<8x512xf32> to vector<8x128xf32>
    %79 = arith.negf %78 : vector<8x128xf32>
    %80 = math.exp %79 : vector<8x128xf32>
    %cst_43 = arith.constant 1.000000e+00 : f32
    %81 = vector.broadcast %cst_43 : f32 to vector<8x128xf32>
    %82 = arith.addf %81, %80 : vector<8x128xf32>
    %83 = arith.divf %81, %82 : vector<8x128xf32>
    %c0_44 = arith.constant 0 : index
    %c0_45 = arith.constant 0 : index
    %84 = vector.load %arg9[%c0_44, %c0_45] : memref<8x128xf32, #tpu.memory_space<vmem>>, vector<8x128xf32>
    %85 = arith.mulf %75, %84 : vector<8x128xf32>
    %86 = arith.mulf %69, %77 : vector<8x128xf32>
    %87 = arith.addf %85, %86 : vector<8x128xf32>
    %88 = math.tanh %87 : vector<8x128xf32>
    %89 = arith.mulf %83, %88 : vector<8x128xf32>
    %c0_46 = arith.constant 0 : index
    %c0_47 = arith.constant 0 : index
    %90 = vector.load %arg9[%c0_46, %c0_47] : memref<8x128xf32, #tpu.memory_space<vmem>>, vector<8x128xf32>
    tpu.vector_store %arg9[%c0_46, %c0_47], %87 {strides = array<i32>} : memref<8x128xf32, #tpu.memory_space<vmem>>, vector<8x128xf32>,
    %c0_48 = arith.constant 0 : index
    %c0_49 = arith.constant 0 : index
    %91 = vector.load %arg8[%c0_48, %c0_49] : memref<8x128xf32, #tpu.memory_space<vmem>>, vector<8x128xf32>
    tpu.vector_store %arg8[%c0_48, %c0_49], %89 {strides = array<i32>} : memref<8x128xf32, #tpu.memory_space<vmem>>, vector<8x128xf32>,
    %92 = arith.truncf %89 : vector<8x128xf32> to vector<8x128xbf16>
    %93 = arith.index_cast %c1_i32 : i32 to index
    %c0_50 = arith.constant 0 : index
    %c0_51 = arith.constant 0 : index
    %94 = vector.load %arg5[%93, %c0_50, %c0_51] : memref<9x8x128xbf16, #tpu.memory_space<vmem>>, vector<1x8x128xbf16>
    %95 = vector.shape_cast %94 : vector<1x8x128xbf16> to vector<8x128xbf16>
    %96 = vector.shape_cast %92 : vector<8x128xbf16> to vector<1x8x128xbf16>
    tpu.vector_store %arg5[%93, %c0_50, %c0_51], %96 {strides = array<i32>} : memref<9x8x128xbf16, #tpu.memory_space<vmem>>, vector<1x8x128xbf16>,
    %c2_i32 = arith.constant 2 : i32
    %c0_52 = arith.constant 0 : index
    %c0_53 = arith.constant 0 : index
    %97 = vector.load %arg8[%c0_52, %c0_53] : memref<8x128xf32, #tpu.memory_space<vmem>>, vector<8x128xf32>
    %98 = arith.truncf %97 : vector<8x128xf32> to vector<8x128xbf16>
    %cst_54 = arith.constant dense<0.000000e+00> : vector<8x512xf32>
    %99 = tpu.matmul %98, %16, %cst_54 {dimension_numbers = #tpu.dot_dimension_numbers<[1], [0], [0], [1], [0, 0, 1, 1], [], []>} : vector<8x128xbf16>, vector<128x512xbf16>, vector<8x512xf32> -> vector<8x512xf32>
    %100 = arith.index_cast %c2_i32 : i32 to index
    %c0_55 = arith.constant 0 : index
    %c0_56 = arith.constant 0 : index
    %101 = vector.load %arg7[%100, %c0_55, %c0_56] : memref<9x8x512xf32, #tpu.memory_space<vmem>>, vector<1x8x512xf32>
    %102 = vector.shape_cast %101 : vector<1x8x512xf32> to vector<8x512xf32>
    %103 = arith.addf %99, %102 : vector<8x512xf32>
    %104 = vector.extract_strided_slice %103 {offsets = [0, 0], sizes = [8, 128], strides = [1, 1]} : vector<8x512xf32> to vector<8x128xf32>
    %105 = arith.negf %104 : vector<8x128xf32>
    %106 = math.exp %105 : vector<8x128xf32>
    %cst_57 = arith.constant 1.000000e+00 : f32
    %107 = vector.broadcast %cst_57 : f32 to vector<8x128xf32>
    %108 = arith.addf %107, %106 : vector<8x128xf32>
    %109 = arith.divf %107, %108 : vector<8x128xf32>
    %110 = vector.extract_strided_slice %103 {offsets = [0, 128], sizes = [8, 128], strides = [1, 1]} : vector<8x512xf32> to vector<8x128xf32>
    %111 = arith.negf %110 : vector<8x128xf32>
    %112 = math.exp %111 : vector<8x128xf32>
    %cst_58 = arith.constant 1.000000e+00 : f32
    %113 = vector.broadcast %cst_58 : f32 to vector<8x128xf32>
    %114 = arith.addf %113, %112 : vector<8x128xf32>
    %115 = arith.divf %113, %114 : vector<8x128xf32>
    %116 = vector.extract_strided_slice %103 {offsets = [0, 256], sizes = [8, 128], strides = [1, 1]} : vector<8x512xf32> to vector<8x128xf32>
    %117 = math.tanh %116 : vector<8x128xf32>
    %118 = vector.extract_strided_slice %103 {offsets = [0, 384], sizes = [8, 128], strides = [1, 1]} : vector<8x512xf32> to vector<8x128xf32>
    %119 = arith.negf %118 : vector<8x128xf32>
    %120 = math.exp %119 : vector<8x128xf32>
    %cst_59 = arith.constant 1.000000e+00 : f32
    %121 = vector.broadcast %cst_59 : f32 to vector<8x128xf32>
    %122 = arith.addf %121, %120 : vector<8x128xf32>
    %123 = arith.divf %121, %122 : vector<8x128xf32>
    %c0_60 = arith.constant 0 : index
    %c0_61 = arith.constant 0 : index
    %124 = vector.load %arg9[%c0_60, %c0_61] : memref<8x128xf32, #tpu.memory_space<vmem>>, vector<8x128xf32>
    %125 = arith.mulf %115, %124 : vector<8x128xf32>
    %126 = arith.mulf %109, %117 : vector<8x128xf32>
    %127 = arith.addf %125, %126 : vector<8x128xf32>
    %128 = math.tanh %127 : vector<8x128xf32>
    %129 = arith.mulf %123, %128 : vector<8x128xf32>
    %c0_62 = arith.constant 0 : index
    %c0_63 = arith.constant 0 : index
    %130 = vector.load %arg9[%c0_62, %c0_63] : memref<8x128xf32, #tpu.memory_space<vmem>>, vector<8x128xf32>
    tpu.vector_store %arg9[%c0_62, %c0_63], %127 {strides = array<i32>} : memref<8x128xf32, #tpu.memory_space<vmem>>, vector<8x128xf32>,
    %c0_64 = arith.constant 0 : index
    %c0_65 = arith.constant 0 : index
    %131 = vector.load %arg8[%c0_64, %c0_65] : memref<8x128xf32, #tpu.memory_space<vmem>>, vector<8x128xf32>
    tpu.vector_store %arg8[%c0_64, %c0_65], %129 {strides = array<i32>} : memref<8x128xf32, #tpu.memory_space<vmem>>, vector<8x128xf32>,
    %132 = arith.truncf %129 : vector<8x128xf32> to vector<8x128xbf16>
    %133 = arith.index_cast %c2_i32 : i32 to index
    %c0_66 = arith.constant 0 : index
    %c0_67 = arith.constant 0 : index
    %134 = vector.load %arg5[%133, %c0_66, %c0_67] : memref<9x8x128xbf16, #tpu.memory_space<vmem>>, vector<1x8x128xbf16>
    %135 = vector.shape_cast %134 : vector<1x8x128xbf16> to vector<8x128xbf16>
    %136 = vector.shape_cast %132 : vector<8x128xbf16> to vector<1x8x128xbf16>
    tpu.vector_store %arg5[%133, %c0_66, %c0_67], %136 {strides = array<i32>} : memref<9x8x128xbf16, #tpu.memory_space<vmem>>, vector<1x8x128xbf16>,
    %c3_i32 = arith.constant 3 : i32
    %c0_68 = arith.constant 0 : index
    %c0_69 = arith.constant 0 : index
    %137 = vector.load %arg8[%c0_68, %c0_69] : memref<8x128xf32, #tpu.memory_space<vmem>>, vector<8x128xf32>
    %138 = arith.truncf %137 : vector<8x128xf32> to vector<8x128xbf16>
    %cst_70 = arith.constant dense<0.000000e+00> : vector<8x512xf32>
    %139 = tpu.matmul %138, %16, %cst_70 {dimension_numbers = #tpu.dot_dimension_numbers<[1], [0], [0], [1], [0, 0, 1, 1], [], []>} : vector<8x128xbf16>, vector<128x512xbf16>, vector<8x512xf32> -> vector<8x512xf32>
    %140 = arith.index_cast %c3_i32 : i32 to index
    %c0_71 = arith.constant 0 : index
    %c0_72 = arith.constant 0 : index
    %141 = vector.load %arg7[%140, %c0_71, %c0_72] : memref<9x8x512xf32, #tpu.memory_space<vmem>>, vector<1x8x512xf32>
    %142 = vector.shape_cast %141 : vector<1x8x512xf32> to vector<8x512xf32>
    %143 = arith.addf %139, %142 : vector<8x512xf32>
    %144 = vector.extract_strided_slice %143 {offsets = [0, 0], sizes = [8, 128], strides = [1, 1]} : vector<8x512xf32> to vector<8x128xf32>
    %145 = arith.negf %144 : vector<8x128xf32>
    %146 = math.exp %145 : vector<8x128xf32>
    %cst_73 = arith.constant 1.000000e+00 : f32
    %147 = vector.broadcast %cst_73 : f32 to vector<8x128xf32>
    %148 = arith.addf %147, %146 : vector<8x128xf32>
    %149 = arith.divf %147, %148 : vector<8x128xf32>
    %150 = vector.extract_strided_slice %143 {offsets = [0, 128], sizes = [8, 128], strides = [1, 1]} : vector<8x512xf32> to vector<8x128xf32>
    %151 = arith.negf %150 : vector<8x128xf32>
    %152 = math.exp %151 : vector<8x128xf32>
    %cst_74 = arith.constant 1.000000e+00 : f32
    %153 = vector.broadcast %cst_74 : f32 to vector<8x128xf32>
    %154 = arith.addf %153, %152 : vector<8x128xf32>
    %155 = arith.divf %153, %154 : vector<8x128xf32>
    %156 = vector.extract_strided_slice %143 {offsets = [0, 256], sizes = [8, 128], strides = [1, 1]} : vector<8x512xf32> to vector<8x128xf32>
    %157 = math.tanh %156 : vector<8x128xf32>
    %158 = vector.extract_strided_slice %143 {offsets = [0, 384], sizes = [8, 128], strides = [1, 1]} : vector<8x512xf32> to vector<8x128xf32>
    %159 = arith.negf %158 : vector<8x128xf32>
    %160 = math.exp %159 : vector<8x128xf32>
    %cst_75 = arith.constant 1.000000e+00 : f32
    %161 = vector.broadcast %cst_75 : f32 to vector<8x128xf32>
    %162 = arith.addf %161, %160 : vector<8x128xf32>
    %163 = arith.divf %161, %162 : vector<8x128xf32>
    %c0_76 = arith.constant 0 : index
    %c0_77 = arith.constant 0 : index
    %164 = vector.load %arg9[%c0_76, %c0_77] : memref<8x128xf32, #tpu.memory_space<vmem>>, vector<8x128xf32>
    %165 = arith.mulf %155, %164 : vector<8x128xf32>
    %166 = arith.mulf %149, %157 : vector<8x128xf32>
    %167 = arith.addf %165, %166 : vector<8x128xf32>
    %168 = math.tanh %167 : vector<8x128xf32>
    %169 = arith.mulf %163, %168 : vector<8x128xf32>
    %c0_78 = arith.constant 0 : index
    %c0_79 = arith.constant 0 : index
    %170 = vector.load %arg9[%c0_78, %c0_79] : memref<8x128xf32, #tpu.memory_space<vmem>>, vector<8x128xf32>
    tpu.vector_store %arg9[%c0_78, %c0_79], %167 {strides = array<i32>} : memref<8x128xf32, #tpu.memory_space<vmem>>, vector<8x128xf32>,
    %c0_80 = arith.constant 0 : index
    %c0_81 = arith.constant 0 : index
    %171 = vector.load %arg8[%c0_80, %c0_81] : memref<8x128xf32, #tpu.memory_space<vmem>>, vector<8x128xf32>
    tpu.vector_store %arg8[%c0_80, %c0_81], %169 {strides = array<i32>} : memref<8x128xf32, #tpu.memory_space<vmem>>, vector<8x128xf32>,
    %172 = arith.truncf %169 : vector<8x128xf32> to vector<8x128xbf16>
    %173 = arith.index_cast %c3_i32 : i32 to index
    %c0_82 = arith.constant 0 : index
    %c0_83 = arith.constant 0 : index
    %174 = vector.load %arg5[%173, %c0_82, %c0_83] : memref<9x8x128xbf16, #tpu.memory_space<vmem>>, vector<1x8x128xbf16>
    %175 = vector.shape_cast %174 : vector<1x8x128xbf16> to vector<8x128xbf16>
    %176 = vector.shape_cast %172 : vector<8x128xbf16> to vector<1x8x128xbf16>
    tpu.vector_store %arg5[%173, %c0_82, %c0_83], %176 {strides = array<i32>} : memref<9x8x128xbf16, #tpu.memory_space<vmem>>, vector<1x8x128xbf16>,
    %c4_i32 = arith.constant 4 : i32
    %c0_84 = arith.constant 0 : index
    %c0_85 = arith.constant 0 : index
    %177 = vector.load %arg8[%c0_84, %c0_85] : memref<8x128xf32, #tpu.memory_space<vmem>>, vector<8x128xf32>
    %178 = arith.truncf %177 : vector<8x128xf32> to vector<8x128xbf16>
    %cst_86 = arith.constant dense<0.000000e+00> : vector<8x512xf32>
    %179 = tpu.matmul %178, %16, %cst_86 {dimension_numbers = #tpu.dot_dimension_numbers<[1], [0], [0], [1], [0, 0, 1, 1], [], []>} : vector<8x128xbf16>, vector<128x512xbf16>, vector<8x512xf32> -> vector<8x512xf32>
    %180 = arith.index_cast %c4_i32 : i32 to index
    %c0_87 = arith.constant 0 : index
    %c0_88 = arith.constant 0 : index
    %181 = vector.load %arg7[%180, %c0_87, %c0_88] : memref<9x8x512xf32, #tpu.memory_space<vmem>>, vector<1x8x512xf32>
    %182 = vector.shape_cast %181 : vector<1x8x512xf32> to vector<8x512xf32>
    %183 = arith.addf %179, %182 : vector<8x512xf32>
    %184 = vector.extract_strided_slice %183 {offsets = [0, 0], sizes = [8, 128], strides = [1, 1]} : vector<8x512xf32> to vector<8x128xf32>
    %185 = arith.negf %184 : vector<8x128xf32>
    %186 = math.exp %185 : vector<8x128xf32>
    %cst_89 = arith.constant 1.000000e+00 : f32
    %187 = vector.broadcast %cst_89 : f32 to vector<8x128xf32>
    %188 = arith.addf %187, %186 : vector<8x128xf32>
    %189 = arith.divf %187, %188 : vector<8x128xf32>
    %190 = vector.extract_strided_slice %183 {offsets = [0, 128], sizes = [8, 128], strides = [1, 1]} : vector<8x512xf32> to vector<8x128xf32>
    %191 = arith.negf %190 : vector<8x128xf32>
    %192 = math.exp %191 : vector<8x128xf32>
    %cst_90 = arith.constant 1.000000e+00 : f32
    %193 = vector.broadcast %cst_90 : f32 to vector<8x128xf32>
    %194 = arith.addf %193, %192 : vector<8x128xf32>
    %195 = arith.divf %193, %194 : vector<8x128xf32>
    %196 = vector.extract_strided_slice %183 {offsets = [0, 256], sizes = [8, 128], strides = [1, 1]} : vector<8x512xf32> to vector<8x128xf32>
    %197 = math.tanh %196 : vector<8x128xf32>
    %198 = vector.extract_strided_slice %183 {offsets = [0, 384], sizes = [8, 128], strides = [1, 1]} : vector<8x512xf32> to vector<8x128xf32>
    %199 = arith.negf %198 : vector<8x128xf32>
    %200 = math.exp %199 : vector<8x128xf32>
    %cst_91 = arith.constant 1.000000e+00 : f32
    %201 = vector.broadcast %cst_91 : f32 to vector<8x128xf32>
    %202 = arith.addf %201, %200 : vector<8x128xf32>
    %203 = arith.divf %201, %202 : vector<8x128xf32>
    %c0_92 = arith.constant 0 : index
    %c0_93 = arith.constant 0 : index
    %204 = vector.load %arg9[%c0_92, %c0_93] : memref<8x128xf32, #tpu.memory_space<vmem>>, vector<8x128xf32>
    %205 = arith.mulf %195, %204 : vector<8x128xf32>
    %206 = arith.mulf %189, %197 : vector<8x128xf32>
    %207 = arith.addf %205, %206 : vector<8x128xf32>
    %208 = math.tanh %207 : vector<8x128xf32>
    %209 = arith.mulf %203, %208 : vector<8x128xf32>
    %c0_94 = arith.constant 0 : index
    %c0_95 = arith.constant 0 : index
    %210 = vector.load %arg9[%c0_94, %c0_95] : memref<8x128xf32, #tpu.memory_space<vmem>>, vector<8x128xf32>
    tpu.vector_store %arg9[%c0_94, %c0_95], %207 {strides = array<i32>} : memref<8x128xf32, #tpu.memory_space<vmem>>, vector<8x128xf32>,
    %c0_96 = arith.constant 0 : index
    %c0_97 = arith.constant 0 : index
    %211 = vector.load %arg8[%c0_96, %c0_97] : memref<8x128xf32, #tpu.memory_space<vmem>>, vector<8x128xf32>
    tpu.vector_store %arg8[%c0_96, %c0_97], %209 {strides = array<i32>} : memref<8x128xf32, #tpu.memory_space<vmem>>, vector<8x128xf32>,
    %212 = arith.truncf %209 : vector<8x128xf32> to vector<8x128xbf16>
    %213 = arith.index_cast %c4_i32 : i32 to index
    %c0_98 = arith.constant 0 : index
    %c0_99 = arith.constant 0 : index
    %214 = vector.load %arg5[%213, %c0_98, %c0_99] : memref<9x8x128xbf16, #tpu.memory_space<vmem>>, vector<1x8x128xbf16>
    %215 = vector.shape_cast %214 : vector<1x8x128xbf16> to vector<8x128xbf16>
    %216 = vector.shape_cast %212 : vector<8x128xbf16> to vector<1x8x128xbf16>
    tpu.vector_store %arg5[%213, %c0_98, %c0_99], %216 {strides = array<i32>} : memref<9x8x128xbf16, #tpu.memory_space<vmem>>, vector<1x8x128xbf16>,
    %c5_i32 = arith.constant 5 : i32
    %c0_100 = arith.constant 0 : index
    %c0_101 = arith.constant 0 : index
    %217 = vector.load %arg8[%c0_100, %c0_101] : memref<8x128xf32, #tpu.memory_space<vmem>>, vector<8x128xf32>
    %218 = arith.truncf %217 : vector<8x128xf32> to vector<8x128xbf16>
    %cst_102 = arith.constant dense<0.000000e+00> : vector<8x512xf32>
    %219 = tpu.matmul %218, %16, %cst_102 {dimension_numbers = #tpu.dot_dimension_numbers<[1], [0], [0], [1], [0, 0, 1, 1], [], []>} : vector<8x128xbf16>, vector<128x512xbf16>, vector<8x512xf32> -> vector<8x512xf32>
    %220 = arith.index_cast %c5_i32 : i32 to index
    %c0_103 = arith.constant 0 : index
    %c0_104 = arith.constant 0 : index
    %221 = vector.load %arg7[%220, %c0_103, %c0_104] : memref<9x8x512xf32, #tpu.memory_space<vmem>>, vector<1x8x512xf32>
    %222 = vector.shape_cast %221 : vector<1x8x512xf32> to vector<8x512xf32>
    %223 = arith.addf %219, %222 : vector<8x512xf32>
    %224 = vector.extract_strided_slice %223 {offsets = [0, 0], sizes = [8, 128], strides = [1, 1]} : vector<8x512xf32> to vector<8x128xf32>
    %225 = arith.negf %224 : vector<8x128xf32>
    %226 = math.exp %225 : vector<8x128xf32>
    %cst_105 = arith.constant 1.000000e+00 : f32
    %227 = vector.broadcast %cst_105 : f32 to vector<8x128xf32>
    %228 = arith.addf %227, %226 : vector<8x128xf32>
    %229 = arith.divf %227, %228 : vector<8x128xf32>
    %230 = vector.extract_strided_slice %223 {offsets = [0, 128], sizes = [8, 128], strides = [1, 1]} : vector<8x512xf32> to vector<8x128xf32>
    %231 = arith.negf %230 : vector<8x128xf32>
    %232 = math.exp %231 : vector<8x128xf32>
    %cst_106 = arith.constant 1.000000e+00 : f32
    %233 = vector.broadcast %cst_106 : f32 to vector<8x128xf32>
    %234 = arith.addf %233, %232 : vector<8x128xf32>
    %235 = arith.divf %233, %234 : vector<8x128xf32>
    %236 = vector.extract_strided_slice %223 {offsets = [0, 256], sizes = [8, 128], strides = [1, 1]} : vector<8x512xf32> to vector<8x128xf32>
    %237 = math.tanh %236 : vector<8x128xf32>
    %238 = vector.extract_strided_slice %223 {offsets = [0, 384], sizes = [8, 128], strides = [1, 1]} : vector<8x512xf32> to vector<8x128xf32>
    %239 = arith.negf %238 : vector<8x128xf32>
    %240 = math.exp %239 : vector<8x128xf32>
    %cst_107 = arith.constant 1.000000e+00 : f32
    %241 = vector.broadcast %cst_107 : f32 to vector<8x128xf32>
    %242 = arith.addf %241, %240 : vector<8x128xf32>
    %243 = arith.divf %241, %242 : vector<8x128xf32>
    %c0_108 = arith.constant 0 : index
    %c0_109 = arith.constant 0 : index
    %244 = vector.load %arg9[%c0_108, %c0_109] : memref<8x128xf32, #tpu.memory_space<vmem>>, vector<8x128xf32>
    %245 = arith.mulf %235, %244 : vector<8x128xf32>
    %246 = arith.mulf %229, %237 : vector<8x128xf32>
    %247 = arith.addf %245, %246 : vector<8x128xf32>
    %248 = math.tanh %247 : vector<8x128xf32>
    %249 = arith.mulf %243, %248 : vector<8x128xf32>
    %c0_110 = arith.constant 0 : index
    %c0_111 = arith.constant 0 : index
    %250 = vector.load %arg9[%c0_110, %c0_111] : memref<8x128xf32, #tpu.memory_space<vmem>>, vector<8x128xf32>
    tpu.vector_store %arg9[%c0_110, %c0_111], %247 {strides = array<i32>} : memref<8x128xf32, #tpu.memory_space<vmem>>, vector<8x128xf32>,
    %c0_112 = arith.constant 0 : index
    %c0_113 = arith.constant 0 : index
    %251 = vector.load %arg8[%c0_112, %c0_113] : memref<8x128xf32, #tpu.memory_space<vmem>>, vector<8x128xf32>
    tpu.vector_store %arg8[%c0_112, %c0_113], %249 {strides = array<i32>} : memref<8x128xf32, #tpu.memory_space<vmem>>, vector<8x128xf32>,
    %252 = arith.truncf %249 : vector<8x128xf32> to vector<8x128xbf16>
    %253 = arith.index_cast %c5_i32 : i32 to index
    %c0_114 = arith.constant 0 : index
    %c0_115 = arith.constant 0 : index
    %254 = vector.load %arg5[%253, %c0_114, %c0_115] : memref<9x8x128xbf16, #tpu.memory_space<vmem>>, vector<1x8x128xbf16>
    %255 = vector.shape_cast %254 : vector<1x8x128xbf16> to vector<8x128xbf16>
    %256 = vector.shape_cast %252 : vector<8x128xbf16> to vector<1x8x128xbf16>
    tpu.vector_store %arg5[%253, %c0_114, %c0_115], %256 {strides = array<i32>} : memref<9x8x128xbf16, #tpu.memory_space<vmem>>, vector<1x8x128xbf16>,
    %c6_i32 = arith.constant 6 : i32
    %c0_116 = arith.constant 0 : index
    %c0_117 = arith.constant 0 : index
    %257 = vector.load %arg8[%c0_116, %c0_117] : memref<8x128xf32, #tpu.memory_space<vmem>>, vector<8x128xf32>
    %258 = arith.truncf %257 : vector<8x128xf32> to vector<8x128xbf16>
    %cst_118 = arith.constant dense<0.000000e+00> : vector<8x512xf32>
    %259 = tpu.matmul %258, %16, %cst_118 {dimension_numbers = #tpu.dot_dimension_numbers<[1], [0], [0], [1], [0, 0, 1, 1], [], []>} : vector<8x128xbf16>, vector<128x512xbf16>, vector<8x512xf32> -> vector<8x512xf32>
    %260 = arith.index_cast %c6_i32 : i32 to index
    %c0_119 = arith.constant 0 : index
    %c0_120 = arith.constant 0 : index
    %261 = vector.load %arg7[%260, %c0_119, %c0_120] : memref<9x8x512xf32, #tpu.memory_space<vmem>>, vector<1x8x512xf32>
    %262 = vector.shape_cast %261 : vector<1x8x512xf32> to vector<8x512xf32>
    %263 = arith.addf %259, %262 : vector<8x512xf32>
    %264 = vector.extract_strided_slice %263 {offsets = [0, 0], sizes = [8, 128], strides = [1, 1]} : vector<8x512xf32> to vector<8x128xf32>
    %265 = arith.negf %264 : vector<8x128xf32>
    %266 = math.exp %265 : vector<8x128xf32>
    %cst_121 = arith.constant 1.000000e+00 : f32
    %267 = vector.broadcast %cst_121 : f32 to vector<8x128xf32>
    %268 = arith.addf %267, %266 : vector<8x128xf32>
    %269 = arith.divf %267, %268 : vector<8x128xf32>
    %270 = vector.extract_strided_slice %263 {offsets = [0, 128], sizes = [8, 128], strides = [1, 1]} : vector<8x512xf32> to vector<8x128xf32>
    %271 = arith.negf %270 : vector<8x128xf32>
    %272 = math.exp %271 : vector<8x128xf32>
    %cst_122 = arith.constant 1.000000e+00 : f32
    %273 = vector.broadcast %cst_122 : f32 to vector<8x128xf32>
    %274 = arith.addf %273, %272 : vector<8x128xf32>
    %275 = arith.divf %273, %274 : vector<8x128xf32>
    %276 = vector.extract_strided_slice %263 {offsets = [0, 256], sizes = [8, 128], strides = [1, 1]} : vector<8x512xf32> to vector<8x128xf32>
    %277 = math.tanh %276 : vector<8x128xf32>
    %278 = vector.extract_strided_slice %263 {offsets = [0, 384], sizes = [8, 128], strides = [1, 1]} : vector<8x512xf32> to vector<8x128xf32>
    %279 = arith.negf %278 : vector<8x128xf32>
    %280 = math.exp %279 : vector<8x128xf32>
    %cst_123 = arith.constant 1.000000e+00 : f32
    %281 = vector.broadcast %cst_123 : f32 to vector<8x128xf32>
    %282 = arith.addf %281, %280 : vector<8x128xf32>
    %283 = arith.divf %281, %282 : vector<8x128xf32>
    %c0_124 = arith.constant 0 : index
    %c0_125 = arith.constant 0 : index
    %284 = vector.load %arg9[%c0_124, %c0_125] : memref<8x128xf32, #tpu.memory_space<vmem>>, vector<8x128xf32>
    %285 = arith.mulf %275, %284 : vector<8x128xf32>
    %286 = arith.mulf %269, %277 : vector<8x128xf32>
    %287 = arith.addf %285, %286 : vector<8x128xf32>
    %288 = math.tanh %287 : vector<8x128xf32>
    %289 = arith.mulf %283, %288 : vector<8x128xf32>
    %c0_126 = arith.constant 0 : index
    %c0_127 = arith.constant 0 : index
    %290 = vector.load %arg9[%c0_126, %c0_127] : memref<8x128xf32, #tpu.memory_space<vmem>>, vector<8x128xf32>
    tpu.vector_store %arg9[%c0_126, %c0_127], %287 {strides = array<i32>} : memref<8x128xf32, #tpu.memory_space<vmem>>, vector<8x128xf32>,
    %c0_128 = arith.constant 0 : index
    %c0_129 = arith.constant 0 : index
    %291 = vector.load %arg8[%c0_128, %c0_129] : memref<8x128xf32, #tpu.memory_space<vmem>>, vector<8x128xf32>
    tpu.vector_store %arg8[%c0_128, %c0_129], %289 {strides = array<i32>} : memref<8x128xf32, #tpu.memory_space<vmem>>, vector<8x128xf32>,
    %292 = arith.truncf %289 : vector<8x128xf32> to vector<8x128xbf16>
    %293 = arith.index_cast %c6_i32 : i32 to index
    %c0_130 = arith.constant 0 : index
    %c0_131 = arith.constant 0 : index
    %294 = vector.load %arg5[%293, %c0_130, %c0_131] : memref<9x8x128xbf16, #tpu.memory_space<vmem>>, vector<1x8x128xbf16>
    %295 = vector.shape_cast %294 : vector<1x8x128xbf16> to vector<8x128xbf16>
    %296 = vector.shape_cast %292 : vector<8x128xbf16> to vector<1x8x128xbf16>
    tpu.vector_store %arg5[%293, %c0_130, %c0_131], %296 {strides = array<i32>} : memref<9x8x128xbf16, #tpu.memory_space<vmem>>, vector<1x8x128xbf16>,
    %c7_i32 = arith.constant 7 : i32
    %c0_132 = arith.constant 0 : index
    %c0_133 = arith.constant 0 : index
    %297 = vector.load %arg8[%c0_132, %c0_133] : memref<8x128xf32, #tpu.memory_space<vmem>>, vector<8x128xf32>
    %298 = arith.truncf %297 : vector<8x128xf32> to vector<8x128xbf16>
    %cst_134 = arith.constant dense<0.000000e+00> : vector<8x512xf32>
    %299 = tpu.matmul %298, %16, %cst_134 {dimension_numbers = #tpu.dot_dimension_numbers<[1], [0], [0], [1], [0, 0, 1, 1], [], []>} : vector<8x128xbf16>, vector<128x512xbf16>, vector<8x512xf32> -> vector<8x512xf32>
    %300 = arith.index_cast %c7_i32 : i32 to index
    %c0_135 = arith.constant 0 : index
    %c0_136 = arith.constant 0 : index
    %301 = vector.load %arg7[%300, %c0_135, %c0_136] : memref<9x8x512xf32, #tpu.memory_space<vmem>>, vector<1x8x512xf32>
    %302 = vector.shape_cast %301 : vector<1x8x512xf32> to vector<8x512xf32>
    %303 = arith.addf %299, %302 : vector<8x512xf32>
    %304 = vector.extract_strided_slice %303 {offsets = [0, 0], sizes = [8, 128], strides = [1, 1]} : vector<8x512xf32> to vector<8x128xf32>
    %305 = arith.negf %304 : vector<8x128xf32>
    %306 = math.exp %305 : vector<8x128xf32>
    %cst_137 = arith.constant 1.000000e+00 : f32
    %307 = vector.broadcast %cst_137 : f32 to vector<8x128xf32>
    %308 = arith.addf %307, %306 : vector<8x128xf32>
    %309 = arith.divf %307, %308 : vector<8x128xf32>
    %310 = vector.extract_strided_slice %303 {offsets = [0, 128], sizes = [8, 128], strides = [1, 1]} : vector<8x512xf32> to vector<8x128xf32>
    %311 = arith.negf %310 : vector<8x128xf32>
    %312 = math.exp %311 : vector<8x128xf32>
    %cst_138 = arith.constant 1.000000e+00 : f32
    %313 = vector.broadcast %cst_138 : f32 to vector<8x128xf32>
    %314 = arith.addf %313, %312 : vector<8x128xf32>
    %315 = arith.divf %313, %314 : vector<8x128xf32>
    %316 = vector.extract_strided_slice %303 {offsets = [0, 256], sizes = [8, 128], strides = [1, 1]} : vector<8x512xf32> to vector<8x128xf32>
    %317 = math.tanh %316 : vector<8x128xf32>
    %318 = vector.extract_strided_slice %303 {offsets = [0, 384], sizes = [8, 128], strides = [1, 1]} : vector<8x512xf32> to vector<8x128xf32>
    %319 = arith.negf %318 : vector<8x128xf32>
    %320 = math.exp %319 : vector<8x128xf32>
    %cst_139 = arith.constant 1.000000e+00 : f32
    %321 = vector.broadcast %cst_139 : f32 to vector<8x128xf32>
    %322 = arith.addf %321, %320 : vector<8x128xf32>
    %323 = arith.divf %321, %322 : vector<8x128xf32>
    %c0_140 = arith.constant 0 : index
    %c0_141 = arith.constant 0 : index
    %324 = vector.load %arg9[%c0_140, %c0_141] : memref<8x128xf32, #tpu.memory_space<vmem>>, vector<8x128xf32>
    %325 = arith.mulf %315, %324 : vector<8x128xf32>
    %326 = arith.mulf %309, %317 : vector<8x128xf32>
    %327 = arith.addf %325, %326 : vector<8x128xf32>
    %328 = math.tanh %327 : vector<8x128xf32>
    %329 = arith.mulf %323, %328 : vector<8x128xf32>
    %c0_142 = arith.constant 0 : index
    %c0_143 = arith.constant 0 : index
    %330 = vector.load %arg9[%c0_142, %c0_143] : memref<8x128xf32, #tpu.memory_space<vmem>>, vector<8x128xf32>
    tpu.vector_store %arg9[%c0_142, %c0_143], %327 {strides = array<i32>} : memref<8x128xf32, #tpu.memory_space<vmem>>, vector<8x128xf32>,
    %c0_144 = arith.constant 0 : index
    %c0_145 = arith.constant 0 : index
    %331 = vector.load %arg8[%c0_144, %c0_145] : memref<8x128xf32, #tpu.memory_space<vmem>>, vector<8x128xf32>
    tpu.vector_store %arg8[%c0_144, %c0_145], %329 {strides = array<i32>} : memref<8x128xf32, #tpu.memory_space<vmem>>, vector<8x128xf32>,
    %332 = arith.truncf %329 : vector<8x128xf32> to vector<8x128xbf16>
    %333 = arith.index_cast %c7_i32 : i32 to index
    %c0_146 = arith.constant 0 : index
    %c0_147 = arith.constant 0 : index
    %334 = vector.load %arg5[%333, %c0_146, %c0_147] : memref<9x8x128xbf16, #tpu.memory_space<vmem>>, vector<1x8x128xbf16>
    %335 = vector.shape_cast %334 : vector<1x8x128xbf16> to vector<8x128xbf16>
    %336 = vector.shape_cast %332 : vector<8x128xbf16> to vector<1x8x128xbf16>
    tpu.vector_store %arg5[%333, %c0_146, %c0_147], %336 {strides = array<i32>} : memref<9x8x128xbf16, #tpu.memory_space<vmem>>, vector<1x8x128xbf16>,
    %c8_i32 = arith.constant 8 : i32
    %c0_148 = arith.constant 0 : index
    %c0_149 = arith.constant 0 : index
    %337 = vector.load %arg8[%c0_148, %c0_149] : memref<8x128xf32, #tpu.memory_space<vmem>>, vector<8x128xf32>
    %338 = arith.truncf %337 : vector<8x128xf32> to vector<8x128xbf16>
    %cst_150 = arith.constant dense<0.000000e+00> : vector<8x512xf32>
    %339 = tpu.matmul %338, %16, %cst_150 {dimension_numbers = #tpu.dot_dimension_numbers<[1], [0], [0], [1], [0, 0, 1, 1], [], []>} : vector<8x128xbf16>, vector<128x512xbf16>, vector<8x512xf32> -> vector<8x512xf32>
    %340 = arith.index_cast %c8_i32 : i32 to index
    %c0_151 = arith.constant 0 : index
    %c0_152 = arith.constant 0 : index
    %341 = vector.load %arg7[%340, %c0_151, %c0_152] : memref<9x8x512xf32, #tpu.memory_space<vmem>>, vector<1x8x512xf32>
    %342 = vector.shape_cast %341 : vector<1x8x512xf32> to vector<8x512xf32>
    %343 = arith.addf %339, %342 : vector<8x512xf32>
    %344 = vector.extract_strided_slice %343 {offsets = [0, 0], sizes = [8, 128], strides = [1, 1]} : vector<8x512xf32> to vector<8x128xf32>
    %345 = arith.negf %344 : vector<8x128xf32>
    %346 = math.exp %345 : vector<8x128xf32>
    %cst_153 = arith.constant 1.000000e+00 : f32
    %347 = vector.broadcast %cst_153 : f32 to vector<8x128xf32>
    %348 = arith.addf %347, %346 : vector<8x128xf32>
    %349 = arith.divf %347, %348 : vector<8x128xf32>
    %350 = vector.extract_strided_slice %343 {offsets = [0, 128], sizes = [8, 128], strides = [1, 1]} : vector<8x512xf32> to vector<8x128xf32>
    %351 = arith.negf %350 : vector<8x128xf32>
    %352 = math.exp %351 : vector<8x128xf32>
    %cst_154 = arith.constant 1.000000e+00 : f32
    %353 = vector.broadcast %cst_154 : f32 to vector<8x128xf32>
    %354 = arith.addf %353, %352 : vector<8x128xf32>
    %355 = arith.divf %353, %354 : vector<8x128xf32>
    %356 = vector.extract_strided_slice %343 {offsets = [0, 256], sizes = [8, 128], strides = [1, 1]} : vector<8x512xf32> to vector<8x128xf32>
    %357 = math.tanh %356 : vector<8x128xf32>
    %358 = vector.extract_strided_slice %343 {offsets = [0, 384], sizes = [8, 128], strides = [1, 1]} : vector<8x512xf32> to vector<8x128xf32>
    %359 = arith.negf %358 : vector<8x128xf32>
    %360 = math.exp %359 : vector<8x128xf32>
    %cst_155 = arith.constant 1.000000e+00 : f32
    %361 = vector.broadcast %cst_155 : f32 to vector<8x128xf32>
    %362 = arith.addf %361, %360 : vector<8x128xf32>
    %363 = arith.divf %361, %362 : vector<8x128xf32>
    %c0_156 = arith.constant 0 : index
    %c0_157 = arith.constant 0 : index
    %364 = vector.load %arg9[%c0_156, %c0_157] : memref<8x128xf32, #tpu.memory_space<vmem>>, vector<8x128xf32>
    %365 = arith.mulf %355, %364 : vector<8x128xf32>
    %366 = arith.mulf %349, %357 : vector<8x128xf32>
    %367 = arith.addf %365, %366 : vector<8x128xf32>
    %368 = math.tanh %367 : vector<8x128xf32>
    %369 = arith.mulf %363, %368 : vector<8x128xf32>
    %c0_158 = arith.constant 0 : index
    %c0_159 = arith.constant 0 : index
    %370 = vector.load %arg9[%c0_158, %c0_159] : memref<8x128xf32, #tpu.memory_space<vmem>>, vector<8x128xf32>
    tpu.vector_store %arg9[%c0_158, %c0_159], %367 {strides = array<i32>} : memref<8x128xf32, #tpu.memory_space<vmem>>, vector<8x128xf32>,
    %c0_160 = arith.constant 0 : index
    %c0_161 = arith.constant 0 : index
    %371 = vector.load %arg8[%c0_160, %c0_161] : memref<8x128xf32, #tpu.memory_space<vmem>>, vector<8x128xf32>
    tpu.vector_store %arg8[%c0_160, %c0_161], %369 {strides = array<i32>} : memref<8x128xf32, #tpu.memory_space<vmem>>, vector<8x128xf32>,
    %372 = arith.truncf %369 : vector<8x128xf32> to vector<8x128xbf16>
    %373 = arith.index_cast %c8_i32 : i32 to index
    %c0_162 = arith.constant 0 : index
    %c0_163 = arith.constant 0 : index
    %374 = vector.load %arg5[%373, %c0_162, %c0_163] : memref<9x8x128xbf16, #tpu.memory_space<vmem>>, vector<1x8x128xbf16>
    %375 = vector.shape_cast %374 : vector<1x8x128xbf16> to vector<8x128xbf16>
    %376 = vector.shape_cast %372 : vector<8x128xbf16> to vector<1x8x128xbf16>
    tpu.vector_store %arg5[%373, %c0_162, %c0_163], %376 {strides = array<i32>} : memref<9x8x128xbf16, #tpu.memory_space<vmem>>, vector<1x8x128xbf16>,
    %c9_i32 = arith.constant 9 : i32
    %c0_164 = arith.constant 0 : index
    %c0_165 = arith.constant 0 : index
    %c0_166 = arith.constant 0 : index
    %377 = vector.load %arg5[%c0_164, %c0_165, %c0_166] : memref<9x8x128xbf16, #tpu.memory_space<vmem>>, vector<9x8x128xbf16>
    %378 = vector.shape_cast %377 : vector<9x8x128xbf16> to vector<72x128xbf16>
    %c1 = arith.constant 1 : index
    %c0_167 = arith.constant 0 : index
    %c0_168 = arith.constant 0 : index
    %379 = vector.load %arg1[%c1, %c0_167, %c0_168] : memref<2x128x512xbf16, #tpu.memory_space<vmem>>, vector<1x128x512xbf16>
    %380 = vector.shape_cast %379 : vector<1x128x512xbf16> to vector<128x512xbf16>
    %cst_169 = arith.constant dense<0.000000e+00> : vector<72x512xf32>
    %381 = tpu.matmul %378, %380, %cst_169 {dimension_numbers = #tpu.dot_dimension_numbers<[1], [0], [0], [1], [0, 0, 1, 1], [], []>} : vector<72x128xbf16>, vector<128x512xbf16>, vector<72x512xf32> -> vector<72x512xf32>
    %c1_170 = arith.constant 1 : index
    %c0_171 = arith.constant 0 : index
    %c0_172 = arith.constant 0 : index
    %382 = vector.load %arg3[%c1_170, %c0_171, %c0_172] : memref<2x1x512xf32, #tpu.memory_space<vmem>>, vector<1x1x512xf32>
    %383 = vector.shape_cast %382 : vector<1x1x512xf32> to vector<1x512xf32>
    %384 = vector.broadcast %383 : vector<1x512xf32> to vector<72x512xf32>
    %385 = arith.addf %381, %384 : vector<72x512xf32>
    %386 = vector.shape_cast %385 : vector<72x512xf32> to vector<9x8x512xf32>
    %c0_173 = arith.constant 0 : index
    %c0_174 = arith.constant 0 : index
    %c0_175 = arith.constant 0 : index
    %387 = vector.load %arg7[%c0_173, %c0_174, %c0_175] : memref<9x8x512xf32, #tpu.memory_space<vmem>>, vector<9x8x512xf32>
    tpu.vector_store %arg7[%c0_173, %c0_174, %c0_175], %386 {strides = array<i32>} : memref<9x8x512xf32, #tpu.memory_space<vmem>>, vector<9x8x512xf32>,
    %cst_176 = arith.constant 0.000000e+00 : f32
    %388 = vector.broadcast %cst_176 : f32 to vector<8x128xf32>
    %c0_177 = arith.constant 0 : index
    %c0_178 = arith.constant 0 : index
    %389 = vector.load %arg8[%c0_177, %c0_178] : memref<8x128xf32, #tpu.memory_space<vmem>>, vector<8x128xf32>
    tpu.vector_store %arg8[%c0_177, %c0_178], %388 {strides = array<i32>} : memref<8x128xf32, #tpu.memory_space<vmem>>, vector<8x128xf32>,
    %cst_179 = arith.constant 0.000000e+00 : f32
    %390 = vector.broadcast %cst_179 : f32 to vector<8x128xf32>
    %c0_180 = arith.constant 0 : index
    %c0_181 = arith.constant 0 : index
    %391 = vector.load %arg9[%c0_180, %c0_181] : memref<8x128xf32, #tpu.memory_space<vmem>>, vector<8x128xf32>
    tpu.vector_store %arg9[%c0_180, %c0_181], %390 {strides = array<i32>} : memref<8x128xf32, #tpu.memory_space<vmem>>, vector<8x128xf32>,
    %c1_182 = arith.constant 1 : index
    %c0_183 = arith.constant 0 : index
    %c0_184 = arith.constant 0 : index
    %392 = vector.load %arg2[%c1_182, %c0_183, %c0_184] : memref<2x128x512xbf16, #tpu.memory_space<vmem>>, vector<1x128x512xbf16>
    %393 = vector.shape_cast %392 : vector<1x128x512xbf16> to vector<128x512xbf16>
    %c0_i32_185 = arith.constant 0 : i32
    %c0_186 = arith.constant 0 : index
    %c0_187 = arith.constant 0 : index
    %394 = vector.load %arg8[%c0_186, %c0_187] : memref<8x128xf32, #tpu.memory_space<vmem>>, vector<8x128xf32>
    %395 = arith.truncf %394 : vector<8x128xf32> to vector<8x128xbf16>
    %cst_188 = arith.constant dense<0.000000e+00> : vector<8x512xf32>
    %396 = tpu.matmul %395, %393, %cst_188 {dimension_numbers = #tpu.dot_dimension_numbers<[1], [0], [0], [1], [0, 0, 1, 1], [], []>} : vector<8x128xbf16>, vector<128x512xbf16>, vector<8x512xf32> -> vector<8x512xf32>
    %397 = arith.index_cast %c0_i32_185 : i32 to index
    %c0_189 = arith.constant 0 : index
    %c0_190 = arith.constant 0 : index
    %398 = vector.load %arg7[%397, %c0_189, %c0_190] : memref<9x8x512xf32, #tpu.memory_space<vmem>>, vector<1x8x512xf32>
    %399 = vector.shape_cast %398 : vector<1x8x512xf32> to vector<8x512xf32>
    %400 = arith.addf %396, %399 : vector<8x512xf32>
    %401 = vector.extract_strided_slice %400 {offsets = [0, 0], sizes = [8, 128], strides = [1, 1]} : vector<8x512xf32> to vector<8x128xf32>
    %402 = arith.negf %401 : vector<8x128xf32>
    %403 = math.exp %402 : vector<8x128xf32>
    %cst_191 = arith.constant 1.000000e+00 : f32
    %404 = vector.broadcast %cst_191 : f32 to vector<8x128xf32>
    %405 = arith.addf %404, %403 : vector<8x128xf32>
    %406 = arith.divf %404, %405 : vector<8x128xf32>
    %407 = vector.extract_strided_slice %400 {offsets = [0, 128], sizes = [8, 128], strides = [1, 1]} : vector<8x512xf32> to vector<8x128xf32>
    %408 = arith.negf %407 : vector<8x128xf32>
    %409 = math.exp %408 : vector<8x128xf32>
    %cst_192 = arith.constant 1.000000e+00 : f32
    %410 = vector.broadcast %cst_192 : f32 to vector<8x128xf32>
    %411 = arith.addf %410, %409 : vector<8x128xf32>
    %412 = arith.divf %410, %411 : vector<8x128xf32>
    %413 = vector.extract_strided_slice %400 {offsets = [0, 256], sizes = [8, 128], strides = [1, 1]} : vector<8x512xf32> to vector<8x128xf32>
    %414 = math.tanh %413 : vector<8x128xf32>
    %415 = vector.extract_strided_slice %400 {offsets = [0, 384], sizes = [8, 128], strides = [1, 1]} : vector<8x512xf32> to vector<8x128xf32>
    %416 = arith.negf %415 : vector<8x128xf32>
    %417 = math.exp %416 : vector<8x128xf32>
    %cst_193 = arith.constant 1.000000e+00 : f32
    %418 = vector.broadcast %cst_193 : f32 to vector<8x128xf32>
    %419 = arith.addf %418, %417 : vector<8x128xf32>
    %420 = arith.divf %418, %419 : vector<8x128xf32>
    %c0_194 = arith.constant 0 : index
    %c0_195 = arith.constant 0 : index
    %421 = vector.load %arg9[%c0_194, %c0_195] : memref<8x128xf32, #tpu.memory_space<vmem>>, vector<8x128xf32>
    %422 = arith.mulf %412, %421 : vector<8x128xf32>
    %423 = arith.mulf %406, %414 : vector<8x128xf32>
    %424 = arith.addf %422, %423 : vector<8x128xf32>
    %425 = math.tanh %424 : vector<8x128xf32>
    %426 = arith.mulf %420, %425 : vector<8x128xf32>
    %c0_196 = arith.constant 0 : index
    %c0_197 = arith.constant 0 : index
    %427 = vector.load %arg9[%c0_196, %c0_197] : memref<8x128xf32, #tpu.memory_space<vmem>>, vector<8x128xf32>
    tpu.vector_store %arg9[%c0_196, %c0_197], %424 {strides = array<i32>} : memref<8x128xf32, #tpu.memory_space<vmem>>, vector<8x128xf32>,
    %c0_198 = arith.constant 0 : index
    %c0_199 = arith.constant 0 : index
    %428 = vector.load %arg8[%c0_198, %c0_199] : memref<8x128xf32, #tpu.memory_space<vmem>>, vector<8x128xf32>
    tpu.vector_store %arg8[%c0_198, %c0_199], %426 {strides = array<i32>} : memref<8x128xf32, #tpu.memory_space<vmem>>, vector<8x128xf32>,
    %429 = arith.truncf %426 : vector<8x128xf32> to vector<8x128xbf16>
    %430 = arith.index_cast %c0_i32_185 : i32 to index
    %c0_200 = arith.constant 0 : index
    %c0_201 = arith.constant 0 : index
    %431 = vector.load %arg4[%430, %c0_200, %c0_201] : memref<9x8x128xbf16, #tpu.memory_space<vmem>>, vector<1x8x128xbf16>
    %432 = vector.shape_cast %431 : vector<1x8x128xbf16> to vector<8x128xbf16>
    %433 = vector.shape_cast %429 : vector<8x128xbf16> to vector<1x8x128xbf16>
    tpu.vector_store %arg4[%430, %c0_200, %c0_201], %433 {strides = array<i32>} : memref<9x8x128xbf16, #tpu.memory_space<vmem>>, vector<1x8x128xbf16>,
    %c1_i32_202 = arith.constant 1 : i32
    %c0_203 = arith.constant 0 : index
    %c0_204 = arith.constant 0 : index
    %434 = vector.load %arg8[%c0_203, %c0_204] : memref<8x128xf32, #tpu.memory_space<vmem>>, vector<8x128xf32>
    %435 = arith.truncf %434 : vector<8x128xf32> to vector<8x128xbf16>
    %cst_205 = arith.constant dense<0.000000e+00> : vector<8x512xf32>
    %436 = tpu.matmul %435, %393, %cst_205 {dimension_numbers = #tpu.dot_dimension_numbers<[1], [0], [0], [1], [0, 0, 1, 1], [], []>} : vector<8x128xbf16>, vector<128x512xbf16>, vector<8x512xf32> -> vector<8x512xf32>
    %437 = arith.index_cast %c1_i32_202 : i32 to index
    %c0_206 = arith.constant 0 : index
    %c0_207 = arith.constant 0 : index
    %438 = vector.load %arg7[%437, %c0_206, %c0_207] : memref<9x8x512xf32, #tpu.memory_space<vmem>>, vector<1x8x512xf32>
    %439 = vector.shape_cast %438 : vector<1x8x512xf32> to vector<8x512xf32>
    %440 = arith.addf %436, %439 : vector<8x512xf32>
    %441 = vector.extract_strided_slice %440 {offsets = [0, 0], sizes = [8, 128], strides = [1, 1]} : vector<8x512xf32> to vector<8x128xf32>
    %442 = arith.negf %441 : vector<8x128xf32>
    %443 = math.exp %442 : vector<8x128xf32>
    %cst_208 = arith.constant 1.000000e+00 : f32
    %444 = vector.broadcast %cst_208 : f32 to vector<8x128xf32>
    %445 = arith.addf %444, %443 : vector<8x128xf32>
    %446 = arith.divf %444, %445 : vector<8x128xf32>
    %447 = vector.extract_strided_slice %440 {offsets = [0, 128], sizes = [8, 128], strides = [1, 1]} : vector<8x512xf32> to vector<8x128xf32>
    %448 = arith.negf %447 : vector<8x128xf32>
    %449 = math.exp %448 : vector<8x128xf32>
    %cst_209 = arith.constant 1.000000e+00 : f32
    %450 = vector.broadcast %cst_209 : f32 to vector<8x128xf32>
    %451 = arith.addf %450, %449 : vector<8x128xf32>
    %452 = arith.divf %450, %451 : vector<8x128xf32>
    %453 = vector.extract_strided_slice %440 {offsets = [0, 256], sizes = [8, 128], strides = [1, 1]} : vector<8x512xf32> to vector<8x128xf32>
    %454 = math.tanh %453 : vector<8x128xf32>
    %455 = vector.extract_strided_slice %440 {offsets = [0, 384], sizes = [8, 128], strides = [1, 1]} : vector<8x512xf32> to vector<8x128xf32>
    %456 = arith.negf %455 : vector<8x128xf32>
    %457 = math.exp %456 : vector<8x128xf32>
    %cst_210 = arith.constant 1.000000e+00 : f32
    %458 = vector.broadcast %cst_210 : f32 to vector<8x128xf32>
    %459 = arith.addf %458, %457 : vector<8x128xf32>
    %460 = arith.divf %458, %459 : vector<8x128xf32>
    %c0_211 = arith.constant 0 : index
    %c0_212 = arith.constant 0 : index
    %461 = vector.load %arg9[%c0_211, %c0_212] : memref<8x128xf32, #tpu.memory_space<vmem>>, vector<8x128xf32>
    %462 = arith.mulf %452, %461 : vector<8x128xf32>
    %463 = arith.mulf %446, %454 : vector<8x128xf32>
    %464 = arith.addf %462, %463 : vector<8x128xf32>
    %465 = math.tanh %464 : vector<8x128xf32>
    %466 = arith.mulf %460, %465 : vector<8x128xf32>
    %c0_213 = arith.constant 0 : index
    %c0_214 = arith.constant 0 : index
    %467 = vector.load %arg9[%c0_213, %c0_214] : memref<8x128xf32, #tpu.memory_space<vmem>>, vector<8x128xf32>
    tpu.vector_store %arg9[%c0_213, %c0_214], %464 {strides = array<i32>} : memref<8x128xf32, #tpu.memory_space<vmem>>, vector<8x128xf32>,
    %c0_215 = arith.constant 0 : index
    %c0_216 = arith.constant 0 : index
    %468 = vector.load %arg8[%c0_215, %c0_216] : memref<8x128xf32, #tpu.memory_space<vmem>>, vector<8x128xf32>
    tpu.vector_store %arg8[%c0_215, %c0_216], %466 {strides = array<i32>} : memref<8x128xf32, #tpu.memory_space<vmem>>, vector<8x128xf32>,
    %469 = arith.truncf %466 : vector<8x128xf32> to vector<8x128xbf16>
    %470 = arith.index_cast %c1_i32_202 : i32 to index
    %c0_217 = arith.constant 0 : index
    %c0_218 = arith.constant 0 : index
    %471 = vector.load %arg4[%470, %c0_217, %c0_218] : memref<9x8x128xbf16, #tpu.memory_space<vmem>>, vector<1x8x128xbf16>
    %472 = vector.shape_cast %471 : vector<1x8x128xbf16> to vector<8x128xbf16>
    %473 = vector.shape_cast %469 : vector<8x128xbf16> to vector<1x8x128xbf16>
    tpu.vector_store %arg4[%470, %c0_217, %c0_218], %473 {strides = array<i32>} : memref<9x8x128xbf16, #tpu.memory_space<vmem>>, vector<1x8x128xbf16>,
    %c2_i32_219 = arith.constant 2 : i32
    %c0_220 = arith.constant 0 : index
    %c0_221 = arith.constant 0 : index
    %474 = vector.load %arg8[%c0_220, %c0_221] : memref<8x128xf32, #tpu.memory_space<vmem>>, vector<8x128xf32>
    %475 = arith.truncf %474 : vector<8x128xf32> to vector<8x128xbf16>
    %cst_222 = arith.constant dense<0.000000e+00> : vector<8x512xf32>
    %476 = tpu.matmul %475, %393, %cst_222 {dimension_numbers = #tpu.dot_dimension_numbers<[1], [0], [0], [1], [0, 0, 1, 1], [], []>} : vector<8x128xbf16>, vector<128x512xbf16>, vector<8x512xf32> -> vector<8x512xf32>
    %477 = arith.index_cast %c2_i32_219 : i32 to index
    %c0_223 = arith.constant 0 : index
    %c0_224 = arith.constant 0 : index
    %478 = vector.load %arg7[%477, %c0_223, %c0_224] : memref<9x8x512xf32, #tpu.memory_space<vmem>>, vector<1x8x512xf32>
    %479 = vector.shape_cast %478 : vector<1x8x512xf32> to vector<8x512xf32>
    %480 = arith.addf %476, %479 : vector<8x512xf32>
    %481 = vector.extract_strided_slice %480 {offsets = [0, 0], sizes = [8, 128], strides = [1, 1]} : vector<8x512xf32> to vector<8x128xf32>
    %482 = arith.negf %481 : vector<8x128xf32>
    %483 = math.exp %482 : vector<8x128xf32>
    %cst_225 = arith.constant 1.000000e+00 : f32
    %484 = vector.broadcast %cst_225 : f32 to vector<8x128xf32>
    %485 = arith.addf %484, %483 : vector<8x128xf32>
    %486 = arith.divf %484, %485 : vector<8x128xf32>
    %487 = vector.extract_strided_slice %480 {offsets = [0, 128], sizes = [8, 128], strides = [1, 1]} : vector<8x512xf32> to vector<8x128xf32>
    %488 = arith.negf %487 : vector<8x128xf32>
    %489 = math.exp %488 : vector<8x128xf32>
    %cst_226 = arith.constant 1.000000e+00 : f32
    %490 = vector.broadcast %cst_226 : f32 to vector<8x128xf32>
    %491 = arith.addf %490, %489 : vector<8x128xf32>
    %492 = arith.divf %490, %491 : vector<8x128xf32>
    %493 = vector.extract_strided_slice %480 {offsets = [0, 256], sizes = [8, 128], strides = [1, 1]} : vector<8x512xf32> to vector<8x128xf32>
    %494 = math.tanh %493 : vector<8x128xf32>
    %495 = vector.extract_strided_slice %480 {offsets = [0, 384], sizes = [8, 128], strides = [1, 1]} : vector<8x512xf32> to vector<8x128xf32>
    %496 = arith.negf %495 : vector<8x128xf32>
    %497 = math.exp %496 : vector<8x128xf32>
    %cst_227 = arith.constant 1.000000e+00 : f32
    %498 = vector.broadcast %cst_227 : f32 to vector<8x128xf32>
    %499 = arith.addf %498, %497 : vector<8x128xf32>
    %500 = arith.divf %498, %499 : vector<8x128xf32>
    %c0_228 = arith.constant 0 : index
    %c0_229 = arith.constant 0 : index
    %501 = vector.load %arg9[%c0_228, %c0_229] : memref<8x128xf32, #tpu.memory_space<vmem>>, vector<8x128xf32>
    %502 = arith.mulf %492, %501 : vector<8x128xf32>
    %503 = arith.mulf %486, %494 : vector<8x128xf32>
    %504 = arith.addf %502, %503 : vector<8x128xf32>
    %505 = math.tanh %504 : vector<8x128xf32>
    %506 = arith.mulf %500, %505 : vector<8x128xf32>
    %c0_230 = arith.constant 0 : index
    %c0_231 = arith.constant 0 : index
    %507 = vector.load %arg9[%c0_230, %c0_231] : memref<8x128xf32, #tpu.memory_space<vmem>>, vector<8x128xf32>
    tpu.vector_store %arg9[%c0_230, %c0_231], %504 {strides = array<i32>} : memref<8x128xf32, #tpu.memory_space<vmem>>, vector<8x128xf32>,
    %c0_232 = arith.constant 0 : index
    %c0_233 = arith.constant 0 : index
    %508 = vector.load %arg8[%c0_232, %c0_233] : memref<8x128xf32, #tpu.memory_space<vmem>>, vector<8x128xf32>
    tpu.vector_store %arg8[%c0_232, %c0_233], %506 {strides = array<i32>} : memref<8x128xf32, #tpu.memory_space<vmem>>, vector<8x128xf32>,
    %509 = arith.truncf %506 : vector<8x128xf32> to vector<8x128xbf16>
    %510 = arith.index_cast %c2_i32_219 : i32 to index
    %c0_234 = arith.constant 0 : index
    %c0_235 = arith.constant 0 : index
    %511 = vector.load %arg4[%510, %c0_234, %c0_235] : memref<9x8x128xbf16, #tpu.memory_space<vmem>>, vector<1x8x128xbf16>
    %512 = vector.shape_cast %511 : vector<1x8x128xbf16> to vector<8x128xbf16>
    %513 = vector.shape_cast %509 : vector<8x128xbf16> to vector<1x8x128xbf16>
    tpu.vector_store %arg4[%510, %c0_234, %c0_235], %513 {strides = array<i32>} : memref<9x8x128xbf16, #tpu.memory_space<vmem>>, vector<1x8x128xbf16>,
    %c3_i32_236 = arith.constant 3 : i32
    %c0_237 = arith.constant 0 : index
    %c0_238 = arith.constant 0 : index
    %514 = vector.load %arg8[%c0_237, %c0_238] : memref<8x128xf32, #tpu.memory_space<vmem>>, vector<8x128xf32>
    %515 = arith.truncf %514 : vector<8x128xf32> to vector<8x128xbf16>
    %cst_239 = arith.constant dense<0.000000e+00> : vector<8x512xf32>
    %516 = tpu.matmul %515, %393, %cst_239 {dimension_numbers = #tpu.dot_dimension_numbers<[1], [0], [0], [1], [0, 0, 1, 1], [], []>} : vector<8x128xbf16>, vector<128x512xbf16>, vector<8x512xf32> -> vector<8x512xf32>
    %517 = arith.index_cast %c3_i32_236 : i32 to index
    %c0_240 = arith.constant 0 : index
    %c0_241 = arith.constant 0 : index
    %518 = vector.load %arg7[%517, %c0_240, %c0_241] : memref<9x8x512xf32, #tpu.memory_space<vmem>>, vector<1x8x512xf32>
    %519 = vector.shape_cast %518 : vector<1x8x512xf32> to vector<8x512xf32>
    %520 = arith.addf %516, %519 : vector<8x512xf32>
    %521 = vector.extract_strided_slice %520 {offsets = [0, 0], sizes = [8, 128], strides = [1, 1]} : vector<8x512xf32> to vector<8x128xf32>
    %522 = arith.negf %521 : vector<8x128xf32>
    %523 = math.exp %522 : vector<8x128xf32>
    %cst_242 = arith.constant 1.000000e+00 : f32
    %524 = vector.broadcast %cst_242 : f32 to vector<8x128xf32>
    %525 = arith.addf %524, %523 : vector<8x128xf32>
    %526 = arith.divf %524, %525 : vector<8x128xf32>
    %527 = vector.extract_strided_slice %520 {offsets = [0, 128], sizes = [8, 128], strides = [1, 1]} : vector<8x512xf32> to vector<8x128xf32>
    %528 = arith.negf %527 : vector<8x128xf32>
    %529 = math.exp %528 : vector<8x128xf32>
    %cst_243 = arith.constant 1.000000e+00 : f32
    %530 = vector.broadcast %cst_243 : f32 to vector<8x128xf32>
    %531 = arith.addf %530, %529 : vector<8x128xf32>
    %532 = arith.divf %530, %531 : vector<8x128xf32>
    %533 = vector.extract_strided_slice %520 {offsets = [0, 256], sizes = [8, 128], strides = [1, 1]} : vector<8x512xf32> to vector<8x128xf32>
    %534 = math.tanh %533 : vector<8x128xf32>
    %535 = vector.extract_strided_slice %520 {offsets = [0, 384], sizes = [8, 128], strides = [1, 1]} : vector<8x512xf32> to vector<8x128xf32>
    %536 = arith.negf %535 : vector<8x128xf32>
    %537 = math.exp %536 : vector<8x128xf32>
    %cst_244 = arith.constant 1.000000e+00 : f32
    %538 = vector.broadcast %cst_244 : f32 to vector<8x128xf32>
    %539 = arith.addf %538, %537 : vector<8x128xf32>
    %540 = arith.divf %538, %539 : vector<8x128xf32>
    %c0_245 = arith.constant 0 : index
    %c0_246 = arith.constant 0 : index
    %541 = vector.load %arg9[%c0_245, %c0_246] : memref<8x128xf32, #tpu.memory_space<vmem>>, vector<8x128xf32>
    %542 = arith.mulf %532, %541 : vector<8x128xf32>
    %543 = arith.mulf %526, %534 : vector<8x128xf32>
    %544 = arith.addf %542, %543 : vector<8x128xf32>
    %545 = math.tanh %544 : vector<8x128xf32>
    %546 = arith.mulf %540, %545 : vector<8x128xf32>
    %c0_247 = arith.constant 0 : index
    %c0_248 = arith.constant 0 : index
    %547 = vector.load %arg9[%c0_247, %c0_248] : memref<8x128xf32, #tpu.memory_space<vmem>>, vector<8x128xf32>
    tpu.vector_store %arg9[%c0_247, %c0_248], %544 {strides = array<i32>} : memref<8x128xf32, #tpu.memory_space<vmem>>, vector<8x128xf32>,
    %c0_249 = arith.constant 0 : index
    %c0_250 = arith.constant 0 : index
    %548 = vector.load %arg8[%c0_249, %c0_250] : memref<8x128xf32, #tpu.memory_space<vmem>>, vector<8x128xf32>
    tpu.vector_store %arg8[%c0_249, %c0_250], %546 {strides = array<i32>} : memref<8x128xf32, #tpu.memory_space<vmem>>, vector<8x128xf32>,
    %549 = arith.truncf %546 : vector<8x128xf32> to vector<8x128xbf16>
    %550 = arith.index_cast %c3_i32_236 : i32 to index
    %c0_251 = arith.constant 0 : index
    %c0_252 = arith.constant 0 : index
    %551 = vector.load %arg4[%550, %c0_251, %c0_252] : memref<9x8x128xbf16, #tpu.memory_space<vmem>>, vector<1x8x128xbf16>
    %552 = vector.shape_cast %551 : vector<1x8x128xbf16> to vector<8x128xbf16>
    %553 = vector.shape_cast %549 : vector<8x128xbf16> to vector<1x8x128xbf16>
    tpu.vector_store %arg4[%550, %c0_251, %c0_252], %553 {strides = array<i32>} : memref<9x8x128xbf16, #tpu.memory_space<vmem>>, vector<1x8x128xbf16>,
    %c4_i32_253 = arith.constant 4 : i32
    %c0_254 = arith.constant 0 : index
    %c0_255 = arith.constant 0 : index
    %554 = vector.load %arg8[%c0_254, %c0_255] : memref<8x128xf32, #tpu.memory_space<vmem>>, vector<8x128xf32>
    %555 = arith.truncf %554 : vector<8x128xf32> to vector<8x128xbf16>
    %cst_256 = arith.constant dense<0.000000e+00> : vector<8x512xf32>
    %556 = tpu.matmul %555, %393, %cst_256 {dimension_numbers = #tpu.dot_dimension_numbers<[1], [0], [0], [1], [0, 0, 1, 1], [], []>} : vector<8x128xbf16>, vector<128x512xbf16>, vector<8x512xf32> -> vector<8x512xf32>
    %557 = arith.index_cast %c4_i32_253 : i32 to index
    %c0_257 = arith.constant 0 : index
    %c0_258 = arith.constant 0 : index
    %558 = vector.load %arg7[%557, %c0_257, %c0_258] : memref<9x8x512xf32, #tpu.memory_space<vmem>>, vector<1x8x512xf32>
    %559 = vector.shape_cast %558 : vector<1x8x512xf32> to vector<8x512xf32>
    %560 = arith.addf %556, %559 : vector<8x512xf32>
    %561 = vector.extract_strided_slice %560 {offsets = [0, 0], sizes = [8, 128], strides = [1, 1]} : vector<8x512xf32> to vector<8x128xf32>
    %562 = arith.negf %561 : vector<8x128xf32>
    %563 = math.exp %562 : vector<8x128xf32>
    %cst_259 = arith.constant 1.000000e+00 : f32
    %564 = vector.broadcast %cst_259 : f32 to vector<8x128xf32>
    %565 = arith.addf %564, %563 : vector<8x128xf32>
    %566 = arith.divf %564, %565 : vector<8x128xf32>
    %567 = vector.extract_strided_slice %560 {offsets = [0, 128], sizes = [8, 128], strides = [1, 1]} : vector<8x512xf32> to vector<8x128xf32>
    %568 = arith.negf %567 : vector<8x128xf32>
    %569 = math.exp %568 : vector<8x128xf32>
    %cst_260 = arith.constant 1.000000e+00 : f32
    %570 = vector.broadcast %cst_260 : f32 to vector<8x128xf32>
    %571 = arith.addf %570, %569 : vector<8x128xf32>
    %572 = arith.divf %570, %571 : vector<8x128xf32>
    %573 = vector.extract_strided_slice %560 {offsets = [0, 256], sizes = [8, 128], strides = [1, 1]} : vector<8x512xf32> to vector<8x128xf32>
    %574 = math.tanh %573 : vector<8x128xf32>
    %575 = vector.extract_strided_slice %560 {offsets = [0, 384], sizes = [8, 128], strides = [1, 1]} : vector<8x512xf32> to vector<8x128xf32>
    %576 = arith.negf %575 : vector<8x128xf32>
    %577 = math.exp %576 : vector<8x128xf32>
    %cst_261 = arith.constant 1.000000e+00 : f32
    %578 = vector.broadcast %cst_261 : f32 to vector<8x128xf32>
    %579 = arith.addf %578, %577 : vector<8x128xf32>
    %580 = arith.divf %578, %579 : vector<8x128xf32>
    %c0_262 = arith.constant 0 : index
    %c0_263 = arith.constant 0 : index
    %581 = vector.load %arg9[%c0_262, %c0_263] : memref<8x128xf32, #tpu.memory_space<vmem>>, vector<8x128xf32>
    %582 = arith.mulf %572, %581 : vector<8x128xf32>
    %583 = arith.mulf %566, %574 : vector<8x128xf32>
    %584 = arith.addf %582, %583 : vector<8x128xf32>
    %585 = math.tanh %584 : vector<8x128xf32>
    %586 = arith.mulf %580, %585 : vector<8x128xf32>
    %c0_264 = arith.constant 0 : index
    %c0_265 = arith.constant 0 : index
    %587 = vector.load %arg9[%c0_264, %c0_265] : memref<8x128xf32, #tpu.memory_space<vmem>>, vector<8x128xf32>
    tpu.vector_store %arg9[%c0_264, %c0_265], %584 {strides = array<i32>} : memref<8x128xf32, #tpu.memory_space<vmem>>, vector<8x128xf32>,
    %c0_266 = arith.constant 0 : index
    %c0_267 = arith.constant 0 : index
    %588 = vector.load %arg8[%c0_266, %c0_267] : memref<8x128xf32, #tpu.memory_space<vmem>>, vector<8x128xf32>
    tpu.vector_store %arg8[%c0_266, %c0_267], %586 {strides = array<i32>} : memref<8x128xf32, #tpu.memory_space<vmem>>, vector<8x128xf32>,
    %589 = arith.truncf %586 : vector<8x128xf32> to vector<8x128xbf16>
    %590 = arith.index_cast %c4_i32_253 : i32 to index
    %c0_268 = arith.constant 0 : index
    %c0_269 = arith.constant 0 : index
    %591 = vector.load %arg4[%590, %c0_268, %c0_269] : memref<9x8x128xbf16, #tpu.memory_space<vmem>>, vector<1x8x128xbf16>
    %592 = vector.shape_cast %591 : vector<1x8x128xbf16> to vector<8x128xbf16>
    %593 = vector.shape_cast %589 : vector<8x128xbf16> to vector<1x8x128xbf16>
    tpu.vector_store %arg4[%590, %c0_268, %c0_269], %593 {strides = array<i32>} : memref<9x8x128xbf16, #tpu.memory_space<vmem>>, vector<1x8x128xbf16>,
    %c5_i32_270 = arith.constant 5 : i32
    %c0_271 = arith.constant 0 : index
    %c0_272 = arith.constant 0 : index
    %594 = vector.load %arg8[%c0_271, %c0_272] : memref<8x128xf32, #tpu.memory_space<vmem>>, vector<8x128xf32>
    %595 = arith.truncf %594 : vector<8x128xf32> to vector<8x128xbf16>
    %cst_273 = arith.constant dense<0.000000e+00> : vector<8x512xf32>
    %596 = tpu.matmul %595, %393, %cst_273 {dimension_numbers = #tpu.dot_dimension_numbers<[1], [0], [0], [1], [0, 0, 1, 1], [], []>} : vector<8x128xbf16>, vector<128x512xbf16>, vector<8x512xf32> -> vector<8x512xf32>
    %597 = arith.index_cast %c5_i32_270 : i32 to index
    %c0_274 = arith.constant 0 : index
    %c0_275 = arith.constant 0 : index
    %598 = vector.load %arg7[%597, %c0_274, %c0_275] : memref<9x8x512xf32, #tpu.memory_space<vmem>>, vector<1x8x512xf32>
    %599 = vector.shape_cast %598 : vector<1x8x512xf32> to vector<8x512xf32>
    %600 = arith.addf %596, %599 : vector<8x512xf32>
    %601 = vector.extract_strided_slice %600 {offsets = [0, 0], sizes = [8, 128], strides = [1, 1]} : vector<8x512xf32> to vector<8x128xf32>
    %602 = arith.negf %601 : vector<8x128xf32>
    %603 = math.exp %602 : vector<8x128xf32>
    %cst_276 = arith.constant 1.000000e+00 : f32
    %604 = vector.broadcast %cst_276 : f32 to vector<8x128xf32>
    %605 = arith.addf %604, %603 : vector<8x128xf32>
    %606 = arith.divf %604, %605 : vector<8x128xf32>
    %607 = vector.extract_strided_slice %600 {offsets = [0, 128], sizes = [8, 128], strides = [1, 1]} : vector<8x512xf32> to vector<8x128xf32>
    %608 = arith.negf %607 : vector<8x128xf32>
    %609 = math.exp %608 : vector<8x128xf32>
    %cst_277 = arith.constant 1.000000e+00 : f32
    %610 = vector.broadcast %cst_277 : f32 to vector<8x128xf32>
    %611 = arith.addf %610, %609 : vector<8x128xf32>
    %612 = arith.divf %610, %611 : vector<8x128xf32>
    %613 = vector.extract_strided_slice %600 {offsets = [0, 256], sizes = [8, 128], strides = [1, 1]} : vector<8x512xf32> to vector<8x128xf32>
    %614 = math.tanh %613 : vector<8x128xf32>
    %615 = vector.extract_strided_slice %600 {offsets = [0, 384], sizes = [8, 128], strides = [1, 1]} : vector<8x512xf32> to vector<8x128xf32>
    %616 = arith.negf %615 : vector<8x128xf32>
    %617 = math.exp %616 : vector<8x128xf32>
    %cst_278 = arith.constant 1.000000e+00 : f32
    %618 = vector.broadcast %cst_278 : f32 to vector<8x128xf32>
    %619 = arith.addf %618, %617 : vector<8x128xf32>
    %620 = arith.divf %618, %619 : vector<8x128xf32>
    %c0_279 = arith.constant 0 : index
    %c0_280 = arith.constant 0 : index
    %621 = vector.load %arg9[%c0_279, %c0_280] : memref<8x128xf32, #tpu.memory_space<vmem>>, vector<8x128xf32>
    %622 = arith.mulf %612, %621 : vector<8x128xf32>
    %623 = arith.mulf %606, %614 : vector<8x128xf32>
    %624 = arith.addf %622, %623 : vector<8x128xf32>
    %625 = math.tanh %624 : vector<8x128xf32>
    %626 = arith.mulf %620, %625 : vector<8x128xf32>
    %c0_281 = arith.constant 0 : index
    %c0_282 = arith.constant 0 : index
    %627 = vector.load %arg9[%c0_281, %c0_282] : memref<8x128xf32, #tpu.memory_space<vmem>>, vector<8x128xf32>
    tpu.vector_store %arg9[%c0_281, %c0_282], %624 {strides = array<i32>} : memref<8x128xf32, #tpu.memory_space<vmem>>, vector<8x128xf32>,
    %c0_283 = arith.constant 0 : index
    %c0_284 = arith.constant 0 : index
    %628 = vector.load %arg8[%c0_283, %c0_284] : memref<8x128xf32, #tpu.memory_space<vmem>>, vector<8x128xf32>
    tpu.vector_store %arg8[%c0_283, %c0_284], %626 {strides = array<i32>} : memref<8x128xf32, #tpu.memory_space<vmem>>, vector<8x128xf32>,
    %629 = arith.truncf %626 : vector<8x128xf32> to vector<8x128xbf16>
    %630 = arith.index_cast %c5_i32_270 : i32 to index
    %c0_285 = arith.constant 0 : index
    %c0_286 = arith.constant 0 : index
    %631 = vector.load %arg4[%630, %c0_285, %c0_286] : memref<9x8x128xbf16, #tpu.memory_space<vmem>>, vector<1x8x128xbf16>
    %632 = vector.shape_cast %631 : vector<1x8x128xbf16> to vector<8x128xbf16>
    %633 = vector.shape_cast %629 : vector<8x128xbf16> to vector<1x8x128xbf16>
    tpu.vector_store %arg4[%630, %c0_285, %c0_286], %633 {strides = array<i32>} : memref<9x8x128xbf16, #tpu.memory_space<vmem>>, vector<1x8x128xbf16>,
    %c6_i32_287 = arith.constant 6 : i32
    %c0_288 = arith.constant 0 : index
    %c0_289 = arith.constant 0 : index
    %634 = vector.load %arg8[%c0_288, %c0_289] : memref<8x128xf32, #tpu.memory_space<vmem>>, vector<8x128xf32>
    %635 = arith.truncf %634 : vector<8x128xf32> to vector<8x128xbf16>
    %cst_290 = arith.constant dense<0.000000e+00> : vector<8x512xf32>
    %636 = tpu.matmul %635, %393, %cst_290 {dimension_numbers = #tpu.dot_dimension_numbers<[1], [0], [0], [1], [0, 0, 1, 1], [], []>} : vector<8x128xbf16>, vector<128x512xbf16>, vector<8x512xf32> -> vector<8x512xf32>
    %637 = arith.index_cast %c6_i32_287 : i32 to index
    %c0_291 = arith.constant 0 : index
    %c0_292 = arith.constant 0 : index
    %638 = vector.load %arg7[%637, %c0_291, %c0_292] : memref<9x8x512xf32, #tpu.memory_space<vmem>>, vector<1x8x512xf32>
    %639 = vector.shape_cast %638 : vector<1x8x512xf32> to vector<8x512xf32>
    %640 = arith.addf %636, %639 : vector<8x512xf32>
    %641 = vector.extract_strided_slice %640 {offsets = [0, 0], sizes = [8, 128], strides = [1, 1]} : vector<8x512xf32> to vector<8x128xf32>
    %642 = arith.negf %641 : vector<8x128xf32>
    %643 = math.exp %642 : vector<8x128xf32>
    %cst_293 = arith.constant 1.000000e+00 : f32
    %644 = vector.broadcast %cst_293 : f32 to vector<8x128xf32>
    %645 = arith.addf %644, %643 : vector<8x128xf32>
    %646 = arith.divf %644, %645 : vector<8x128xf32>
    %647 = vector.extract_strided_slice %640 {offsets = [0, 128], sizes = [8, 128], strides = [1, 1]} : vector<8x512xf32> to vector<8x128xf32>
    %648 = arith.negf %647 : vector<8x128xf32>
    %649 = math.exp %648 : vector<8x128xf32>
    %cst_294 = arith.constant 1.000000e+00 : f32
    %650 = vector.broadcast %cst_294 : f32 to vector<8x128xf32>
    %651 = arith.addf %650, %649 : vector<8x128xf32>
    %652 = arith.divf %650, %651 : vector<8x128xf32>
    %653 = vector.extract_strided_slice %640 {offsets = [0, 256], sizes = [8, 128], strides = [1, 1]} : vector<8x512xf32> to vector<8x128xf32>
    %654 = math.tanh %653 : vector<8x128xf32>
    %655 = vector.extract_strided_slice %640 {offsets = [0, 384], sizes = [8, 128], strides = [1, 1]} : vector<8x512xf32> to vector<8x128xf32>
    %656 = arith.negf %655 : vector<8x128xf32>
    %657 = math.exp %656 : vector<8x128xf32>
    %cst_295 = arith.constant 1.000000e+00 : f32
    %658 = vector.broadcast %cst_295 : f32 to vector<8x128xf32>
    %659 = arith.addf %658, %657 : vector<8x128xf32>
    %660 = arith.divf %658, %659 : vector<8x128xf32>
    %c0_296 = arith.constant 0 : index
    %c0_297 = arith.constant 0 : index
    %661 = vector.load %arg9[%c0_296, %c0_297] : memref<8x128xf32, #tpu.memory_space<vmem>>, vector<8x128xf32>
    %662 = arith.mulf %652, %661 : vector<8x128xf32>
    %663 = arith.mulf %646, %654 : vector<8x128xf32>
    %664 = arith.addf %662, %663 : vector<8x128xf32>
    %665 = math.tanh %664 : vector<8x128xf32>
    %666 = arith.mulf %660, %665 : vector<8x128xf32>
    %c0_298 = arith.constant 0 : index
    %c0_299 = arith.constant 0 : index
    %667 = vector.load %arg9[%c0_298, %c0_299] : memref<8x128xf32, #tpu.memory_space<vmem>>, vector<8x128xf32>
    tpu.vector_store %arg9[%c0_298, %c0_299], %664 {strides = array<i32>} : memref<8x128xf32, #tpu.memory_space<vmem>>, vector<8x128xf32>,
    %c0_300 = arith.constant 0 : index
    %c0_301 = arith.constant 0 : index
    %668 = vector.load %arg8[%c0_300, %c0_301] : memref<8x128xf32, #tpu.memory_space<vmem>>, vector<8x128xf32>
    tpu.vector_store %arg8[%c0_300, %c0_301], %666 {strides = array<i32>} : memref<8x128xf32, #tpu.memory_space<vmem>>, vector<8x128xf32>,
    %669 = arith.truncf %666 : vector<8x128xf32> to vector<8x128xbf16>
    %670 = arith.index_cast %c6_i32_287 : i32 to index
    %c0_302 = arith.constant 0 : index
    %c0_303 = arith.constant 0 : index
    %671 = vector.load %arg4[%670, %c0_302, %c0_303] : memref<9x8x128xbf16, #tpu.memory_space<vmem>>, vector<1x8x128xbf16>
    %672 = vector.shape_cast %671 : vector<1x8x128xbf16> to vector<8x128xbf16>
    %673 = vector.shape_cast %669 : vector<8x128xbf16> to vector<1x8x128xbf16>
    tpu.vector_store %arg4[%670, %c0_302, %c0_303], %673 {strides = array<i32>} : memref<9x8x128xbf16, #tpu.memory_space<vmem>>, vector<1x8x128xbf16>,
    %c7_i32_304 = arith.constant 7 : i32
    %c0_305 = arith.constant 0 : index
    %c0_306 = arith.constant 0 : index
    %674 = vector.load %arg8[%c0_305, %c0_306] : memref<8x128xf32, #tpu.memory_space<vmem>>, vector<8x128xf32>
    %675 = arith.truncf %674 : vector<8x128xf32> to vector<8x128xbf16>
    %cst_307 = arith.constant dense<0.000000e+00> : vector<8x512xf32>
    %676 = tpu.matmul %675, %393, %cst_307 {dimension_numbers = #tpu.dot_dimension_numbers<[1], [0], [0], [1], [0, 0, 1, 1], [], []>} : vector<8x128xbf16>, vector<128x512xbf16>, vector<8x512xf32> -> vector<8x512xf32>
    %677 = arith.index_cast %c7_i32_304 : i32 to index
    %c0_308 = arith.constant 0 : index
    %c0_309 = arith.constant 0 : index
    %678 = vector.load %arg7[%677, %c0_308, %c0_309] : memref<9x8x512xf32, #tpu.memory_space<vmem>>, vector<1x8x512xf32>
    %679 = vector.shape_cast %678 : vector<1x8x512xf32> to vector<8x512xf32>
    %680 = arith.addf %676, %679 : vector<8x512xf32>
    %681 = vector.extract_strided_slice %680 {offsets = [0, 0], sizes = [8, 128], strides = [1, 1]} : vector<8x512xf32> to vector<8x128xf32>
    %682 = arith.negf %681 : vector<8x128xf32>
    %683 = math.exp %682 : vector<8x128xf32>
    %cst_310 = arith.constant 1.000000e+00 : f32
    %684 = vector.broadcast %cst_310 : f32 to vector<8x128xf32>
    %685 = arith.addf %684, %683 : vector<8x128xf32>
    %686 = arith.divf %684, %685 : vector<8x128xf32>
    %687 = vector.extract_strided_slice %680 {offsets = [0, 128], sizes = [8, 128], strides = [1, 1]} : vector<8x512xf32> to vector<8x128xf32>
    %688 = arith.negf %687 : vector<8x128xf32>
    %689 = math.exp %688 : vector<8x128xf32>
    %cst_311 = arith.constant 1.000000e+00 : f32
    %690 = vector.broadcast %cst_311 : f32 to vector<8x128xf32>
    %691 = arith.addf %690, %689 : vector<8x128xf32>
    %692 = arith.divf %690, %691 : vector<8x128xf32>
    %693 = vector.extract_strided_slice %680 {offsets = [0, 256], sizes = [8, 128], strides = [1, 1]} : vector<8x512xf32> to vector<8x128xf32>
    %694 = math.tanh %693 : vector<8x128xf32>
    %695 = vector.extract_strided_slice %680 {offsets = [0, 384], sizes = [8, 128], strides = [1, 1]} : vector<8x512xf32> to vector<8x128xf32>
    %696 = arith.negf %695 : vector<8x128xf32>
    %697 = math.exp %696 : vector<8x128xf32>
    %cst_312 = arith.constant 1.000000e+00 : f32
    %698 = vector.broadcast %cst_312 : f32 to vector<8x128xf32>
    %699 = arith.addf %698, %697 : vector<8x128xf32>
    %700 = arith.divf %698, %699 : vector<8x128xf32>
    %c0_313 = arith.constant 0 : index
    %c0_314 = arith.constant 0 : index
    %701 = vector.load %arg9[%c0_313, %c0_314] : memref<8x128xf32, #tpu.memory_space<vmem>>, vector<8x128xf32>
    %702 = arith.mulf %692, %701 : vector<8x128xf32>
    %703 = arith.mulf %686, %694 : vector<8x128xf32>
    %704 = arith.addf %702, %703 : vector<8x128xf32>
    %705 = math.tanh %704 : vector<8x128xf32>
    %706 = arith.mulf %700, %705 : vector<8x128xf32>
    %c0_315 = arith.constant 0 : index
    %c0_316 = arith.constant 0 : index
    %707 = vector.load %arg9[%c0_315, %c0_316] : memref<8x128xf32, #tpu.memory_space<vmem>>, vector<8x128xf32>
    tpu.vector_store %arg9[%c0_315, %c0_316], %704 {strides = array<i32>} : memref<8x128xf32, #tpu.memory_space<vmem>>, vector<8x128xf32>,
    %c0_317 = arith.constant 0 : index
    %c0_318 = arith.constant 0 : index
    %708 = vector.load %arg8[%c0_317, %c0_318] : memref<8x128xf32, #tpu.memory_space<vmem>>, vector<8x128xf32>
    tpu.vector_store %arg8[%c0_317, %c0_318], %706 {strides = array<i32>} : memref<8x128xf32, #tpu.memory_space<vmem>>, vector<8x128xf32>,
    %709 = arith.truncf %706 : vector<8x128xf32> to vector<8x128xbf16>
    %710 = arith.index_cast %c7_i32_304 : i32 to index
    %c0_319 = arith.constant 0 : index
    %c0_320 = arith.constant 0 : index
    %711 = vector.load %arg4[%710, %c0_319, %c0_320] : memref<9x8x128xbf16, #tpu.memory_space<vmem>>, vector<1x8x128xbf16>
    %712 = vector.shape_cast %711 : vector<1x8x128xbf16> to vector<8x128xbf16>
    %713 = vector.shape_cast %709 : vector<8x128xbf16> to vector<1x8x128xbf16>
    tpu.vector_store %arg4[%710, %c0_319, %c0_320], %713 {strides = array<i32>} : memref<9x8x128xbf16, #tpu.memory_space<vmem>>, vector<1x8x128xbf16>,
    %c8_i32_321 = arith.constant 8 : i32
    %c0_322 = arith.constant 0 : index
    %c0_323 = arith.constant 0 : index
    %714 = vector.load %arg8[%c0_322, %c0_323] : memref<8x128xf32, #tpu.memory_space<vmem>>, vector<8x128xf32>
    %715 = arith.truncf %714 : vector<8x128xf32> to vector<8x128xbf16>
    %cst_324 = arith.constant dense<0.000000e+00> : vector<8x512xf32>
    %716 = tpu.matmul %715, %393, %cst_324 {dimension_numbers = #tpu.dot_dimension_numbers<[1], [0], [0], [1], [0, 0, 1, 1], [], []>} : vector<8x128xbf16>, vector<128x512xbf16>, vector<8x512xf32> -> vector<8x512xf32>
    %717 = arith.index_cast %c8_i32_321 : i32 to index
    %c0_325 = arith.constant 0 : index
    %c0_326 = arith.constant 0 : index
    %718 = vector.load %arg7[%717, %c0_325, %c0_326] : memref<9x8x512xf32, #tpu.memory_space<vmem>>, vector<1x8x512xf32>
    %719 = vector.shape_cast %718 : vector<1x8x512xf32> to vector<8x512xf32>
    %720 = arith.addf %716, %719 : vector<8x512xf32>
    %721 = vector.extract_strided_slice %720 {offsets = [0, 0], sizes = [8, 128], strides = [1, 1]} : vector<8x512xf32> to vector<8x128xf32>
    %722 = arith.negf %721 : vector<8x128xf32>
    %723 = math.exp %722 : vector<8x128xf32>
    %cst_327 = arith.constant 1.000000e+00 : f32
    %724 = vector.broadcast %cst_327 : f32 to vector<8x128xf32>
    %725 = arith.addf %724, %723 : vector<8x128xf32>
    %726 = arith.divf %724, %725 : vector<8x128xf32>
    %727 = vector.extract_strided_slice %720 {offsets = [0, 128], sizes = [8, 128], strides = [1, 1]} : vector<8x512xf32> to vector<8x128xf32>
    %728 = arith.negf %727 : vector<8x128xf32>
    %729 = math.exp %728 : vector<8x128xf32>
    %cst_328 = arith.constant 1.000000e+00 : f32
    %730 = vector.broadcast %cst_328 : f32 to vector<8x128xf32>
    %731 = arith.addf %730, %729 : vector<8x128xf32>
    %732 = arith.divf %730, %731 : vector<8x128xf32>
    %733 = vector.extract_strided_slice %720 {offsets = [0, 256], sizes = [8, 128], strides = [1, 1]} : vector<8x512xf32> to vector<8x128xf32>
    %734 = math.tanh %733 : vector<8x128xf32>
    %735 = vector.extract_strided_slice %720 {offsets = [0, 384], sizes = [8, 128], strides = [1, 1]} : vector<8x512xf32> to vector<8x128xf32>
    %736 = arith.negf %735 : vector<8x128xf32>
    %737 = math.exp %736 : vector<8x128xf32>
    %cst_329 = arith.constant 1.000000e+00 : f32
    %738 = vector.broadcast %cst_329 : f32 to vector<8x128xf32>
    %739 = arith.addf %738, %737 : vector<8x128xf32>
    %740 = arith.divf %738, %739 : vector<8x128xf32>
    %c0_330 = arith.constant 0 : index
    %c0_331 = arith.constant 0 : index
    %741 = vector.load %arg9[%c0_330, %c0_331] : memref<8x128xf32, #tpu.memory_space<vmem>>, vector<8x128xf32>
    %742 = arith.mulf %732, %741 : vector<8x128xf32>
    %743 = arith.mulf %726, %734 : vector<8x128xf32>
    %744 = arith.addf %742, %743 : vector<8x128xf32>
    %745 = math.tanh %744 : vector<8x128xf32>
    %746 = arith.mulf %740, %745 : vector<8x128xf32>
    %c0_332 = arith.constant 0 : index
    %c0_333 = arith.constant 0 : index
    %747 = vector.load %arg9[%c0_332, %c0_333] : memref<8x128xf32, #tpu.memory_space<vmem>>, vector<8x128xf32>
    tpu.vector_store %arg9[%c0_332, %c0_333], %744 {strides = array<i32>} : memref<8x128xf32, #tpu.memory_space<vmem>>, vector<8x128xf32>,
    %c0_334 = arith.constant 0 : index
    %c0_335 = arith.constant 0 : index
    %748 = vector.load %arg8[%c0_334, %c0_335] : memref<8x128xf32, #tpu.memory_space<vmem>>, vector<8x128xf32>
    tpu.vector_store %arg8[%c0_334, %c0_335], %746 {strides = array<i32>} : memref<8x128xf32, #tpu.memory_space<vmem>>, vector<8x128xf32>,
    %749 = arith.truncf %746 : vector<8x128xf32> to vector<8x128xbf16>
    %750 = arith.index_cast %c8_i32_321 : i32 to index
    %c0_336 = arith.constant 0 : index
    %c0_337 = arith.constant 0 : index
    %751 = vector.load %arg4[%750, %c0_336, %c0_337] : memref<9x8x128xbf16, #tpu.memory_space<vmem>>, vector<1x8x128xbf16>
    %752 = vector.shape_cast %751 : vector<1x8x128xbf16> to vector<8x128xbf16>
    %753 = vector.shape_cast %749 : vector<8x128xbf16> to vector<1x8x128xbf16>
    tpu.vector_store %arg4[%750, %c0_336, %c0_337], %753 {strides = array<i32>} : memref<9x8x128xbf16, #tpu.memory_space<vmem>>, vector<1x8x128xbf16>,
    %c9_i32_338 = arith.constant 9 : i32
    return
  }
}

</mosaic_0001>

<llo_original>
// kernel: tpu_custom_call.1
$region0: #{tpu_custom_call.1}
  #allocation0 [shape = 'u32[]', space=smem, size = 0x4, offset = 0x4, fixed_abs, tag = 'smem constant byte address 0x4 - core index']
  #allocation1 [shape = 'u32[72,128]{1,0:T(1,128)}', space=vmem, size = 0x9000, scoped, tag = 'internal scratch']
  #allocation2 [shape = 'bf16[9,8,128]{2,1,0:T(8,128)(2,1)}', space=vmem, size = 0x4800, scoped, tag = 'scratch operand']
  #allocation3 [shape = 'bf16[9,8,128]{2,1,0:T(8,128)(2,1)}', space=vmem, size = 0x4800, scoped, tag = 'scratch operand']
  #allocation4 [shape = 'f32[9,8,512]{2,1,0:T(8,128)}', space=vmem, size = 0x24000, scoped, tag = 'scratch operand']
  #allocation5 [shape = 'f32[8,128]{1,0:T(8,128)}', space=vmem, size = 0x1000, scoped, tag = 'scratch operand']
  #allocation6 [shape = 'f32[8,128]{1,0:T(8,128)}', space=vmem, size = 0x1000, scoped, tag = 'scratch operand']
  %s0 = inlined_call_operand.hbm [shape: bf16[9,8,128], index: 0, kind: input, shape index: {}]
  %s1 = inlined_call_operand.hbm [shape: bf16[2,128,512], index: 1, kind: input, shape index: {}]
  %s2 = inlined_call_operand.hbm [shape: bf16[2,128,512], index: 2, kind: input, shape index: {}]
  %s3 = inlined_call_operand.hbm [shape: f32[2,1,512], index: 3, kind: input, shape index: {}]
  %s4 = inlined_call_operand.hbm [shape: bf16[9,8,128], index: 4, kind: output, shape index: {}]
  %s5 = sld [smem:[#allocation0]]
  $region42: #{tpu_custom_call.1} parent=0
    _
  %s7 = ssub.s32 1, %s5
  %s8 = scalar_select 0, %s7, %s5
  $region1: #{tpu_custom_call.1} parent=0
    #allocation7 [shape = 'u8[18432]{0}', space=vmem, size = 0x4800, scoped, tag = 'input window, operand 0, single buffered']
    #allocation8 [shape = 's32[1]{0}', space=sflag, size = 0x4, scoped, tag = 'scoped memory for tpu_custom_call.1']
    #allocation9 [shape = 's32[1]{0}', space=sflag, size = 0x4, scoped, tag = 'scoped memory for tpu_custom_call.1']
    #allocation10 [shape = 'u8[262144]{0}', space=vmem, size = 0x40000, scoped, tag = 'input window, operand 1, single buffered']
    #allocation11 [shape = 's32[1]{0}', space=sflag, size = 0x4, scoped, tag = 'scoped memory for tpu_custom_call.1']
    #allocation12 [shape = 'u8[262144]{0}', space=vmem, size = 0x40000, scoped, tag = 'input window, operand 2, single buffered']
    #allocation13 [shape = 'u8[4096]{0}', space=vmem, size = 0x1000, scoped, tag = 'input window, operand 3, single buffered']
    #allocation14 [shape = 's32[1]{0}', space=sflag, size = 0x4, scoped, tag = 'scoped memory for tpu_custom_call.1']
    #allocation15 [shape = 'u8[18432]{0}', space=vmem, size = 0x4800, scoped, tag = 'output window, operand 0, single buffered']
    %9 = vsyncpa [#allocation8], 0
    %10 = vsyncpa [#allocation11], 0
    %11 = vsyncpa [#allocation14], 0
    %12 = vsyncpa [#allocation9], 0
    // Predicated region
    $region2: #{tpu_custom_call.1} parent=1 // pred_check
      _
    $region3: #{tpu_custom_call.1} parent=1 // pred_check_branch
      %14 = sbr.rel (0) target = $region5
    $region4: #{tpu_custom_call.1} parent=1 // pred_region
      %16 = vsyncadd [#allocation8], 0
      %s17 = sshll.u32 %s0, 4
      %s18 = int_to_ptr.hbm [resolvable:$true] %s17
      %s19 = sshll.u32 [#allocation7], 4
      %s20 = int_to_ptr.vmem [resolvable:$true] %s19
      %25 = dma.hbm_to_vmem [thread:$0]  %s18, 576, %s20, [#allocation8], 64, 64, 4
    $region5: #{tpu_custom_call.1} parent=1 // pred_fallthru
      _
    // Predicated region
    $region6: #{tpu_custom_call.1} parent=1 // pred_check
      _
    $region7: #{tpu_custom_call.1} parent=1 // pred_check_branch
      %27 = sbr.rel (0) target = $region9
    $region8: #{tpu_custom_call.1} parent=1 // pred_region
      %29 = vsyncadd [#allocation11], 0
      %s30 = sshll.u32 %s1, 4
      %s31 = int_to_ptr.hbm [resolvable:$true] %s30
      %s32 = sshll.u32 [#allocation10], 4
      %s33 = int_to_ptr.vmem [resolvable:$true] %s32
      %38 = dma.hbm_to_vmem [thread:$0]  %s31, 8192, %s33, [#allocation11], 256, 256, 16
    $region9: #{tpu_custom_call.1} parent=1 // pred_fallthru
      _
    // Predicated region
    $region10: #{tpu_custom_call.1} parent=1 // pred_check
      _
    $region11: #{tpu_custom_call.1} parent=1 // pred_check_branch
      %40 = sbr.rel (0) target = $region13
    $region12: #{tpu_custom_call.1} parent=1 // pred_region
      %42 = vsyncadd [#allocation11], 0
      %s43 = sshll.u32 %s2, 4
      %s44 = int_to_ptr.hbm [resolvable:$true] %s43
      %s45 = sshll.u32 [#allocation12], 4
      %s46 = int_to_ptr.vmem [resolvable:$true] %s45
      %51 = dma.hbm_to_vmem [thread:$0]  %s44, 8192, %s46, [#allocation11], 256, 256, 16
    $region13: #{tpu_custom_call.1} parent=1 // pred_fallthru
      _
    // Predicated region
    $region14: #{tpu_custom_call.1} parent=1 // pred_check
      _
    $region15: #{tpu_custom_call.1} parent=1 // pred_check_branch
      %53 = sbr.rel (0) target = $region17
    $region16: #{tpu_custom_call.1} parent=1 // pred_region
      %55 = vsyncadd [#allocation14], 0
      %s56 = sshll.u32 %s3, 4
      %s57 = int_to_ptr.hbm [resolvable:$true] %s56
      %s58 = sshll.u32 [#allocation13], 4
      %s59 = int_to_ptr.vmem [resolvable:$true] %s58
      %64 = dma.hbm_to_vmem [thread:$0]  %s57, 128, %s59, [#allocation14], 64, 64, 4
    $region17: #{tpu_custom_call.1} parent=1 // pred_fallthru
      _
    // Predicated region
    $region18: #{tpu_custom_call.1} parent=1 // pred_check
      _
    $region19: #{tpu_custom_call.1} parent=1 // pred_check_branch
      %66 = sbr.rel (0) target = $region21
    $region20: #{tpu_custom_call.1} parent=1 // pred_region
      %68 = dma.done [#allocation8], 576
    $region21: #{tpu_custom_call.1} parent=1 // pred_fallthru
      _
    // Predicated region
    $region22: #{tpu_custom_call.1} parent=1 // pred_check
      _
    $region23: #{tpu_custom_call.1} parent=1 // pred_check_branch
      %70 = sbr.rel (0) target = $region25
    $region24: #{tpu_custom_call.1} parent=1 // pred_region
      %72 = dma.done [#allocation11], 8192
    $region25: #{tpu_custom_call.1} parent=1 // pred_fallthru
      _
    // Predicated region
    $region26: #{tpu_custom_call.1} parent=1 // pred_check
      _
    $region27: #{tpu_custom_call.1} parent=1 // pred_check_branch
      %74 = sbr.rel (0) target = $region29
    $region28: #{tpu_custom_call.1} parent=1 // pred_region
      %76 = dma.done [#allocation11], 8192
    $region29: #{tpu_custom_call.1} parent=1 // pred_fallthru
      _
    // Predicated region
    $region30: #{tpu_custom_call.1} parent=1 // pred_check
      _
    $region31: #{tpu_custom_call.1} parent=1 // pred_check_branch
      %78 = sbr.rel (0) target = $region33
    $region32: #{tpu_custom_call.1} parent=1 // pred_region
      %80 = dma.done [#allocation14], 128
    $region33: #{tpu_custom_call.1} parent=1 // pred_fallthru
      _
    %v81 = vld [vmem:[#allocation7] sm:$0xf]
    %v82 = vld [vmem:[#allocation7 + $0x4] sm:$0xf]
    %v83 = vld [vmem:[#allocation7 + $0x8] sm:$0xf]
    %v84 = vld [vmem:[#allocation7 + $0xc] sm:$0xf]
    %v85 = vld [vmem:[#allocation7 + $0x10] sm:$0xf]
    %v86 = vld [vmem:[#allocation7 + $0x14] sm:$0xf]
    %v87 = vld [vmem:[#allocation7 + $0x18] sm:$0xf]
    %v88 = vld [vmem:[#allocation7 + $0x1c] sm:$0xf]
    %v89 = vld [vmem:[#allocation7 + $0x20] sm:$0xf]
    %v90 = vld [vmem:[#allocation10] sm:$0xff]
    %v91 = vld [vmem:[#allocation10 + $0x8] sm:$0xff]
    %v92 = vld [vmem:[#allocation10 + $0x10] sm:$0xff]
    %v93 = vld [vmem:[#allocation10 + $0x18] sm:$0xff]
    %v94 = vld [vmem:[#allocation10 + $0x20] sm:$0xff]
    %v95 = vld [vmem:[#allocation10 + $0x28] sm:$0xff]
    %v96 = vld [vmem:[#allocation10 + $0x30] sm:$0xff]
    %v97 = vld [vmem:[#allocation10 + $0x38] sm:$0xff]
    %v98 = vld [vmem:[#allocation10 + $0x40] sm:$0xff]
    %v99 = vld [vmem:[#allocation10 + $0x48] sm:$0xff]
    %v100 = vld [vmem:[#allocation10 + $0x50] sm:$0xff]
    %v101 = vld [vmem:[#allocation10 + $0x58] sm:$0xff]
    %v102 = vld [vmem:[#allocation10 + $0x60] sm:$0xff]
    %v103 = vld [vmem:[#allocation10 + $0x68] sm:$0xff]
    %v104 = vld [vmem:[#allocation10 + $0x70] sm:$0xff]
    %v105 = vld [vmem:[#allocation10 + $0x78] sm:$0xff]
    %v106 = vld [vmem:[#allocation10 + $0x80] sm:$0xff]
    %v107 = vld [vmem:[#allocation10 + $0x88] sm:$0xff]
    %v108 = vld [vmem:[#allocation10 + $0x90] sm:$0xff]
    %v109 = vld [vmem:[#allocation10 + $0x98] sm:$0xff]
    %v110 = vld [vmem:[#allocation10 + $0xa0] sm:$0xff]
    %v111 = vld [vmem:[#allocation10 + $0xa8] sm:$0xff]
    %v112 = vld [vmem:[#allocation10 + $0xb0] sm:$0xff]
    %v113 = vld [vmem:[#allocation10 + $0xb8] sm:$0xff]
    %v114 = vld [vmem:[#allocation10 + $0xc0] sm:$0xff]
    %v115 = vld [vmem:[#allocation10 + $0xc8] sm:$0xff]
    %v116 = vld [vmem:[#allocation10 + $0xd0] sm:$0xff]
    %v117 = vld [vmem:[#allocation10 + $0xd8] sm:$0xff]
    %v118 = vld [vmem:[#allocation10 + $0xe0] sm:$0xff]
    %v119 = vld [vmem:[#allocation10 + $0xe8] sm:$0xff]
    %v120 = vld [vmem:[#allocation10 + $0xf0] sm:$0xff]
    %v121 = vld [vmem:[#allocation10 + $0xf8] sm:$0xff]
    %v122 = vld [vmem:[#allocation13] sm:$0xf]
    %v124 = vperm.slane %v122, 0
    %v125 = vperm.slane %v122, 1
    %v126 = vperm.slane %v122, 2
    %v127 = vperm.slane %v122, 3
    %v141 = vunpack.c.l.b16 %v81
    %v142 = vunpack.c.l.b16 %v82
    %v143 = vunpack.c.l.b16 %v83
    %v144 = vunpack.c.l.b16 %v84
    %v145 = vunpack.c.l.b16 %v85
    %v146 = vunpack.c.l.b16 %v86
    %v147 = vunpack.c.l.b16 %v87
    %v148 = vunpack.c.l.b16 %v88
    %v149 = vunpack.c.l.b16 %v89
    %v150 = vpack.c.b16 %v142, %v141
    %v151 = vpack.c.b16 %v144, %v143
    %v152 = vpack.c.b16 %v146, %v145
    %v153 = vpack.c.b16 %v148, %v147
    %v154 = vpack.c.b16 %v149, %v149
    %v192 = vunpack.c.l.b16 %v90
    %v193 = vunpack.c.h.b16 %v90
    %v194 = vunpack.c.l.b16 %v91
    %v195 = vunpack.c.h.b16 %v91
    %v196 = vunpack.c.l.b16 %v92
    %v197 = vunpack.c.h.b16 %v92
    %v198 = vunpack.c.l.b16 %v93
    %v199 = vunpack.c.h.b16 %v93
    %v200 = vunpack.c.l.b16 %v94
    %v201 = vunpack.c.h.b16 %v94
    %v202 = vunpack.c.l.b16 %v95
    %v203 = vunpack.c.h.b16 %v95
    %v204 = vunpack.c.l.b16 %v96
    %v205 = vunpack.c.h.b16 %v96
    %v206 = vunpack.c.l.b16 %v97
    %v207 = vunpack.c.h.b16 %v97
    %v208 = vunpack.c.l.b16 %v98
    %v209 = vunpack.c.h.b16 %v98
    %v210 = vunpack.c.l.b16 %v99
    %v211 = vunpack.c.h.b16 %v99
    %v212 = vunpack.c.l.b16 %v100
    %v213 = vunpack.c.h.b16 %v100
    %v214 = vunpack.c.l.b16 %v101
    %v215 = vunpack.c.h.b16 %v101
    %v216 = vunpack.c.l.b16 %v102
    %v217 = vunpack.c.h.b16 %v102
    %v218 = vunpack.c.l.b16 %v103
    %v219 = vunpack.c.h.b16 %v103
    %v220 = vunpack.c.l.b16 %v104
    %v221 = vunpack.c.h.b16 %v104
    %v222 = vunpack.c.l.b16 %v105
    %v223 = vunpack.c.h.b16 %v105
    %v224 = vunpack.c.l.b16 %v106
    %v225 = vunpack.c.h.b16 %v106
    %v226 = vunpack.c.l.b16 %v107
    %v227 = vunpack.c.h.b16 %v107
    %v228 = vunpack.c.l.b16 %v108
    %v229 = vunpack.c.h.b16 %v108
    %v230 = vunpack.c.l.b16 %v109
    %v231 = vunpack.c.h.b16 %v109
    %v232 = vunpack.c.l.b16 %v110
    %v233 = vunpack.c.h.b16 %v110
    %v234 = vunpack.c.l.b16 %v111
    %v235 = vunpack.c.h.b16 %v111
    %v236 = vunpack.c.l.b16 %v112
    %v237 = vunpack.c.h.b16 %v112
    %v238 = vunpack.c.l.b16 %v113
    %v239 = vunpack.c.h.b16 %v113
    %v240 = vunpack.c.l.b16 %v114
    %v241 = vunpack.c.h.b16 %v114
    %v242 = vunpack.c.l.b16 %v115
    %v243 = vunpack.c.h.b16 %v115
    %v244 = vunpack.c.l.b16 %v116
    %v245 = vunpack.c.h.b16 %v116
    %v246 = vunpack.c.l.b16 %v117
    %v247 = vunpack.c.h.b16 %v117
    %v248 = vunpack.c.l.b16 %v118
    %v249 = vunpack.c.h.b16 %v118
    %v250 = vunpack.c.l.b16 %v119
    %v251 = vunpack.c.h.b16 %v119
    %v252 = vunpack.c.l.b16 %v120
    %v253 = vunpack.c.h.b16 %v120
    %v254 = vunpack.c.l.b16 %v121
    %v255 = vunpack.c.h.b16 %v121
    %v256 = vpack.c.b16 %v196, %v192
    %v257 = vpack.c.b16 %v197, %v193
    %v258 = vpack.c.b16 %v198, %v194
    %v259 = vpack.c.b16 %v199, %v195
    %v260 = vpack.c.b16 %v204, %v200
    %v261 = vpack.c.b16 %v205, %v201
    %v262 = vpack.c.b16 %v206, %v202
    %v263 = vpack.c.b16 %v207, %v203
    %v264 = vpack.c.b16 %v212, %v208
    %v265 = vpack.c.b16 %v213, %v209
    %v266 = vpack.c.b16 %v214, %v210
    %v267 = vpack.c.b16 %v215, %v211
    %v268 = vpack.c.b16 %v220, %v216
    %v269 = vpack.c.b16 %v221, %v217
    %v270 = vpack.c.b16 %v222, %v218
    %v271 = vpack.c.b16 %v223, %v219
    %v272 = vpack.c.b16 %v228, %v224
    %v273 = vpack.c.b16 %v229, %v225
    %v274 = vpack.c.b16 %v230, %v226
    %v275 = vpack.c.b16 %v231, %v227
    %v276 = vpack.c.b16 %v236, %v232
    %v277 = vpack.c.b16 %v237, %v233
    %v278 = vpack.c.b16 %v238, %v234
    %v279 = vpack.c.b16 %v239, %v235
    %v280 = vpack.c.b16 %v244, %v240
    %v281 = vpack.c.b16 %v245, %v241
    %v282 = vpack.c.b16 %v246, %v242
    %v283 = vpack.c.b16 %v247, %v243
    %v284 = vpack.c.b16 %v252, %v248
    %v285 = vpack.c.b16 %v253, %v249
    %v286 = vpack.c.b16 %v254, %v250
    %v287 = vpack.c.b16 %v255, %v251
    %320 = vmatpush.bf16.msra.mxu0 %v284
    %321 = vmatpush.bf16.msra.mxu0 %v280
    %322 = vmatpush.bf16.msra.mxu0 %v276
    %323 = vmatpush.bf16.msra.mxu0 %v272
    %324 = vmatpush.bf16.msra.mxu0 %v268
    %325 = vmatpush.bf16.msra.mxu0 %v264
    %326 = vmatpush.bf16.msra.mxu0 %v260
    %327 = vmatpush.bf16.msra.mxu0 %v256
    %328 = vmatmul.bf16.gmra.mxu0 %v150
    %v329 = vpop.f32.mrf.mxu0
    %v330 = vadd.f32 %v124, %v329
    %v331 = vpop.f32.mrf.mxu0
    %v332 = vadd.f32 %v124, %v331
    %333 = vmatmul.bf16.gmra.mxu0 %v151
    %v334 = vpop.f32.mrf.mxu0
    %v335 = vadd.f32 %v124, %v334
    %v336 = vpop.f32.mrf.mxu0
    %v337 = vadd.f32 %v124, %v336
    %338 = vmatmul.bf16.gmra.mxu0 %v152
    %v339 = vpop.f32.mrf.mxu0
    %v340 = vadd.f32 %v124, %v339
    %v341 = vpop.f32.mrf.mxu0
    %v342 = vadd.f32 %v124, %v341
    %343 = vmatmul.bf16.gmra.mxu0 %v153
    %v344 = vpop.f32.mrf.mxu0
    %v345 = vadd.f32 %v124, %v344
    %v346 = vpop.f32.mrf.mxu0
    %v347 = vadd.f32 %v124, %v346
    %348 = vmatmul.bf16.gmra.mxu0 %v154
    %v349 = vpop.f32.mrf.mxu0
    %v350 = vadd.f32 %v124, %v349
    %v351 = vpop.f32.mrf.mxu0
    %352 = vdwg.mxu0
    %353 = vmatpush.bf16.msra.mxu0 %v285
    %354 = vmatpush.bf16.msra.mxu0 %v281
    %355 = vmatpush.bf16.msra.mxu0 %v277
    %356 = vmatpush.bf16.msra.mxu0 %v273
    %357 = vmatpush.bf16.msra.mxu0 %v269
    %358 = vmatpush.bf16.msra.mxu0 %v265
    %359 = vmatpush.bf16.msra.mxu0 %v261
    %360 = vmatpush.bf16.msra.mxu0 %v257
    %361 = vmatmul.bf16.gmra.mxu0 %v150
    %v362 = vpop.f32.mrf.mxu0
    %v363 = vadd.f32 %v125, %v362
    %v364 = vpop.f32.mrf.mxu0
    %v365 = vadd.f32 %v125, %v364
    %366 = vmatmul.bf16.gmra.mxu0 %v151
    %v367 = vpop.f32.mrf.mxu0
    %v368 = vadd.f32 %v125, %v367
    %v369 = vpop.f32.mrf.mxu0
    %v370 = vadd.f32 %v125, %v369
    %371 = vmatmul.bf16.gmra.mxu0 %v152
    %v372 = vpop.f32.mrf.mxu0
    %v373 = vadd.f32 %v125, %v372
    %v374 = vpop.f32.mrf.mxu0
    %v375 = vadd.f32 %v125, %v374
    %376 = vmatmul.bf16.gmra.mxu0 %v153
    %v377 = vpop.f32.mrf.mxu0
    %v378 = vadd.f32 %v125, %v377
    %v379 = vpop.f32.mrf.mxu0
    %v380 = vadd.f32 %v125, %v379
    %381 = vmatmul.bf16.gmra.mxu0 %v154
    %v382 = vpop.f32.mrf.mxu0
    %v383 = vadd.f32 %v125, %v382
    %v384 = vpop.f32.mrf.mxu0
    %385 = vdwg.mxu0
    %386 = vmatpush.bf16.msra.mxu0 %v286
    %387 = vmatpush.bf16.msra.mxu0 %v282
    %388 = vmatpush.bf16.msra.mxu0 %v278
    %389 = vmatpush.bf16.msra.mxu0 %v274
    %390 = vmatpush.bf16.msra.mxu0 %v270
    %391 = vmatpush.bf16.msra.mxu0 %v266
    %392 = vmatpush.bf16.msra.mxu0 %v262
    %393 = vmatpush.bf16.msra.mxu0 %v258
    %394 = vmatmul.bf16.gmra.mxu0 %v150
    %v395 = vpop.f32.mrf.mxu0
    %v396 = vadd.f32 %v126, %v395
    %v397 = vpop.f32.mrf.mxu0
    %v398 = vadd.f32 %v126, %v397
    %399 = vmatmul.bf16.gmra.mxu0 %v151
    %v400 = vpop.f32.mrf.mxu0
    %v401 = vadd.f32 %v126, %v400
    %v402 = vpop.f32.mrf.mxu0
    %v403 = vadd.f32 %v126, %v402
    %404 = vmatmul.bf16.gmra.mxu0 %v152
    %v405 = vpop.f32.mrf.mxu0
    %v406 = vadd.f32 %v126, %v405
    %v407 = vpop.f32.mrf.mxu0
    %v408 = vadd.f32 %v126, %v407
    %409 = vmatmul.bf16.gmra.mxu0 %v153
    %v410 = vpop.f32.mrf.mxu0
    %v411 = vadd.f32 %v126, %v410
    %v412 = vpop.f32.mrf.mxu0
    %v413 = vadd.f32 %v126, %v412
    %414 = vmatmul.bf16.gmra.mxu0 %v154
    %v415 = vpop.f32.mrf.mxu0
    %v416 = vadd.f32 %v126, %v415
    %v417 = vpop.f32.mrf.mxu0
    %418 = vdwg.mxu0
    %419 = vmatpush.bf16.msra.mxu0 %v287
    %420 = vmatpush.bf16.msra.mxu0 %v283
    %421 = vmatpush.bf16.msra.mxu0 %v279
    %422 = vmatpush.bf16.msra.mxu0 %v275
    %423 = vmatpush.bf16.msra.mxu0 %v271
    %424 = vmatpush.bf16.msra.mxu0 %v267
    %425 = vmatpush.bf16.msra.mxu0 %v263
    %426 = vmatpush.bf16.msra.mxu0 %v259
    %427 = vmatmul.bf16.gmra.mxu0 %v150
    %v428 = vpop.f32.mrf.mxu0
    %v429 = vadd.f32 %v127, %v428
    %v430 = vpop.f32.mrf.mxu0
    %v431 = vadd.f32 %v127, %v430
    %432 = vmatmul.bf16.gmra.mxu0 %v151
    %v433 = vpop.f32.mrf.mxu0
    %v434 = vadd.f32 %v127, %v433
    %v435 = vpop.f32.mrf.mxu0
    %v436 = vadd.f32 %v127, %v435
    %437 = vmatmul.bf16.gmra.mxu0 %v152
    %v438 = vpop.f32.mrf.mxu0
    %v439 = vadd.f32 %v127, %v438
    %v440 = vpop.f32.mrf.mxu0
    %v441 = vadd.f32 %v127, %v440
    %442 = vmatmul.bf16.gmra.mxu0 %v153
    %v443 = vpop.f32.mrf.mxu0
    %v444 = vadd.f32 %v127, %v443
    %v445 = vpop.f32.mrf.mxu0
    %v446 = vadd.f32 %v127, %v445
    %447 = vmatmul.bf16.gmra.mxu0 %v154
    %v448 = vpop.f32.mrf.mxu0
    %v449 = vadd.f32 %v127, %v448
    %v450 = vpop.f32.mrf.mxu0
    %451 = vdwg.mxu0
    %452 = vst [vmem:[#allocation4] sm:$0xff] %v330
    %453 = vst [vmem:[#allocation4 + $0x8] sm:$0xff] %v363
    %454 = vst [vmem:[#allocation4 + $0x10] sm:$0xff] %v396
    %455 = vst [vmem:[#allocation4 + $0x18] sm:$0xff] %v429
    %456 = vst [vmem:[#allocation4 + $0x20] sm:$0xff] %v332
    %457 = vst [vmem:[#allocation4 + $0x28] sm:$0xff] %v365
    %458 = vst [vmem:[#allocation4 + $0x30] sm:$0xff] %v398
    %459 = vst [vmem:[#allocation4 + $0x38] sm:$0xff] %v431
    %460 = vst [vmem:[#allocation4 + $0x40] sm:$0xff] %v335
    %461 = vst [vmem:[#allocation4 + $0x48] sm:$0xff] %v368
    %462 = vst [vmem:[#allocation4 + $0x50] sm:$0xff] %v401
    %463 = vst [vmem:[#allocation4 + $0x58] sm:$0xff] %v434
    %464 = vst [vmem:[#allocation4 + $0x60] sm:$0xff] %v337
    %465 = vst [vmem:[#allocation4 + $0x68] sm:$0xff] %v370
    %466 = vst [vmem:[#allocation4 + $0x70] sm:$0xff] %v403
    %467 = vst [vmem:[#allocation4 + $0x78] sm:$0xff] %v436
    %468 = vst [vmem:[#allocation4 + $0x80] sm:$0xff] %v340
    %469 = vst [vmem:[#allocation4 + $0x88] sm:$0xff] %v373
    %470 = vst [vmem:[#allocation4 + $0x90] sm:$0xff] %v406
    %471 = vst [vmem:[#allocation4 + $0x98] sm:$0xff] %v439
    %472 = vst [vmem:[#allocation4 + $0xa0] sm:$0xff] %v342
    %473 = vst [vmem:[#allocation4 + $0xa8] sm:$0xff] %v375
    %474 = vst [vmem:[#allocation4 + $0xb0] sm:$0xff] %v408
    %475 = vst [vmem:[#allocation4 + $0xb8] sm:$0xff] %v441
    %476 = vst [vmem:[#allocation4 + $0xc0] sm:$0xff] %v345
    %477 = vst [vmem:[#allocation4 + $0xc8] sm:$0xff] %v378
    %478 = vst [vmem:[#allocation4 + $0xd0] sm:$0xff] %v411
    %479 = vst [vmem:[#allocation4 + $0xd8] sm:$0xff] %v444
    %480 = vst [vmem:[#allocation4 + $0xe0] sm:$0xff] %v347
    %481 = vst [vmem:[#allocation4 + $0xe8] sm:$0xff] %v380
    %482 = vst [vmem:[#allocation4 + $0xf0] sm:$0xff] %v413
    %483 = vst [vmem:[#allocation4 + $0xf8] sm:$0xff] %v446
    %484 = vst [vmem:[#allocation4 + $0x100] sm:$0xff] %v350
    %485 = vst [vmem:[#allocation4 + $0x108] sm:$0xff] %v383
    %486 = vst [vmem:[#allocation4 + $0x110] sm:$0xff] %v416
    %487 = vst [vmem:[#allocation4 + $0x118] sm:$0xff] %v449
    %488 = vst [vmem:[#allocation5] sm:$0xff] 0.0
    %489 = vst [vmem:[#allocation6] sm:$0xff] 0.0
    %v490 = vld [vmem:[#allocation12] sm:$0xff]
    %v491 = vld [vmem:[#allocation12 + $0x8] sm:$0xff]
    %v492 = vld [vmem:[#allocation12 + $0x10] sm:$0xff]
    %v493 = vld [vmem:[#allocation12 + $0x18] sm:$0xff]
    %v494 = vld [vmem:[#allocation12 + $0x20] sm:$0xff]
    %v495 = vld [vmem:[#allocation12 + $0x28] sm:$0xff]
    %v496 = vld [vmem:[#allocation12 + $0x30] sm:$0xff]
    %v497 = vld [vmem:[#allocation12 + $0x38] sm:$0xff]
    %v498 = vld [vmem:[#allocation12 + $0x40] sm:$0xff]
    %v499 = vld [vmem:[#allocation12 + $0x48] sm:$0xff]
    %v500 = vld [vmem:[#allocation12 + $0x50] sm:$0xff]
    %v501 = vld [vmem:[#allocation12 + $0x58] sm:$0xff]
    %v502 = vld [vmem:[#allocation12 + $0x60] sm:$0xff]
    %v503 = vld [vmem:[#allocation12 + $0x68] sm:$0xff]
    %v504 = vld [vmem:[#allocation12 + $0x70] sm:$0xff]
    %v505 = vld [vmem:[#allocation12 + $0x78] sm:$0xff]
    %v506 = vld [vmem:[#allocation12 + $0x80] sm:$0xff]
    %v507 = vld [vmem:[#allocation12 + $0x88] sm:$0xff]
    %v508 = vld [vmem:[#allocation12 + $0x90] sm:$0xff]
    %v509 = vld [vmem:[#allocation12 + $0x98] sm:$0xff]
    %v510 = vld [vmem:[#allocation12 + $0xa0] sm:$0xff]
    %v511 = vld [vmem:[#allocation12 + $0xa8] sm:$0xff]
    %v512 = vld [vmem:[#allocation12 + $0xb0] sm:$0xff]
    %v513 = vld [vmem:[#allocation12 + $0xb8] sm:$0xff]
    %v514 = vld [vmem:[#allocation12 + $0xc0] sm:$0xff]
    %v515 = vld [vmem:[#allocation12 + $0xc8] sm:$0xff]
    %v516 = vld [vmem:[#allocation12 + $0xd0] sm:$0xff]
    %v517 = vld [vmem:[#allocation12 + $0xd8] sm:$0xff]
    %v518 = vld [vmem:[#allocation12 + $0xe0] sm:$0xff]
    %v519 = vld [vmem:[#allocation12 + $0xe8] sm:$0xff]
    %v520 = vld [vmem:[#allocation12 + $0xf0] sm:$0xff]
    %v521 = vld [vmem:[#allocation12 + $0xf8] sm:$0xff]
    %v522 = vld [vmem:[#allocation5] sm:$0xff]
    %v523 = vpack.c.bf16 %v522, %v522
    %v524 = vld [vmem:[#allocation4] sm:$0xff]
    %v525 = vld [vmem:[#allocation4 + $0x8] sm:$0xff]
    %v526 = vld [vmem:[#allocation4 + $0x10] sm:$0xff]
    %v527 = vld [vmem:[#allocation4 + $0x18] sm:$0xff]
    %v560 = vunpack.c.l.b16 %v490
    %v561 = vunpack.c.h.b16 %v490
    %v562 = vunpack.c.l.b16 %v491
    %v563 = vunpack.c.h.b16 %v491
    %v564 = vunpack.c.l.b16 %v492
    %v565 = vunpack.c.h.b16 %v492
    %v566 = vunpack.c.l.b16 %v493
    %v567 = vunpack.c.h.b16 %v493
    %v568 = vunpack.c.l.b16 %v494
    %v569 = vunpack.c.h.b16 %v494
    %v570 = vunpack.c.l.b16 %v495
    %v571 = vunpack.c.h.b16 %v495
    %v572 = vunpack.c.l.b16 %v496
    %v573 = vunpack.c.h.b16 %v496
    %v574 = vunpack.c.l.b16 %v497
    %v575 = vunpack.c.h.b16 %v497
    %v576 = vunpack.c.l.b16 %v498
    %v577 = vunpack.c.h.b16 %v498
    %v578 = vunpack.c.l.b16 %v499
    %v579 = vunpack.c.h.b16 %v499
    %v580 = vunpack.c.l.b16 %v500
    %v581 = vunpack.c.h.b16 %v500
    %v582 = vunpack.c.l.b16 %v501
    %v583 = vunpack.c.h.b16 %v501
    %v584 = vunpack.c.l.b16 %v502
    %v585 = vunpack.c.h.b16 %v502
    %v586 = vunpack.c.l.b16 %v503
    %v587 = vunpack.c.h.b16 %v503
    %v588 = vunpack.c.l.b16 %v504
    %v589 = vunpack.c.h.b16 %v504
    %v590 = vunpack.c.l.b16 %v505
    %v591 = vunpack.c.h.b16 %v505
    %v592 = vunpack.c.l.b16 %v506
    %v593 = vunpack.c.h.b16 %v506
    %v594 = vunpack.c.l.b16 %v507
    %v595 = vunpack.c.h.b16 %v507
    %v596 = vunpack.c.l.b16 %v508
    %v597 = vunpack.c.h.b16 %v508
    %v598 = vunpack.c.l.b16 %v509
    %v599 = vunpack.c.h.b16 %v509
    %v600 = vunpack.c.l.b16 %v510
    %v601 = vunpack.c.h.b16 %v510
    %v602 = vunpack.c.l.b16 %v511
    %v603 = vunpack.c.h.b16 %v511
    %v604 = vunpack.c.l.b16 %v512
    %v605 = vunpack.c.h.b16 %v512
    %v606 = vunpack.c.l.b16 %v513
    %v607 = vunpack.c.h.b16 %v513
    %v608 = vunpack.c.l.b16 %v514
    %v609 = vunpack.c.h.b16 %v514
    %v610 = vunpack.c.l.b16 %v515
    %v611 = vunpack.c.h.b16 %v515
    %v612 = vunpack.c.l.b16 %v516
    %v613 = vunpack.c.h.b16 %v516
    %v614 = vunpack.c.l.b16 %v517
    %v615 = vunpack.c.h.b16 %v517
    %v616 = vunpack.c.l.b16 %v518
    %v617 = vunpack.c.h.b16 %v518
    %v618 = vunpack.c.l.b16 %v519
    %v619 = vunpack.c.h.b16 %v519
    %v620 = vunpack.c.l.b16 %v520
    %v621 = vunpack.c.h.b16 %v520
    %v622 = vunpack.c.l.b16 %v521
    %v623 = vunpack.c.h.b16 %v521
    %v624 = vpack.c.b16 %v564, %v560
    %v625 = vpack.c.b16 %v565, %v561
    %v626 = vpack.c.b16 %v566, %v562
    %v627 = vpack.c.b16 %v567, %v563
    %v628 = vpack.c.b16 %v572, %v568
    %v629 = vpack.c.b16 %v573, %v569
    %v630 = vpack.c.b16 %v574, %v570
    %v631 = vpack.c.b16 %v575, %v571
    %v632 = vpack.c.b16 %v580, %v576
    %v633 = vpack.c.b16 %v581, %v577
    %v634 = vpack.c.b16 %v582, %v578
    %v635 = vpack.c.b16 %v583, %v579
    %v636 = vpack.c.b16 %v588, %v584
    %v637 = vpack.c.b16 %v589, %v585
    %v638 = vpack.c.b16 %v590, %v586
    %v639 = vpack.c.b16 %v591, %v587
    %v640 = vpack.c.b16 %v596, %v592
    %v641 = vpack.c.b16 %v597, %v593
    %v642 = vpack.c.b16 %v598, %v594
    %v643 = vpack.c.b16 %v599, %v595
    %v644 = vpack.c.b16 %v604, %v600
    %v645 = vpack.c.b16 %v605, %v601
    %v646 = vpack.c.b16 %v606, %v602
    %v647 = vpack.c.b16 %v607, %v603
    %v648 = vpack.c.b16 %v612, %v608
    %v649 = vpack.c.b16 %v613, %v609
    %v650 = vpack.c.b16 %v614, %v610
    %v651 = vpack.c.b16 %v615, %v611
    %v652 = vpack.c.b16 %v620, %v616
    %v653 = vpack.c.b16 %v621, %v617
    %v654 = vpack.c.b16 %v622, %v618
    %v655 = vpack.c.b16 %v623, %v619
    %688 = vmatpush.bf16.msra.mxu0 %v652
    %689 = vmatpush.bf16.msra.mxu0 %v648
    %690 = vmatpush.bf16.msra.mxu0 %v644
    %691 = vmatpush.bf16.msra.mxu0 %v640
    %692 = vmatpush.bf16.msra.mxu0 %v636
    %693 = vmatpush.bf16.msra.mxu0 %v632
    %694 = vmatpush.bf16.msra.mxu0 %v628
    %695 = vmatpush.bf16.msra.mxu0 %v624
    %696 = vmatmul.bf16.gmra.mxu0 %v523
    %v697 = vpop.f32.mrf.mxu0
    %v698 = vadd.f32 %v524, %v697
    %v699 = vpop.f32.mrf.mxu0
    %700 = vdwg.mxu0
    %701 = vmatpush.bf16.msra.mxu0 %v653
    %702 = vmatpush.bf16.msra.mxu0 %v649
    %703 = vmatpush.bf16.msra.mxu0 %v645
    %704 = vmatpush.bf16.msra.mxu0 %v641
    %705 = vmatpush.bf16.msra.mxu0 %v637
    %706 = vmatpush.bf16.msra.mxu0 %v633
    %707 = vmatpush.bf16.msra.mxu0 %v629
    %708 = vmatpush.bf16.msra.mxu0 %v625
    %709 = vmatmul.bf16.gmra.mxu0 %v523
    %v710 = vpop.f32.mrf.mxu0
    %v711 = vadd.f32 %v525, %v710
    %v712 = vpop.f32.mrf.mxu0
    %713 = vdwg.mxu0
    %714 = vmatpush.bf16.msra.mxu0 %v654
    %715 = vmatpush.bf16.msra.mxu0 %v650
    %716 = vmatpush.bf16.msra.mxu0 %v646
    %717 = vmatpush.bf16.msra.mxu0 %v642
    %718 = vmatpush.bf16.msra.mxu0 %v638
    %719 = vmatpush.bf16.msra.mxu0 %v634
    %720 = vmatpush.bf16.msra.mxu0 %v630
    %721 = vmatpush.bf16.msra.mxu0 %v626
    %722 = vmatmul.bf16.gmra.mxu0 %v523
    %v723 = vpop.f32.mrf.mxu0
    %v724 = vadd.f32 %v526, %v723
    %v725 = vpop.f32.mrf.mxu0
    %726 = vdwg.mxu0
    %727 = vmatpush.bf16.msra.mxu0 %v655
    %728 = vmatpush.bf16.msra.mxu0 %v651
    %729 = vmatpush.bf16.msra.mxu0 %v647
    %730 = vmatpush.bf16.msra.mxu0 %v643
    %731 = vmatpush.bf16.msra.mxu0 %v639
    %732 = vmatpush.bf16.msra.mxu0 %v635
    %733 = vmatpush.bf16.msra.mxu0 %v631
    %734 = vmatpush.bf16.msra.mxu0 %v627
    %735 = vmatmul.bf16.gmra.mxu0 %v523
    %v736 = vpop.f32.mrf.mxu0
    %v737 = vadd.f32 %v527, %v736
    %v738 = vpop.f32.mrf.mxu0
    %739 = vdwg.mxu0
    %v740 = vxor.u32 %v698, 2147483648
    %v741 = vmul.f32 %v740, 1.442695
    %v742 = vpow.pop %v741
    %v743 = vadd.f32 %v742, 1.0
    %v744 = vrcp.pop %v743
    %v745 = vmul.f32 %v743, %v744
    %v746 = vsub.f32 1.0, %v745
    %v747 = vmul.f32 %v744, %v746
    %v748 = vadd.f32 %v744, %v747
    %vm749 = vweird.f32 %v743
    %vm750 = vweird.f32 %v744
    %vm751 = vmor %vm749, %vm750
    %v752 = vsel %vm751, %v744, %v748
    %v753 = vand.u32 2147483647, %v743
    %vm754 = vcmp.eq.f32.partialorder %v753, 8.507059e+37
    %v755 = vand.u32 %v743, 2147483648
    %v756 = vor.u32 1.1754944e-38, %v755
    %v757 = vsel %vm754, %v756, %v752
    %v758 = vmul.f32 1.0, %v757
    %v759 = vxor.u32 %v711, 2147483648
    %v760 = vmul.f32 %v759, 1.442695
    %v761 = vpow.pop %v760
    %v762 = vadd.f32 %v761, 1.0
    %v763 = vrcp.pop %v762
    %v764 = vmul.f32 %v762, %v763
    %v765 = vsub.f32 1.0, %v764
    %v766 = vmul.f32 %v763, %v765
    %v767 = vadd.f32 %v763, %v766
    %vm768 = vweird.f32 %v762
    %vm769 = vweird.f32 %v763
    %vm770 = vmor %vm768, %vm769
    %v771 = vsel %vm770, %v763, %v767
    %v772 = vand.u32 2147483647, %v762
    %vm773 = vcmp.eq.f32.partialorder %v772, 8.507059e+37
    %v774 = vand.u32 %v762, 2147483648
    %v775 = vor.u32 1.1754944e-38, %v774
    %v776 = vsel %vm773, %v775, %v771
    %v777 = vmul.f32 1.0, %v776
    %v778 = vtanh.pop %v724
    %v779 = vxor.u32 %v737, 2147483648
    %v780 = vmul.f32 %v779, 1.442695
    %v781 = vpow.pop %v780
    %v782 = vadd.f32 %v781, 1.0
    %v783 = vrcp.pop %v782
    %v784 = vmul.f32 %v782, %v783
    %v785 = vsub.f32 1.0, %v784
    %v786 = vmul.f32 %v783, %v785
    %v787 = vadd.f32 %v783, %v786
    %vm788 = vweird.f32 %v782
    %vm789 = vweird.f32 %v783
    %vm790 = vmor %vm788, %vm789
    %v791 = vsel %vm790, %v783, %v787
    %v792 = vand.u32 2147483647, %v782
    %vm793 = vcmp.eq.f32.partialorder %v792, 8.507059e+37
    %v794 = vand.u32 %v782, 2147483648
    %v795 = vor.u32 1.1754944e-38, %v794
    %v796 = vsel %vm793, %v795, %v791
    %v797 = vmul.f32 1.0, %v796
    %v798 = vld [vmem:[#allocation6] sm:$0xff]
    %v799 = vmul.f32 %v777, %v798
    %v800 = vmul.f32 %v758, %v778
    %v801 = vadd.f32 %v799, %v800
    %v802 = vtanh.pop %v801
    %v803 = vmul.f32 %v797, %v802
    %804 = vst [vmem:[#allocation6] sm:$0xff] %v801
    %805 = vst [vmem:[#allocation5] sm:$0xff] %v803
    %v806 = vpack.c.bf16 %v803, %v803
    %807 = vst [vmem:[#allocation2] sm:$0xf] %v806
    %v808 = vld [vmem:[#allocation5] sm:$0xff]
    %v809 = vpack.c.bf16 %v808, %v808
    %s810 = scalar_lea.vmem [#allocation4], 32
    %v811 = vld [vmem:[%s810] sm:$0xff]
    %v812 = vld [vmem:[%s810 + $0x8] sm:$0xff]
    %v813 = vld [vmem:[%s810 + $0x10] sm:$0xff]
    %v814 = vld [vmem:[%s810 + $0x18] sm:$0xff]
    %815 = vmatpush.bf16.msra.mxu0 %v652
    %816 = vmatpush.bf16.msra.mxu0 %v648
    %817 = vmatpush.bf16.msra.mxu0 %v644
    %818 = vmatpush.bf16.msra.mxu0 %v640
    %819 = vmatpush.bf16.msra.mxu0 %v636
    %820 = vmatpush.bf16.msra.mxu0 %v632
    %821 = vmatpush.bf16.msra.mxu0 %v628
    %822 = vmatpush.bf16.msra.mxu0 %v624
    %823 = vmatmul.bf16.gmra.mxu0 %v809
    %v824 = vpop.f32.mrf.mxu0
    %v825 = vadd.f32 %v811, %v824
    %v826 = vpop.f32.mrf.mxu0
    %827 = vdwg.mxu0
    %828 = vmatpush.bf16.msra.mxu0 %v653
    %829 = vmatpush.bf16.msra.mxu0 %v649
    %830 = vmatpush.bf16.msra.mxu0 %v645
    %831 = vmatpush.bf16.msra.mxu0 %v641
    %832 = vmatpush.bf16.msra.mxu0 %v637
    %833 = vmatpush.bf16.msra.mxu0 %v633
    %834 = vmatpush.bf16.msra.mxu0 %v629
    %835 = vmatpush.bf16.msra.mxu0 %v625
    %836 = vmatmul.bf16.gmra.mxu0 %v809
    %v837 = vpop.f32.mrf.mxu0
    %v838 = vadd.f32 %v812, %v837
    %v839 = vpop.f32.mrf.mxu0
    %840 = vdwg.mxu0
    %841 = vmatpush.bf16.msra.mxu0 %v654
    %842 = vmatpush.bf16.msra.mxu0 %v650
    %843 = vmatpush.bf16.msra.mxu0 %v646
    %844 = vmatpush.bf16.msra.mxu0 %v642
    %845 = vmatpush.bf16.msra.mxu0 %v638
    %846 = vmatpush.bf16.msra.mxu0 %v634
    %847 = vmatpush.bf16.msra.mxu0 %v630
    %848 = vmatpush.bf16.msra.mxu0 %v626
    %849 = vmatmul.bf16.gmra.mxu0 %v809
    %v850 = vpop.f32.mrf.mxu0
    %v851 = vadd.f32 %v813, %v850
    %v852 = vpop.f32.mrf.mxu0
    %853 = vdwg.mxu0
    %854 = vmatpush.bf16.msra.mxu0 %v655
    %855 = vmatpush.bf16.msra.mxu0 %v651
    %856 = vmatpush.bf16.msra.mxu0 %v647
    %857 = vmatpush.bf16.msra.mxu0 %v643
    %858 = vmatpush.bf16.msra.mxu0 %v639
    %859 = vmatpush.bf16.msra.mxu0 %v635
    %860 = vmatpush.bf16.msra.mxu0 %v631
    %861 = vmatpush.bf16.msra.mxu0 %v627
    %862 = vmatmul.bf16.gmra.mxu0 %v809
    %v863 = vpop.f32.mrf.mxu0
    %v864 = vadd.f32 %v814, %v863
    %v865 = vpop.f32.mrf.mxu0
    %866 = vdwg.mxu0
    %v867 = vxor.u32 %v825, 2147483648
    %v868 = vmul.f32 %v867, 1.442695
    %v869 = vpow.pop %v868
    %v870 = vadd.f32 %v869, 1.0
    %v871 = vrcp.pop %v870
    %v872 = vmul.f32 %v870, %v871
    %v873 = vsub.f32 1.0, %v872
    %v874 = vmul.f32 %v871, %v873
    %v875 = vadd.f32 %v871, %v874
    %vm876 = vweird.f32 %v870
    %vm877 = vweird.f32 %v871
    %vm878 = vmor %vm876, %vm877
    %v879 = vsel %vm878, %v871, %v875
    %v880 = vand.u32 2147483647, %v870
    %vm881 = vcmp.eq.f32.partialorder %v880, 8.507059e+37
    %v882 = vand.u32 %v870, 2147483648
    %v883 = vor.u32 1.1754944e-38, %v882
    %v884 = vsel %vm881, %v883, %v879
    %v885 = vmul.f32 1.0, %v884
    %v886 = vxor.u32 %v838, 2147483648
    %v887 = vmul.f32 %v886, 1.442695
    %v888 = vpow.pop %v887
    %v889 = vadd.f32 %v888, 1.0
    %v890 = vrcp.pop %v889
    %v891 = vmul.f32 %v889, %v890
    %v892 = vsub.f32 1.0, %v891
    %v893 = vmul.f32 %v890, %v892
    %v894 = vadd.f32 %v890, %v893
    %vm895 = vweird.f32 %v889
    %vm896 = vweird.f32 %v890
    %vm897 = vmor %vm895, %vm896
    %v898 = vsel %vm897, %v890, %v894
    %v899 = vand.u32 2147483647, %v889
    %vm900 = vcmp.eq.f32.partialorder %v899, 8.507059e+37
    %v901 = vand.u32 %v889, 2147483648
    %v902 = vor.u32 1.1754944e-38, %v901
    %v903 = vsel %vm900, %v902, %v898
    %v904 = vmul.f32 1.0, %v903
    %v905 = vtanh.pop %v851
    %v906 = vxor.u32 %v864, 2147483648
    %v907 = vmul.f32 %v906, 1.442695
    %v908 = vpow.pop %v907
    %v909 = vadd.f32 %v908, 1.0
    %v910 = vrcp.pop %v909
    %v911 = vmul.f32 %v909, %v910
    %v912 = vsub.f32 1.0, %v911
    %v913 = vmul.f32 %v910, %v912
    %v914 = vadd.f32 %v910, %v913
    %vm915 = vweird.f32 %v909
    %vm916 = vweird.f32 %v910
    %vm917 = vmor %vm915, %vm916
    %v918 = vsel %vm917, %v910, %v914
    %v919 = vand.u32 2147483647, %v909
    %vm920 = vcmp.eq.f32.partialorder %v919, 8.507059e+37
    %v921 = vand.u32 %v909, 2147483648
    %v922 = vor.u32 1.1754944e-38, %v921
    %v923 = vsel %vm920, %v922, %v918
    %v924 = vmul.f32 1.0, %v923
    %v925 = vld [vmem:[#allocation6] sm:$0xff]
    %v926 = vmul.f32 %v904, %v925
    %v927 = vmul.f32 %v885, %v905
    %v928 = vadd.f32 %v926, %v927
    %v929 = vtanh.pop %v928
    %v930 = vmul.f32 %v924, %v929
    %931 = vst [vmem:[#allocation6] sm:$0xff] %v928
    %932 = vst [vmem:[#allocation5] sm:$0xff] %v930
    %v933 = vpack.c.bf16 %v930, %v930
    %s934 = scalar_lea.vmem [#allocation2], 4
    %935 = vst [vmem:[%s934] sm:$0xf] %v933
    %v936 = vld [vmem:[#allocation5] sm:$0xff]
    %v937 = vpack.c.bf16 %v936, %v936
    %s938 = scalar_lea.vmem [#allocation4], 64
    %v939 = vld [vmem:[%s938] sm:$0xff]
    %v940 = vld [vmem:[%s938 + $0x8] sm:$0xff]
    %v941 = vld [vmem:[%s938 + $0x10] sm:$0xff]
    %v942 = vld [vmem:[%s938 + $0x18] sm:$0xff]
    %943 = vmatpush.bf16.msra.mxu0 %v652
    %944 = vmatpush.bf16.msra.mxu0 %v648
    %945 = vmatpush.bf16.msra.mxu0 %v644
    %946 = vmatpush.bf16.msra.mxu0 %v640
    %947 = vmatpush.bf16.msra.mxu0 %v636
    %948 = vmatpush.bf16.msra.mxu0 %v632
    %949 = vmatpush.bf16.msra.mxu0 %v628
    %950 = vmatpush.bf16.msra.mxu0 %v624
    %951 = vmatmul.bf16.gmra.mxu0 %v937
    %v952 = vpop.f32.mrf.mxu0
    %v953 = vadd.f32 %v939, %v952
    %v954 = vpop.f32.mrf.mxu0
    %955 = vdwg.mxu0
    %956 = vmatpush.bf16.msra.mxu0 %v653
    %957 = vmatpush.bf16.msra.mxu0 %v649
    %958 = vmatpush.bf16.msra.mxu0 %v645
    %959 = vmatpush.bf16.msra.mxu0 %v641
    %960 = vmatpush.bf16.msra.mxu0 %v637
    %961 = vmatpush.bf16.msra.mxu0 %v633
    %962 = vmatpush.bf16.msra.mxu0 %v629
    %963 = vmatpush.bf16.msra.mxu0 %v625
    %964 = vmatmul.bf16.gmra.mxu0 %v937
    %v965 = vpop.f32.mrf.mxu0
    %v966 = vadd.f32 %v940, %v965
    %v967 = vpop.f32.mrf.mxu0
    %968 = vdwg.mxu0
    %969 = vmatpush.bf16.msra.mxu0 %v654
    %970 = vmatpush.bf16.msra.mxu0 %v650
    %971 = vmatpush.bf16.msra.mxu0 %v646
    %972 = vmatpush.bf16.msra.mxu0 %v642
    %973 = vmatpush.bf16.msra.mxu0 %v638
    %974 = vmatpush.bf16.msra.mxu0 %v634
    %975 = vmatpush.bf16.msra.mxu0 %v630
    %976 = vmatpush.bf16.msra.mxu0 %v626
    %977 = vmatmul.bf16.gmra.mxu0 %v937
    %v978 = vpop.f32.mrf.mxu0
    %v979 = vadd.f32 %v941, %v978
    %v980 = vpop.f32.mrf.mxu0
    %981 = vdwg.mxu0
    %982 = vmatpush.bf16.msra.mxu0 %v655
    %983 = vmatpush.bf16.msra.mxu0 %v651
    %984 = vmatpush.bf16.msra.mxu0 %v647
    %985 = vmatpush.bf16.msra.mxu0 %v643
    %986 = vmatpush.bf16.msra.mxu0 %v639
    %987 = vmatpush.bf16.msra.mxu0 %v635
    %988 = vmatpush.bf16.msra.mxu0 %v631
    %989 = vmatpush.bf16.msra.mxu0 %v627
    %990 = vmatmul.bf16.gmra.mxu0 %v937
    %v991 = vpop.f32.mrf.mxu0
    %v992 = vadd.f32 %v942, %v991
    %v993 = vpop.f32.mrf.mxu0
    %994 = vdwg.mxu0
    %v995 = vxor.u32 %v953, 2147483648
    %v996 = vmul.f32 %v995, 1.442695
    %v997 = vpow.pop %v996
    %v998 = vadd.f32 %v997, 1.0
    %v999 = vrcp.pop %v998
    %v1000 = vmul.f32 %v998, %v999
    %v1001 = vsub.f32 1.0, %v1000
    %v1002 = vmul.f32 %v999, %v1001
    %v1003 = vadd.f32 %v999, %v1002
    %vm1004 = vweird.f32 %v998
    %vm1005 = vweird.f32 %v999
    %vm1006 = vmor %vm1004, %vm1005
    %v1007 = vsel %vm1006, %v999, %v1003
    %v1008 = vand.u32 2147483647, %v998
    %vm1009 = vcmp.eq.f32.partialorder %v1008, 8.507059e+37
    %v1010 = vand.u32 %v998, 2147483648
    %v1011 = vor.u32 1.1754944e-38, %v1010
    %v1012 = vsel %vm1009, %v1011, %v1007
    %v1013 = vmul.f32 1.0, %v1012
    %v1014 = vxor.u32 %v966, 2147483648
    %v1015 = vmul.f32 %v1014, 1.442695
    %v1016 = vpow.pop %v1015
    %v1017 = vadd.f32 %v1016, 1.0
    %v1018 = vrcp.pop %v1017
    %v1019 = vmul.f32 %v1017, %v1018
    %v1020 = vsub.f32 1.0, %v1019
    %v1021 = vmul.f32 %v1018, %v1020
    %v1022 = vadd.f32 %v1018, %v1021
    %vm1023 = vweird.f32 %v1017
    %vm1024 = vweird.f32 %v1018
    %vm1025 = vmor %vm1023, %vm1024
    %v1026 = vsel %vm1025, %v1018, %v1022
    %v1027 = vand.u32 2147483647, %v1017
    %vm1028 = vcmp.eq.f32.partialorder %v1027, 8.507059e+37
    %v1029 = vand.u32 %v1017, 2147483648
    %v1030 = vor.u32 1.1754944e-38, %v1029
    %v1031 = vsel %vm1028, %v1030, %v1026
    %v1032 = vmul.f32 1.0, %v1031
    %v1033 = vtanh.pop %v979
    %v1034 = vxor.u32 %v992, 2147483648
    %v1035 = vmul.f32 %v1034, 1.442695
    %v1036 = vpow.pop %v1035
    %v1037 = vadd.f32 %v1036, 1.0
    %v1038 = vrcp.pop %v1037
    %v1039 = vmul.f32 %v1037, %v1038
    %v1040 = vsub.f32 1.0, %v1039
    %v1041 = vmul.f32 %v1038, %v1040
    %v1042 = vadd.f32 %v1038, %v1041
    %vm1043 = vweird.f32 %v1037
    %vm1044 = vweird.f32 %v1038
    %vm1045 = vmor %vm1043, %vm1044
    %v1046 = vsel %vm1045, %v1038, %v1042
    %v1047 = vand.u32 2147483647, %v1037
    %vm1048 = vcmp.eq.f32.partialorder %v1047, 8.507059e+37
    %v1049 = vand.u32 %v1037, 2147483648
    %v1050 = vor.u32 1.1754944e-38, %v1049
    %v1051 = vsel %vm1048, %v1050, %v1046
    %v1052 = vmul.f32 1.0, %v1051
    %v1053 = vld [vmem:[#allocation6] sm:$0xff]
    %v1054 = vmul.f32 %v1032, %v1053
    %v1055 = vmul.f32 %v1013, %v1033
    %v1056 = vadd.f32 %v1054, %v1055
    %v1057 = vtanh.pop %v1056
    %v1058 = vmul.f32 %v1052, %v1057
    %1059 = vst [vmem:[#allocation6] sm:$0xff] %v1056
    %1060 = vst [vmem:[#allocation5] sm:$0xff] %v1058
    %v1061 = vpack.c.bf16 %v1058, %v1058
    %s1062 = scalar_lea.vmem [#allocation2], 8
    %1063 = vst [vmem:[%s1062] sm:$0xf] %v1061
    %v1064 = vld [vmem:[#allocation5] sm:$0xff]
    %v1065 = vpack.c.bf16 %v1064, %v1064
    %s1066 = scalar_lea.vmem [#allocation4], 96
    %v1067 = vld [vmem:[%s1066] sm:$0xff]
    %v1068 = vld [vmem:[%s1066 + $0x8] sm:$0xff]
    %v1069 = vld [vmem:[%s1066 + $0x10] sm:$0xff]
    %v1070 = vld [vmem:[%s1066 + $0x18] sm:$0xff]
    %1071 = vmatpush.bf16.msra.mxu0 %v652
    %1072 = vmatpush.bf16.msra.mxu0 %v648
    %1073 = vmatpush.bf16.msra.mxu0 %v644
    %1074 = vmatpush.bf16.msra.mxu0 %v640
    %1075 = vmatpush.bf16.msra.mxu0 %v636
    %1076 = vmatpush.bf16.msra.mxu0 %v632
    %1077 = vmatpush.bf16.msra.mxu0 %v628
    %1078 = vmatpush.bf16.msra.mxu0 %v624
    %1079 = vmatmul.bf16.gmra.mxu0 %v1065
    %v1080 = vpop.f32.mrf.mxu0
    %v1081 = vadd.f32 %v1067, %v1080
    %v1082 = vpop.f32.mrf.mxu0
    %1083 = vdwg.mxu0
    %1084 = vmatpush.bf16.msra.mxu0 %v653
    %1085 = vmatpush.bf16.msra.mxu0 %v649
    %1086 = vmatpush.bf16.msra.mxu0 %v645
    %1087 = vmatpush.bf16.msra.mxu0 %v641
    %1088 = vmatpush.bf16.msra.mxu0 %v637
    %1089 = vmatpush.bf16.msra.mxu0 %v633
    %1090 = vmatpush.bf16.msra.mxu0 %v629
    %1091 = vmatpush.bf16.msra.mxu0 %v625
    %1092 = vmatmul.bf16.gmra.mxu0 %v1065
    %v1093 = vpop.f32.mrf.mxu0
    %v1094 = vadd.f32 %v1068, %v1093
    %v1095 = vpop.f32.mrf.mxu0
    %1096 = vdwg.mxu0
    %1097 = vmatpush.bf16.msra.mxu0 %v654
    %1098 = vmatpush.bf16.msra.mxu0 %v650
    %1099 = vmatpush.bf16.msra.mxu0 %v646
    %1100 = vmatpush.bf16.msra.mxu0 %v642
    %1101 = vmatpush.bf16.msra.mxu0 %v638
    %1102 = vmatpush.bf16.msra.mxu0 %v634
    %1103 = vmatpush.bf16.msra.mxu0 %v630
    %1104 = vmatpush.bf16.msra.mxu0 %v626
    %1105 = vmatmul.bf16.gmra.mxu0 %v1065
    %v1106 = vpop.f32.mrf.mxu0
    %v1107 = vadd.f32 %v1069, %v1106
    %v1108 = vpop.f32.mrf.mxu0
    %1109 = vdwg.mxu0
    %1110 = vmatpush.bf16.msra.mxu0 %v655
    %1111 = vmatpush.bf16.msra.mxu0 %v651
    %1112 = vmatpush.bf16.msra.mxu0 %v647
    %1113 = vmatpush.bf16.msra.mxu0 %v643
    %1114 = vmatpush.bf16.msra.mxu0 %v639
    %1115 = vmatpush.bf16.msra.mxu0 %v635
    %1116 = vmatpush.bf16.msra.mxu0 %v631
    %1117 = vmatpush.bf16.msra.mxu0 %v627
    %1118 = vmatmul.bf16.gmra.mxu0 %v1065
    %v1119 = vpop.f32.mrf.mxu0
    %v1120 = vadd.f32 %v1070, %v1119
    %v1121 = vpop.f32.mrf.mxu0
    %1122 = vdwg.mxu0
    %v1123 = vxor.u32 %v1081, 2147483648
    %v1124 = vmul.f32 %v1123, 1.442695
    %v1125 = vpow.pop %v1124
    %v1126 = vadd.f32 %v1125, 1.0
    %v1127 = vrcp.pop %v1126
    %v1128 = vmul.f32 %v1126, %v1127
    %v1129 = vsub.f32 1.0, %v1128
    %v1130 = vmul.f32 %v1127, %v1129
    %v1131 = vadd.f32 %v1127, %v1130
    %vm1132 = vweird.f32 %v1126
    %vm1133 = vweird.f32 %v1127
    %vm1134 = vmor %vm1132, %vm1133
    %v1135 = vsel %vm1134, %v1127, %v1131
    %v1136 = vand.u32 2147483647, %v1126
    %vm1137 = vcmp.eq.f32.partialorder %v1136, 8.507059e+37
    %v1138 = vand.u32 %v1126, 2147483648
    %v1139 = vor.u32 1.1754944e-38, %v1138
    %v1140 = vsel %vm1137, %v1139, %v1135
    %v1141 = vmul.f32 1.0, %v1140
    %v1142 = vxor.u32 %v1094, 2147483648
    %v1143 = vmul.f32 %v1142, 1.442695
    %v1144 = vpow.pop %v1143
    %v1145 = vadd.f32 %v1144, 1.0
    %v1146 = vrcp.pop %v1145
    %v1147 = vmul.f32 %v1145, %v1146
    %v1148 = vsub.f32 1.0, %v1147
    %v1149 = vmul.f32 %v1146, %v1148
    %v1150 = vadd.f32 %v1146, %v1149
    %vm1151 = vweird.f32 %v1145
    %vm1152 = vweird.f32 %v1146
    %vm1153 = vmor %vm1151, %vm1152
    %v1154 = vsel %vm1153, %v1146, %v1150
    %v1155 = vand.u32 2147483647, %v1145
    %vm1156 = vcmp.eq.f32.partialorder %v1155, 8.507059e+37
    %v1157 = vand.u32 %v1145, 2147483648
    %v1158 = vor.u32 1.1754944e-38, %v1157
    %v1159 = vsel %vm1156, %v1158, %v1154
    %v1160 = vmul.f32 1.0, %v1159
    %v1161 = vtanh.pop %v1107
    %v1162 = vxor.u32 %v1120, 2147483648
    %v1163 = vmul.f32 %v1162, 1.442695
    %v1164 = vpow.pop %v1163
    %v1165 = vadd.f32 %v1164, 1.0
    %v1166 = vrcp.pop %v1165
    %v1167 = vmul.f32 %v1165, %v1166
    %v1168 = vsub.f32 1.0, %v1167
    %v1169 = vmul.f32 %v1166, %v1168
    %v1170 = vadd.f32 %v1166, %v1169
    %vm1171 = vweird.f32 %v1165
    %vm1172 = vweird.f32 %v1166
    %vm1173 = vmor %vm1171, %vm1172
    %v1174 = vsel %vm1173, %v1166, %v1170
    %v1175 = vand.u32 2147483647, %v1165
    %vm1176 = vcmp.eq.f32.partialorder %v1175, 8.507059e+37
    %v1177 = vand.u32 %v1165, 2147483648
    %v1178 = vor.u32 1.1754944e-38, %v1177
    %v1179 = vsel %vm1176, %v1178, %v1174
    %v1180 = vmul.f32 1.0, %v1179
    %v1181 = vld [vmem:[#allocation6] sm:$0xff]
    %v1182 = vmul.f32 %v1160, %v1181
    %v1183 = vmul.f32 %v1141, %v1161
    %v1184 = vadd.f32 %v1182, %v1183
    %v1185 = vtanh.pop %v1184
    %v1186 = vmul.f32 %v1180, %v1185
    %1187 = vst [vmem:[#allocation6] sm:$0xff] %v1184
    %1188 = vst [vmem:[#allocation5] sm:$0xff] %v1186
    %v1189 = vpack.c.bf16 %v1186, %v1186
    %s1190 = scalar_lea.vmem [#allocation2], 12
    %1191 = vst [vmem:[%s1190] sm:$0xf] %v1189
    %v1192 = vld [vmem:[#allocation5] sm:$0xff]
    %v1193 = vpack.c.bf16 %v1192, %v1192
    %s1194 = scalar_lea.vmem [#allocation4], 128
    %v1195 = vld [vmem:[%s1194] sm:$0xff]
    %v1196 = vld [vmem:[%s1194 + $0x8] sm:$0xff]
    %v1197 = vld [vmem:[%s1194 + $0x10] sm:$0xff]
    %v1198 = vld [vmem:[%s1194 + $0x18] sm:$0xff]
    %1199 = vmatpush.bf16.msra.mxu0 %v652
    %1200 = vmatpush.bf16.msra.mxu0 %v648
    %1201 = vmatpush.bf16.msra.mxu0 %v644
    %1202 = vmatpush.bf16.msra.mxu0 %v640
    %1203 = vmatpush.bf16.msra.mxu0 %v636
    %1204 = vmatpush.bf16.msra.mxu0 %v632
    %1205 = vmatpush.bf16.msra.mxu0 %v628
    %1206 = vmatpush.bf16.msra.mxu0 %v624
    %1207 = vmatmul.bf16.gmra.mxu0 %v1193
    %v1208 = vpop.f32.mrf.mxu0
    %v1209 = vadd.f32 %v1195, %v1208
    %v1210 = vpop.f32.mrf.mxu0
    %1211 = vdwg.mxu0
    %1212 = vmatpush.bf16.msra.mxu0 %v653
    %1213 = vmatpush.bf16.msra.mxu0 %v649
    %1214 = vmatpush.bf16.msra.mxu0 %v645
    %1215 = vmatpush.bf16.msra.mxu0 %v641
    %1216 = vmatpush.bf16.msra.mxu0 %v637
    %1217 = vmatpush.bf16.msra.mxu0 %v633
    %1218 = vmatpush.bf16.msra.mxu0 %v629
    %1219 = vmatpush.bf16.msra.mxu0 %v625
    %1220 = vmatmul.bf16.gmra.mxu0 %v1193
    %v1221 = vpop.f32.mrf.mxu0
    %v1222 = vadd.f32 %v1196, %v1221
    %v1223 = vpop.f32.mrf.mxu0
    %1224 = vdwg.mxu0
    %1225 = vmatpush.bf16.msra.mxu0 %v654
    %1226 = vmatpush.bf16.msra.mxu0 %v650
    %1227 = vmatpush.bf16.msra.mxu0 %v646
    %1228 = vmatpush.bf16.msra.mxu0 %v642
    %1229 = vmatpush.bf16.msra.mxu0 %v638
    %1230 = vmatpush.bf16.msra.mxu0 %v634
    %1231 = vmatpush.bf16.msra.mxu0 %v630
    %1232 = vmatpush.bf16.msra.mxu0 %v626
    %1233 = vmatmul.bf16.gmra.mxu0 %v1193
    %v1234 = vpop.f32.mrf.mxu0
    %v1235 = vadd.f32 %v1197, %v1234
    %v1236 = vpop.f32.mrf.mxu0
    %1237 = vdwg.mxu0
    %1238 = vmatpush.bf16.msra.mxu0 %v655
    %1239 = vmatpush.bf16.msra.mxu0 %v651
    %1240 = vmatpush.bf16.msra.mxu0 %v647
    %1241 = vmatpush.bf16.msra.mxu0 %v643
    %1242 = vmatpush.bf16.msra.mxu0 %v639
    %1243 = vmatpush.bf16.msra.mxu0 %v635
    %1244 = vmatpush.bf16.msra.mxu0 %v631
    %1245 = vmatpush.bf16.msra.mxu0 %v627
    %1246 = vmatmul.bf16.gmra.mxu0 %v1193
    %v1247 = vpop.f32.mrf.mxu0
    %v1248 = vadd.f32 %v1198, %v1247
    %v1249 = vpop.f32.mrf.mxu0
    %1250 = vdwg.mxu0
    %v1251 = vxor.u32 %v1209, 2147483648
    %v1252 = vmul.f32 %v1251, 1.442695
    %v1253 = vpow.pop %v1252
    %v1254 = vadd.f32 %v1253, 1.0
    %v1255 = vrcp.pop %v1254
    %v1256 = vmul.f32 %v1254, %v1255
    %v1257 = vsub.f32 1.0, %v1256
    %v1258 = vmul.f32 %v1255, %v1257
    %v1259 = vadd.f32 %v1255, %v1258
    %vm1260 = vweird.f32 %v1254
    %vm1261 = vweird.f32 %v1255
    %vm1262 = vmor %vm1260, %vm1261
    %v1263 = vsel %vm1262, %v1255, %v1259
    %v1264 = vand.u32 2147483647, %v1254
    %vm1265 = vcmp.eq.f32.partialorder %v1264, 8.507059e+37
    %v1266 = vand.u32 %v1254, 2147483648
    %v1267 = vor.u32 1.1754944e-38, %v1266
    %v1268 = vsel %vm1265, %v1267, %v1263
    %v1269 = vmul.f32 1.0, %v1268
    %v1270 = vxor.u32 %v1222, 2147483648
    %v1271 = vmul.f32 %v1270, 1.442695
    %v1272 = vpow.pop %v1271
    %v1273 = vadd.f32 %v1272, 1.0
    %v1274 = vrcp.pop %v1273
    %v1275 = vmul.f32 %v1273, %v1274
    %v1276 = vsub.f32 1.0, %v1275
    %v1277 = vmul.f32 %v1274, %v1276
    %v1278 = vadd.f32 %v1274, %v1277
    %vm1279 = vweird.f32 %v1273
    %vm1280 = vweird.f32 %v1274
    %vm1281 = vmor %vm1279, %vm1280
    %v1282 = vsel %vm1281, %v1274, %v1278
    %v1283 = vand.u32 2147483647, %v1273
    %vm1284 = vcmp.eq.f32.partialorder %v1283, 8.507059e+37
    %v1285 = vand.u32 %v1273, 2147483648
    %v1286 = vor.u32 1.1754944e-38, %v1285
    %v1287 = vsel %vm1284, %v1286, %v1282
    %v1288 = vmul.f32 1.0, %v1287
    %v1289 = vtanh.pop %v1235
    %v1290 = vxor.u32 %v1248, 2147483648
    %v1291 = vmul.f32 %v1290, 1.442695
    %v1292 = vpow.pop %v1291
    %v1293 = vadd.f32 %v1292, 1.0
    %v1294 = vrcp.pop %v1293
    %v1295 = vmul.f32 %v1293, %v1294
    %v1296 = vsub.f32 1.0, %v1295
    %v1297 = vmul.f32 %v1294, %v1296
    %v1298 = vadd.f32 %v1294, %v1297
    %vm1299 = vweird.f32 %v1293
    %vm1300 = vweird.f32 %v1294
    %vm1301 = vmor %vm1299, %vm1300
    %v1302 = vsel %vm1301, %v1294, %v1298
    %v1303 = vand.u32 2147483647, %v1293
    %vm1304 = vcmp.eq.f32.partialorder %v1303, 8.507059e+37
    %v1305 = vand.u32 %v1293, 2147483648
    %v1306 = vor.u32 1.1754944e-38, %v1305
    %v1307 = vsel %vm1304, %v1306, %v1302
    %v1308 = vmul.f32 1.0, %v1307
    %v1309 = vld [vmem:[#allocation6] sm:$0xff]
    %v1310 = vmul.f32 %v1288, %v1309
    %v1311 = vmul.f32 %v1269, %v1289
    %v1312 = vadd.f32 %v1310, %v1311
    %v1313 = vtanh.pop %v1312
    %v1314 = vmul.f32 %v1308, %v1313
    %1315 = vst [vmem:[#allocation6] sm:$0xff] %v1312
    %1316 = vst [vmem:[#allocation5] sm:$0xff] %v1314
    %v1317 = vpack.c.bf16 %v1314, %v1314
    %s1318 = scalar_lea.vmem [#allocation2], 16
    %1319 = vst [vmem:[%s1318] sm:$0xf] %v1317
    %v1320 = vld [vmem:[#allocation5] sm:$0xff]
    %v1321 = vpack.c.bf16 %v1320, %v1320
    %s1322 = scalar_lea.vmem [#allocation4], 160
    %v1323 = vld [vmem:[%s1322] sm:$0xff]
    %v1324 = vld [vmem:[%s1322 + $0x8] sm:$0xff]
    %v1325 = vld [vmem:[%s1322 + $0x10] sm:$0xff]
    %v1326 = vld [vmem:[%s1322 + $0x18] sm:$0xff]
    %1327 = vmatpush.bf16.msra.mxu0 %v652
    %1328 = vmatpush.bf16.msra.mxu0 %v648
    %1329 = vmatpush.bf16.msra.mxu0 %v644
    %1330 = vmatpush.bf16.msra.mxu0 %v640
    %1331 = vmatpush.bf16.msra.mxu0 %v636
    %1332 = vmatpush.bf16.msra.mxu0 %v632
    %1333 = vmatpush.bf16.msra.mxu0 %v628
    %1334 = vmatpush.bf16.msra.mxu0 %v624
    %1335 = vmatmul.bf16.gmra.mxu0 %v1321
    %v1336 = vpop.f32.mrf.mxu0
    %v1337 = vadd.f32 %v1323, %v1336
    %v1338 = vpop.f32.mrf.mxu0
    %1339 = vdwg.mxu0
    %1340 = vmatpush.bf16.msra.mxu0 %v653
    %1341 = vmatpush.bf16.msra.mxu0 %v649
    %1342 = vmatpush.bf16.msra.mxu0 %v645
    %1343 = vmatpush.bf16.msra.mxu0 %v641
    %1344 = vmatpush.bf16.msra.mxu0 %v637
    %1345 = vmatpush.bf16.msra.mxu0 %v633
    %1346 = vmatpush.bf16.msra.mxu0 %v629
    %1347 = vmatpush.bf16.msra.mxu0 %v625
    %1348 = vmatmul.bf16.gmra.mxu0 %v1321
    %v1349 = vpop.f32.mrf.mxu0
    %v1350 = vadd.f32 %v1324, %v1349
    %v1351 = vpop.f32.mrf.mxu0
    %1352 = vdwg.mxu0
    %1353 = vmatpush.bf16.msra.mxu0 %v654
    %1354 = vmatpush.bf16.msra.mxu0 %v650
    %1355 = vmatpush.bf16.msra.mxu0 %v646
    %1356 = vmatpush.bf16.msra.mxu0 %v642
    %1357 = vmatpush.bf16.msra.mxu0 %v638
    %1358 = vmatpush.bf16.msra.mxu0 %v634
    %1359 = vmatpush.bf16.msra.mxu0 %v630
    %1360 = vmatpush.bf16.msra.mxu0 %v626
    %1361 = vmatmul.bf16.gmra.mxu0 %v1321
    %v1362 = vpop.f32.mrf.mxu0
    %v1363 = vadd.f32 %v1325, %v1362
    %v1364 = vpop.f32.mrf.mxu0
    %1365 = vdwg.mxu0
    %1366 = vmatpush.bf16.msra.mxu0 %v655
    %1367 = vmatpush.bf16.msra.mxu0 %v651
    %1368 = vmatpush.bf16.msra.mxu0 %v647
    %1369 = vmatpush.bf16.msra.mxu0 %v643
    %1370 = vmatpush.bf16.msra.mxu0 %v639
    %1371 = vmatpush.bf16.msra.mxu0 %v635
    %1372 = vmatpush.bf16.msra.mxu0 %v631
    %1373 = vmatpush.bf16.msra.mxu0 %v627
    %1374 = vmatmul.bf16.gmra.mxu0 %v1321
    %v1375 = vpop.f32.mrf.mxu0
    %v1376 = vadd.f32 %v1326, %v1375
    %v1377 = vpop.f32.mrf.mxu0
    %1378 = vdwg.mxu0
    %v1379 = vxor.u32 %v1337, 2147483648
    %v1380 = vmul.f32 %v1379, 1.442695
    %v1381 = vpow.pop %v1380
    %v1382 = vadd.f32 %v1381, 1.0
    %v1383 = vrcp.pop %v1382
    %v1384 = vmul.f32 %v1382, %v1383
    %v1385 = vsub.f32 1.0, %v1384
    %v1386 = vmul.f32 %v1383, %v1385
    %v1387 = vadd.f32 %v1383, %v1386
    %vm1388 = vweird.f32 %v1382
    %vm1389 = vweird.f32 %v1383
    %vm1390 = vmor %vm1388, %vm1389
    %v1391 = vsel %vm1390, %v1383, %v1387
    %v1392 = vand.u32 2147483647, %v1382
    %vm1393 = vcmp.eq.f32.partialorder %v1392, 8.507059e+37
    %v1394 = vand.u32 %v1382, 2147483648
    %v1395 = vor.u32 1.1754944e-38, %v1394
    %v1396 = vsel %vm1393, %v1395, %v1391
    %v1397 = vmul.f32 1.0, %v1396
    %v1398 = vxor.u32 %v1350, 2147483648
    %v1399 = vmul.f32 %v1398, 1.442695
    %v1400 = vpow.pop %v1399
    %v1401 = vadd.f32 %v1400, 1.0
    %v1402 = vrcp.pop %v1401
    %v1403 = vmul.f32 %v1401, %v1402
    %v1404 = vsub.f32 1.0, %v1403
    %v1405 = vmul.f32 %v1402, %v1404
    %v1406 = vadd.f32 %v1402, %v1405
    %vm1407 = vweird.f32 %v1401
    %vm1408 = vweird.f32 %v1402
    %vm1409 = vmor %vm1407, %vm1408
    %v1410 = vsel %vm1409, %v1402, %v1406
    %v1411 = vand.u32 2147483647, %v1401
    %vm1412 = vcmp.eq.f32.partialorder %v1411, 8.507059e+37
    %v1413 = vand.u32 %v1401, 2147483648
    %v1414 = vor.u32 1.1754944e-38, %v1413
    %v1415 = vsel %vm1412, %v1414, %v1410
    %v1416 = vmul.f32 1.0, %v1415
    %v1417 = vtanh.pop %v1363
    %v1418 = vxor.u32 %v1376, 2147483648
    %v1419 = vmul.f32 %v1418, 1.442695
    %v1420 = vpow.pop %v1419
    %v1421 = vadd.f32 %v1420, 1.0
    %v1422 = vrcp.pop %v1421
    %v1423 = vmul.f32 %v1421, %v1422
    %v1424 = vsub.f32 1.0, %v1423
    %v1425 = vmul.f32 %v1422, %v1424
    %v1426 = vadd.f32 %v1422, %v1425
    %vm1427 = vweird.f32 %v1421
    %vm1428 = vweird.f32 %v1422
    %vm1429 = vmor %vm1427, %vm1428
    %v1430 = vsel %vm1429, %v1422, %v1426
    %v1431 = vand.u32 2147483647, %v1421
    %vm1432 = vcmp.eq.f32.partialorder %v1431, 8.507059e+37
    %v1433 = vand.u32 %v1421, 2147483648
    %v1434 = vor.u32 1.1754944e-38, %v1433
    %v1435 = vsel %vm1432, %v1434, %v1430
    %v1436 = vmul.f32 1.0, %v1435
    %v1437 = vld [vmem:[#allocation6] sm:$0xff]
    %v1438 = vmul.f32 %v1416, %v1437
    %v1439 = vmul.f32 %v1397, %v1417
    %v1440 = vadd.f32 %v1438, %v1439
    %v1441 = vtanh.pop %v1440
    %v1442 = vmul.f32 %v1436, %v1441
    %1443 = vst [vmem:[#allocation6] sm:$0xff] %v1440
    %1444 = vst [vmem:[#allocation5] sm:$0xff] %v1442
    %v1445 = vpack.c.bf16 %v1442, %v1442
    %s1446 = scalar_lea.vmem [#allocation2], 20
    %1447 = vst [vmem:[%s1446] sm:$0xf] %v1445
    %v1448 = vld [vmem:[#allocation5] sm:$0xff]
    %v1449 = vpack.c.bf16 %v1448, %v1448
    %s1450 = scalar_lea.vmem [#allocation4], 192
    %v1451 = vld [vmem:[%s1450] sm:$0xff]
    %v1452 = vld [vmem:[%s1450 + $0x8] sm:$0xff]
    %v1453 = vld [vmem:[%s1450 + $0x10] sm:$0xff]
    %v1454 = vld [vmem:[%s1450 + $0x18] sm:$0xff]
    %1455 = vmatpush.bf16.msra.mxu0 %v652
    %1456 = vmatpush.bf16.msra.mxu0 %v648
    %1457 = vmatpush.bf16.msra.mxu0 %v644
    %1458 = vmatpush.bf16.msra.mxu0 %v640
    %1459 = vmatpush.bf16.msra.mxu0 %v636
    %1460 = vmatpush.bf16.msra.mxu0 %v632
    %1461 = vmatpush.bf16.msra.mxu0 %v628
    %1462 = vmatpush.bf16.msra.mxu0 %v624
    %1463 = vmatmul.bf16.gmra.mxu0 %v1449
    %v1464 = vpop.f32.mrf.mxu0
    %v1465 = vadd.f32 %v1451, %v1464
    %v1466 = vpop.f32.mrf.mxu0
    %1467 = vdwg.mxu0
    %1468 = vmatpush.bf16.msra.mxu0 %v653
    %1469 = vmatpush.bf16.msra.mxu0 %v649
    %1470 = vmatpush.bf16.msra.mxu0 %v645
    %1471 = vmatpush.bf16.msra.mxu0 %v641
    %1472 = vmatpush.bf16.msra.mxu0 %v637
    %1473 = vmatpush.bf16.msra.mxu0 %v633
    %1474 = vmatpush.bf16.msra.mxu0 %v629
    %1475 = vmatpush.bf16.msra.mxu0 %v625
    %1476 = vmatmul.bf16.gmra.mxu0 %v1449
    %v1477 = vpop.f32.mrf.mxu0
    %v1478 = vadd.f32 %v1452, %v1477
    %v1479 = vpop.f32.mrf.mxu0
    %1480 = vdwg.mxu0
    %1481 = vmatpush.bf16.msra.mxu0 %v654
    %1482 = vmatpush.bf16.msra.mxu0 %v650
    %1483 = vmatpush.bf16.msra.mxu0 %v646
    %1484 = vmatpush.bf16.msra.mxu0 %v642
    %1485 = vmatpush.bf16.msra.mxu0 %v638
    %1486 = vmatpush.bf16.msra.mxu0 %v634
    %1487 = vmatpush.bf16.msra.mxu0 %v630
    %1488 = vmatpush.bf16.msra.mxu0 %v626
    %1489 = vmatmul.bf16.gmra.mxu0 %v1449
    %v1490 = vpop.f32.mrf.mxu0
    %v1491 = vadd.f32 %v1453, %v1490
    %v1492 = vpop.f32.mrf.mxu0
    %1493 = vdwg.mxu0
    %1494 = vmatpush.bf16.msra.mxu0 %v655
    %1495 = vmatpush.bf16.msra.mxu0 %v651
    %1496 = vmatpush.bf16.msra.mxu0 %v647
    %1497 = vmatpush.bf16.msra.mxu0 %v643
    %1498 = vmatpush.bf16.msra.mxu0 %v639
    %1499 = vmatpush.bf16.msra.mxu0 %v635
    %1500 = vmatpush.bf16.msra.mxu0 %v631
    %1501 = vmatpush.bf16.msra.mxu0 %v627
    %1502 = vmatmul.bf16.gmra.mxu0 %v1449
    %v1503 = vpop.f32.mrf.mxu0
    %v1504 = vadd.f32 %v1454, %v1503
    %v1505 = vpop.f32.mrf.mxu0
    %1506 = vdwg.mxu0
    %v1507 = vxor.u32 %v1465, 2147483648
    %v1508 = vmul.f32 %v1507, 1.442695
    %v1509 = vpow.pop %v1508
    %v1510 = vadd.f32 %v1509, 1.0
    %v1511 = vrcp.pop %v1510
    %v1512 = vmul.f32 %v1510, %v1511
    %v1513 = vsub.f32 1.0, %v1512
    %v1514 = vmul.f32 %v1511, %v1513
    %v1515 = vadd.f32 %v1511, %v1514
    %vm1516 = vweird.f32 %v1510
    %vm1517 = vweird.f32 %v1511
    %vm1518 = vmor %vm1516, %vm1517
    %v1519 = vsel %vm1518, %v1511, %v1515
    %v1520 = vand.u32 2147483647, %v1510
    %vm1521 = vcmp.eq.f32.partialorder %v1520, 8.507059e+37
    %v1522 = vand.u32 %v1510, 2147483648
    %v1523 = vor.u32 1.1754944e-38, %v1522
    %v1524 = vsel %vm1521, %v1523, %v1519
    %v1525 = vmul.f32 1.0, %v1524
    %v1526 = vxor.u32 %v1478, 2147483648
    %v1527 = vmul.f32 %v1526, 1.442695
    %v1528 = vpow.pop %v1527
    %v1529 = vadd.f32 %v1528, 1.0
    %v1530 = vrcp.pop %v1529
    %v1531 = vmul.f32 %v1529, %v1530
    %v1532 = vsub.f32 1.0, %v1531
    %v1533 = vmul.f32 %v1530, %v1532
    %v1534 = vadd.f32 %v1530, %v1533
    %vm1535 = vweird.f32 %v1529
    %vm1536 = vweird.f32 %v1530
    %vm1537 = vmor %vm1535, %vm1536
    %v1538 = vsel %vm1537, %v1530, %v1534
    %v1539 = vand.u32 2147483647, %v1529
    %vm1540 = vcmp.eq.f32.partialorder %v1539, 8.507059e+37
    %v1541 = vand.u32 %v1529, 2147483648
    %v1542 = vor.u32 1.1754944e-38, %v1541
    %v1543 = vsel %vm1540, %v1542, %v1538
    %v1544 = vmul.f32 1.0, %v1543
    %v1545 = vtanh.pop %v1491
    %v1546 = vxor.u32 %v1504, 2147483648
    %v1547 = vmul.f32 %v1546, 1.442695
    %v1548 = vpow.pop %v1547
    %v1549 = vadd.f32 %v1548, 1.0
    %v1550 = vrcp.pop %v1549
    %v1551 = vmul.f32 %v1549, %v1550
    %v1552 = vsub.f32 1.0, %v1551
    %v1553 = vmul.f32 %v1550, %v1552
    %v1554 = vadd.f32 %v1550, %v1553
    %vm1555 = vweird.f32 %v1549
    %vm1556 = vweird.f32 %v1550
    %vm1557 = vmor %vm1555, %vm1556
    %v1558 = vsel %vm1557, %v1550, %v1554
    %v1559 = vand.u32 2147483647, %v1549
    %vm1560 = vcmp.eq.f32.partialorder %v1559, 8.507059e+37
    %v1561 = vand.u32 %v1549, 2147483648
    %v1562 = vor.u32 1.1754944e-38, %v1561
    %v1563 = vsel %vm1560, %v1562, %v1558
    %v1564 = vmul.f32 1.0, %v1563
    %v1565 = vld [vmem:[#allocation6] sm:$0xff]
    %v1566 = vmul.f32 %v1544, %v1565
    %v1567 = vmul.f32 %v1525, %v1545
    %v1568 = vadd.f32 %v1566, %v1567
    %v1569 = vtanh.pop %v1568
    %v1570 = vmul.f32 %v1564, %v1569
    %1571 = vst [vmem:[#allocation6] sm:$0xff] %v1568
    %1572 = vst [vmem:[#allocation5] sm:$0xff] %v1570
    %v1573 = vpack.c.bf16 %v1570, %v1570
    %s1574 = scalar_lea.vmem [#allocation2], 24
    %1575 = vst [vmem:[%s1574] sm:$0xf] %v1573
    %v1576 = vld [vmem:[#allocation5] sm:$0xff]
    %v1577 = vpack.c.bf16 %v1576, %v1576
    %s1578 = scalar_lea.vmem [#allocation4], 224
    %v1579 = vld [vmem:[%s1578] sm:$0xff]
    %v1580 = vld [vmem:[%s1578 + $0x8] sm:$0xff]
    %v1581 = vld [vmem:[%s1578 + $0x10] sm:$0xff]
    %v1582 = vld [vmem:[%s1578 + $0x18] sm:$0xff]
    %1583 = vmatpush.bf16.msra.mxu0 %v652
    %1584 = vmatpush.bf16.msra.mxu0 %v648
    %1585 = vmatpush.bf16.msra.mxu0 %v644
    %1586 = vmatpush.bf16.msra.mxu0 %v640
    %1587 = vmatpush.bf16.msra.mxu0 %v636
    %1588 = vmatpush.bf16.msra.mxu0 %v632
    %1589 = vmatpush.bf16.msra.mxu0 %v628
    %1590 = vmatpush.bf16.msra.mxu0 %v624
    %1591 = vmatmul.bf16.gmra.mxu0 %v1577
    %v1592 = vpop.f32.mrf.mxu0
    %v1593 = vadd.f32 %v1579, %v1592
    %v1594 = vpop.f32.mrf.mxu0
    %1595 = vdwg.mxu0
    %1596 = vmatpush.bf16.msra.mxu0 %v653
    %1597 = vmatpush.bf16.msra.mxu0 %v649
    %1598 = vmatpush.bf16.msra.mxu0 %v645
    %1599 = vmatpush.bf16.msra.mxu0 %v641
    %1600 = vmatpush.bf16.msra.mxu0 %v637
    %1601 = vmatpush.bf16.msra.mxu0 %v633
    %1602 = vmatpush.bf16.msra.mxu0 %v629
    %1603 = vmatpush.bf16.msra.mxu0 %v625
    %1604 = vmatmul.bf16.gmra.mxu0 %v1577
    %v1605 = vpop.f32.mrf.mxu0
    %v1606 = vadd.f32 %v1580, %v1605
    %v1607 = vpop.f32.mrf.mxu0
    %1608 = vdwg.mxu0
    %1609 = vmatpush.bf16.msra.mxu0 %v654
    %1610 = vmatpush.bf16.msra.mxu0 %v650
    %1611 = vmatpush.bf16.msra.mxu0 %v646
    %1612 = vmatpush.bf16.msra.mxu0 %v642
    %1613 = vmatpush.bf16.msra.mxu0 %v638
    %1614 = vmatpush.bf16.msra.mxu0 %v634
    %1615 = vmatpush.bf16.msra.mxu0 %v630
    %1616 = vmatpush.bf16.msra.mxu0 %v626
    %1617 = vmatmul.bf16.gmra.mxu0 %v1577
    %v1618 = vpop.f32.mrf.mxu0
    %v1619 = vadd.f32 %v1581, %v1618
    %v1620 = vpop.f32.mrf.mxu0
    %1621 = vdwg.mxu0
    %1622 = vmatpush.bf16.msra.mxu0 %v655
    %1623 = vmatpush.bf16.msra.mxu0 %v651
    %1624 = vmatpush.bf16.msra.mxu0 %v647
    %1625 = vmatpush.bf16.msra.mxu0 %v643
    %1626 = vmatpush.bf16.msra.mxu0 %v639
    %1627 = vmatpush.bf16.msra.mxu0 %v635
    %1628 = vmatpush.bf16.msra.mxu0 %v631
    %1629 = vmatpush.bf16.msra.mxu0 %v627
    %1630 = vmatmul.bf16.gmra.mxu0 %v1577
    %v1631 = vpop.f32.mrf.mxu0
    %v1632 = vadd.f32 %v1582, %v1631
    %v1633 = vpop.f32.mrf.mxu0
    %1634 = vdwg.mxu0
    %v1635 = vxor.u32 %v1593, 2147483648
    %v1636 = vmul.f32 %v1635, 1.442695
    %v1637 = vpow.pop %v1636
    %v1638 = vadd.f32 %v1637, 1.0
    %v1639 = vrcp.pop %v1638
    %v1640 = vmul.f32 %v1638, %v1639
    %v1641 = vsub.f32 1.0, %v1640
    %v1642 = vmul.f32 %v1639, %v1641
    %v1643 = vadd.f32 %v1639, %v1642
    %vm1644 = vweird.f32 %v1638
    %vm1645 = vweird.f32 %v1639
    %vm1646 = vmor %vm1644, %vm1645
    %v1647 = vsel %vm1646, %v1639, %v1643
    %v1648 = vand.u32 2147483647, %v1638
    %vm1649 = vcmp.eq.f32.partialorder %v1648, 8.507059e+37
    %v1650 = vand.u32 %v1638, 2147483648
    %v1651 = vor.u32 1.1754944e-38, %v1650
    %v1652 = vsel %vm1649, %v1651, %v1647
    %v1653 = vmul.f32 1.0, %v1652
    %v1654 = vxor.u32 %v1606, 2147483648
    %v1655 = vmul.f32 %v1654, 1.442695
    %v1656 = vpow.pop %v1655
    %v1657 = vadd.f32 %v1656, 1.0
    %v1658 = vrcp.pop %v1657
    %v1659 = vmul.f32 %v1657, %v1658
    %v1660 = vsub.f32 1.0, %v1659
    %v1661 = vmul.f32 %v1658, %v1660
    %v1662 = vadd.f32 %v1658, %v1661
    %vm1663 = vweird.f32 %v1657
    %vm1664 = vweird.f32 %v1658
    %vm1665 = vmor %vm1663, %vm1664
    %v1666 = vsel %vm1665, %v1658, %v1662
    %v1667 = vand.u32 2147483647, %v1657
    %vm1668 = vcmp.eq.f32.partialorder %v1667, 8.507059e+37
    %v1669 = vand.u32 %v1657, 2147483648
    %v1670 = vor.u32 1.1754944e-38, %v1669
    %v1671 = vsel %vm1668, %v1670, %v1666
    %v1672 = vmul.f32 1.0, %v1671
    %v1673 = vtanh.pop %v1619
    %v1674 = vxor.u32 %v1632, 2147483648
    %v1675 = vmul.f32 %v1674, 1.442695
    %v1676 = vpow.pop %v1675
    %v1677 = vadd.f32 %v1676, 1.0
    %v1678 = vrcp.pop %v1677
    %v1679 = vmul.f32 %v1677, %v1678
    %v1680 = vsub.f32 1.0, %v1679
    %v1681 = vmul.f32 %v1678, %v1680
    %v1682 = vadd.f32 %v1678, %v1681
    %vm1683 = vweird.f32 %v1677
    %vm1684 = vweird.f32 %v1678
    %vm1685 = vmor %vm1683, %vm1684
    %v1686 = vsel %vm1685, %v1678, %v1682
    %v1687 = vand.u32 2147483647, %v1677
    %vm1688 = vcmp.eq.f32.partialorder %v1687, 8.507059e+37
    %v1689 = vand.u32 %v1677, 2147483648
    %v1690 = vor.u32 1.1754944e-38, %v1689
    %v1691 = vsel %vm1688, %v1690, %v1686
    %v1692 = vmul.f32 1.0, %v1691
    %v1693 = vld [vmem:[#allocation6] sm:$0xff]
    %v1694 = vmul.f32 %v1672, %v1693
    %v1695 = vmul.f32 %v1653, %v1673
    %v1696 = vadd.f32 %v1694, %v1695
    %v1697 = vtanh.pop %v1696
    %v1698 = vmul.f32 %v1692, %v1697
    %1699 = vst [vmem:[#allocation6] sm:$0xff] %v1696
    %1700 = vst [vmem:[#allocation5] sm:$0xff] %v1698
    %v1701 = vpack.c.bf16 %v1698, %v1698
    %s1702 = scalar_lea.vmem [#allocation2], 28
    %1703 = vst [vmem:[%s1702] sm:$0xf] %v1701
    %v1704 = vld [vmem:[#allocation5] sm:$0xff]
    %v1705 = vpack.c.bf16 %v1704, %v1704
    %s1706 = scalar_lea.vmem [#allocation4], 256
    %v1707 = vld [vmem:[%s1706] sm:$0xff]
    %v1708 = vld [vmem:[%s1706 + $0x8] sm:$0xff]
    %v1709 = vld [vmem:[%s1706 + $0x10] sm:$0xff]
    %v1710 = vld [vmem:[%s1706 + $0x18] sm:$0xff]
    %1711 = vmatpush.bf16.msra.mxu0 %v652
    %1712 = vmatpush.bf16.msra.mxu0 %v648
    %1713 = vmatpush.bf16.msra.mxu0 %v644
    %1714 = vmatpush.bf16.msra.mxu0 %v640
    %1715 = vmatpush.bf16.msra.mxu0 %v636
    %1716 = vmatpush.bf16.msra.mxu0 %v632
    %1717 = vmatpush.bf16.msra.mxu0 %v628
    %1718 = vmatpush.bf16.msra.mxu0 %v624
    %1719 = vmatmul.bf16.gmra.mxu0 %v1705
    %v1720 = vpop.f32.mrf.mxu0
    %v1721 = vadd.f32 %v1707, %v1720
    %v1722 = vpop.f32.mrf.mxu0
    %1723 = vdwg.mxu0
    %1724 = vmatpush.bf16.msra.mxu0 %v653
    %1725 = vmatpush.bf16.msra.mxu0 %v649
    %1726 = vmatpush.bf16.msra.mxu0 %v645
    %1727 = vmatpush.bf16.msra.mxu0 %v641
    %1728 = vmatpush.bf16.msra.mxu0 %v637
    %1729 = vmatpush.bf16.msra.mxu0 %v633
    %1730 = vmatpush.bf16.msra.mxu0 %v629
    %1731 = vmatpush.bf16.msra.mxu0 %v625
    %1732 = vmatmul.bf16.gmra.mxu0 %v1705
    %v1733 = vpop.f32.mrf.mxu0
    %v1734 = vadd.f32 %v1708, %v1733
    %v1735 = vpop.f32.mrf.mxu0
    %1736 = vdwg.mxu0
    %1737 = vmatpush.bf16.msra.mxu0 %v654
    %1738 = vmatpush.bf16.msra.mxu0 %v650
    %1739 = vmatpush.bf16.msra.mxu0 %v646
    %1740 = vmatpush.bf16.msra.mxu0 %v642
    %1741 = vmatpush.bf16.msra.mxu0 %v638
    %1742 = vmatpush.bf16.msra.mxu0 %v634
    %1743 = vmatpush.bf16.msra.mxu0 %v630
    %1744 = vmatpush.bf16.msra.mxu0 %v626
    %1745 = vmatmul.bf16.gmra.mxu0 %v1705
    %v1746 = vpop.f32.mrf.mxu0
    %v1747 = vadd.f32 %v1709, %v1746
    %v1748 = vpop.f32.mrf.mxu0
    %1749 = vdwg.mxu0
    %1750 = vmatpush.bf16.msra.mxu0 %v655
    %1751 = vmatpush.bf16.msra.mxu0 %v651
    %1752 = vmatpush.bf16.msra.mxu0 %v647
    %1753 = vmatpush.bf16.msra.mxu0 %v643
    %1754 = vmatpush.bf16.msra.mxu0 %v639
    %1755 = vmatpush.bf16.msra.mxu0 %v635
    %1756 = vmatpush.bf16.msra.mxu0 %v631
    %1757 = vmatpush.bf16.msra.mxu0 %v627
    %1758 = vmatmul.bf16.gmra.mxu0 %v1705
    %v1759 = vpop.f32.mrf.mxu0
    %v1760 = vadd.f32 %v1710, %v1759
    %v1761 = vpop.f32.mrf.mxu0
    %1762 = vdwg.mxu0
    %v1763 = vxor.u32 %v1721, 2147483648
    %v1764 = vmul.f32 %v1763, 1.442695
    %v1765 = vpow.pop %v1764
    %v1766 = vadd.f32 %v1765, 1.0
    %v1767 = vrcp.pop %v1766
    %v1768 = vmul.f32 %v1766, %v1767
    %v1769 = vsub.f32 1.0, %v1768
    %v1770 = vmul.f32 %v1767, %v1769
    %v1771 = vadd.f32 %v1767, %v1770
    %vm1772 = vweird.f32 %v1766
    %vm1773 = vweird.f32 %v1767
    %vm1774 = vmor %vm1772, %vm1773
    %v1775 = vsel %vm1774, %v1767, %v1771
    %v1776 = vand.u32 2147483647, %v1766
    %vm1777 = vcmp.eq.f32.partialorder %v1776, 8.507059e+37
    %v1778 = vand.u32 %v1766, 2147483648
    %v1779 = vor.u32 1.1754944e-38, %v1778
    %v1780 = vsel %vm1777, %v1779, %v1775
    %v1781 = vmul.f32 1.0, %v1780
    %v1782 = vxor.u32 %v1734, 2147483648
    %v1783 = vmul.f32 %v1782, 1.442695
    %v1784 = vpow.pop %v1783
    %v1785 = vadd.f32 %v1784, 1.0
    %v1786 = vrcp.pop %v1785
    %v1787 = vmul.f32 %v1785, %v1786
    %v1788 = vsub.f32 1.0, %v1787
    %v1789 = vmul.f32 %v1786, %v1788
    %v1790 = vadd.f32 %v1786, %v1789
    %vm1791 = vweird.f32 %v1785
    %vm1792 = vweird.f32 %v1786
    %vm1793 = vmor %vm1791, %vm1792
    %v1794 = vsel %vm1793, %v1786, %v1790
    %v1795 = vand.u32 2147483647, %v1785
    %vm1796 = vcmp.eq.f32.partialorder %v1795, 8.507059e+37
    %v1797 = vand.u32 %v1785, 2147483648
    %v1798 = vor.u32 1.1754944e-38, %v1797
    %v1799 = vsel %vm1796, %v1798, %v1794
    %v1800 = vmul.f32 1.0, %v1799
    %v1801 = vtanh.pop %v1747
    %v1802 = vxor.u32 %v1760, 2147483648
    %v1803 = vmul.f32 %v1802, 1.442695
    %v1804 = vpow.pop %v1803
    %v1805 = vadd.f32 %v1804, 1.0
    %v1806 = vrcp.pop %v1805
    %v1807 = vmul.f32 %v1805, %v1806
    %v1808 = vsub.f32 1.0, %v1807
    %v1809 = vmul.f32 %v1806, %v1808
    %v1810 = vadd.f32 %v1806, %v1809
    %vm1811 = vweird.f32 %v1805
    %vm1812 = vweird.f32 %v1806
    %vm1813 = vmor %vm1811, %vm1812
    %v1814 = vsel %vm1813, %v1806, %v1810
    %v1815 = vand.u32 2147483647, %v1805
    %vm1816 = vcmp.eq.f32.partialorder %v1815, 8.507059e+37
    %v1817 = vand.u32 %v1805, 2147483648
    %v1818 = vor.u32 1.1754944e-38, %v1817
    %v1819 = vsel %vm1816, %v1818, %v1814
    %v1820 = vmul.f32 1.0, %v1819
    %v1821 = vld [vmem:[#allocation6] sm:$0xff]
    %v1822 = vmul.f32 %v1800, %v1821
    %v1823 = vmul.f32 %v1781, %v1801
    %v1824 = vadd.f32 %v1822, %v1823
    %v1825 = vtanh.pop %v1824
    %v1826 = vmul.f32 %v1820, %v1825
    %1827 = vst [vmem:[#allocation6] sm:$0xff] %v1824
    %1828 = vst [vmem:[#allocation5] sm:$0xff] %v1826
    %v1829 = vpack.c.bf16 %v1826, %v1826
    %s1830 = scalar_lea.vmem [#allocation2], 32
    %1831 = vst [vmem:[%s1830] sm:$0xf] %v1829
    %v1832 = vld [vmem:[#allocation2] sm:$0xf]
    %v1833 = vld [vmem:[#allocation2 + $0x4] sm:$0xf]
    %v1834 = vld [vmem:[#allocation2 + $0x8] sm:$0xf]
    %v1835 = vld [vmem:[#allocation2 + $0xc] sm:$0xf]
    %v1836 = vld [vmem:[#allocation2 + $0x10] sm:$0xf]
    %v1837 = vld [vmem:[#allocation2 + $0x14] sm:$0xf]
    %v1838 = vld [vmem:[#allocation2 + $0x18] sm:$0xf]
    %v1839 = vld [vmem:[#allocation2 + $0x1c] sm:$0xf]
    %v1840 = vld [vmem:[#allocation2 + $0x20] sm:$0xf]
    %s1841 = scalar_lea.vmem [#allocation10], 256
    %v1842 = vld [vmem:[%s1841] sm:$0xff]
    %v1843 = vld [vmem:[%s1841 + $0x8] sm:$0xff]
    %v1844 = vld [vmem:[%s1841 + $0x10] sm:$0xff]
    %v1845 = vld [vmem:[%s1841 + $0x18] sm:$0xff]
    %v1846 = vld [vmem:[%s1841 + $0x20] sm:$0xff]
    %v1847 = vld [vmem:[%s1841 + $0x28] sm:$0xff]
    %v1848 = vld [vmem:[%s1841 + $0x30] sm:$0xff]
    %v1849 = vld [vmem:[%s1841 + $0x38] sm:$0xff]
    %v1850 = vld [vmem:[%s1841 + $0x40] sm:$0xff]
    %v1851 = vld [vmem:[%s1841 + $0x48] sm:$0xff]
    %v1852 = vld [vmem:[%s1841 + $0x50] sm:$0xff]
    %v1853 = vld [vmem:[%s1841 + $0x58] sm:$0xff]
    %v1854 = vld [vmem:[%s1841 + $0x60] sm:$0xff]
    %v1855 = vld [vmem:[%s1841 + $0x68] sm:$0xff]
    %v1856 = vld [vmem:[%s1841 + $0x70] sm:$0xff]
    %v1857 = vld [vmem:[%s1841 + $0x78] sm:$0xff]
    %v1858 = vld [vmem:[%s1841 + $0x80] sm:$0xff]
    %v1859 = vld [vmem:[%s1841 + $0x88] sm:$0xff]
    %v1860 = vld [vmem:[%s1841 + $0x90] sm:$0xff]
    %v1861 = vld [vmem:[%s1841 + $0x98] sm:$0xff]
    %v1862 = vld [vmem:[%s1841 + $0xa0] sm:$0xff]
    %v1863 = vld [vmem:[%s1841 + $0xa8] sm:$0xff]
    %v1864 = vld [vmem:[%s1841 + $0xb0] sm:$0xff]
    %v1865 = vld [vmem:[%s1841 + $0xb8] sm:$0xff]
    %v1866 = vld [vmem:[%s1841 + $0xc0] sm:$0xff]
    %v1867 = vld [vmem:[%s1841 + $0xc8] sm:$0xff]
    %v1868 = vld [vmem:[%s1841 + $0xd0] sm:$0xff]
    %v1869 = vld [vmem:[%s1841 + $0xd8] sm:$0xff]
    %v1870 = vld [vmem:[%s1841 + $0xe0] sm:$0xff]
    %v1871 = vld [vmem:[%s1841 + $0xe8] sm:$0xff]
    %v1872 = vld [vmem:[%s1841 + $0xf0] sm:$0xff]
    %v1873 = vld [vmem:[%s1841 + $0xf8] sm:$0xff]
    %s1874 = scalar_lea.vmem [#allocation13], 4
    %v1875 = vld [vmem:[%s1874] sm:$0xf]
    %v1877 = vperm.slane %v1875, 0
    %v1878 = vperm.slane %v1875, 1
    %v1879 = vperm.slane %v1875, 2
    %v1880 = vperm.slane %v1875, 3
    %v1894 = vunpack.c.l.b16 %v1832
    %v1895 = vunpack.c.l.b16 %v1833
    %v1896 = vunpack.c.l.b16 %v1834
    %v1897 = vunpack.c.l.b16 %v1835
    %v1898 = vunpack.c.l.b16 %v1836
    %v1899 = vunpack.c.l.b16 %v1837
    %v1900 = vunpack.c.l.b16 %v1838
    %v1901 = vunpack.c.l.b16 %v1839
    %v1902 = vunpack.c.l.b16 %v1840
    %v1903 = vpack.c.b16 %v1895, %v1894
    %v1904 = vpack.c.b16 %v1897, %v1896
    %v1905 = vpack.c.b16 %v1899, %v1898
    %v1906 = vpack.c.b16 %v1901, %v1900
    %v1907 = vpack.c.b16 %v1902, %v1902
    %v1945 = vunpack.c.l.b16 %v1842
    %v1946 = vunpack.c.h.b16 %v1842
    %v1947 = vunpack.c.l.b16 %v1843
    %v1948 = vunpack.c.h.b16 %v1843
    %v1949 = vunpack.c.l.b16 %v1844
    %v1950 = vunpack.c.h.b16 %v1844
    %v1951 = vunpack.c.l.b16 %v1845
    %v1952 = vunpack.c.h.b16 %v1845
    %v1953 = vunpack.c.l.b16 %v1846
    %v1954 = vunpack.c.h.b16 %v1846
    %v1955 = vunpack.c.l.b16 %v1847
    %v1956 = vunpack.c.h.b16 %v1847
    %v1957 = vunpack.c.l.b16 %v1848
    %v1958 = vunpack.c.h.b16 %v1848
    %v1959 = vunpack.c.l.b16 %v1849
    %v1960 = vunpack.c.h.b16 %v1849
    %v1961 = vunpack.c.l.b16 %v1850
    %v1962 = vunpack.c.h.b16 %v1850
    %v1963 = vunpack.c.l.b16 %v1851
    %v1964 = vunpack.c.h.b16 %v1851
    %v1965 = vunpack.c.l.b16 %v1852
    %v1966 = vunpack.c.h.b16 %v1852
    %v1967 = vunpack.c.l.b16 %v1853
    %v1968 = vunpack.c.h.b16 %v1853
    %v1969 = vunpack.c.l.b16 %v1854
    %v1970 = vunpack.c.h.b16 %v1854
    %v1971 = vunpack.c.l.b16 %v1855
    %v1972 = vunpack.c.h.b16 %v1855
    %v1973 = vunpack.c.l.b16 %v1856
    %v1974 = vunpack.c.h.b16 %v1856
    %v1975 = vunpack.c.l.b16 %v1857
    %v1976 = vunpack.c.h.b16 %v1857
    %v1977 = vunpack.c.l.b16 %v1858
    %v1978 = vunpack.c.h.b16 %v1858
    %v1979 = vunpack.c.l.b16 %v1859
    %v1980 = vunpack.c.h.b16 %v1859
    %v1981 = vunpack.c.l.b16 %v1860
    %v1982 = vunpack.c.h.b16 %v1860
    %v1983 = vunpack.c.l.b16 %v1861
    %v1984 = vunpack.c.h.b16 %v1861
    %v1985 = vunpack.c.l.b16 %v1862
    %v1986 = vunpack.c.h.b16 %v1862
    %v1987 = vunpack.c.l.b16 %v1863
    %v1988 = vunpack.c.h.b16 %v1863
    %v1989 = vunpack.c.l.b16 %v1864
    %v1990 = vunpack.c.h.b16 %v1864
    %v1991 = vunpack.c.l.b16 %v1865
    %v1992 = vunpack.c.h.b16 %v1865
    %v1993 = vunpack.c.l.b16 %v1866
    %v1994 = vunpack.c.h.b16 %v1866
    %v1995 = vunpack.c.l.b16 %v1867
    %v1996 = vunpack.c.h.b16 %v1867
    %v1997 = vunpack.c.l.b16 %v1868
    %v1998 = vunpack.c.h.b16 %v1868
    %v1999 = vunpack.c.l.b16 %v1869
    %v2000 = vunpack.c.h.b16 %v1869
    %v2001 = vunpack.c.l.b16 %v1870
    %v2002 = vunpack.c.h.b16 %v1870
    %v2003 = vunpack.c.l.b16 %v1871
    %v2004 = vunpack.c.h.b16 %v1871
    %v2005 = vunpack.c.l.b16 %v1872
    %v2006 = vunpack.c.h.b16 %v1872
    %v2007 = vunpack.c.l.b16 %v1873
    %v2008 = vunpack.c.h.b16 %v1873
    %v2009 = vpack.c.b16 %v1949, %v1945
    %v2010 = vpack.c.b16 %v1950, %v1946
    %v2011 = vpack.c.b16 %v1951, %v1947
    %v2012 = vpack.c.b16 %v1952, %v1948
    %v2013 = vpack.c.b16 %v1957, %v1953
    %v2014 = vpack.c.b16 %v1958, %v1954
    %v2015 = vpack.c.b16 %v1959, %v1955
    %v2016 = vpack.c.b16 %v1960, %v1956
    %v2017 = vpack.c.b16 %v1965, %v1961
    %v2018 = vpack.c.b16 %v1966, %v1962
    %v2019 = vpack.c.b16 %v1967, %v1963
    %v2020 = vpack.c.b16 %v1968, %v1964
    %v2021 = vpack.c.b16 %v1973, %v1969
    %v2022 = vpack.c.b16 %v1974, %v1970
    %v2023 = vpack.c.b16 %v1975, %v1971
    %v2024 = vpack.c.b16 %v1976, %v1972
    %v2025 = vpack.c.b16 %v1981, %v1977
    %v2026 = vpack.c.b16 %v1982, %v1978
    %v2027 = vpack.c.b16 %v1983, %v1979
    %v2028 = vpack.c.b16 %v1984, %v1980
    %v2029 = vpack.c.b16 %v1989, %v1985
    %v2030 = vpack.c.b16 %v1990, %v1986
    %v2031 = vpack.c.b16 %v1991, %v1987
    %v2032 = vpack.c.b16 %v1992, %v1988
    %v2033 = vpack.c.b16 %v1997, %v1993
    %v2034 = vpack.c.b16 %v1998, %v1994
    %v2035 = vpack.c.b16 %v1999, %v1995
    %v2036 = vpack.c.b16 %v2000, %v1996
    %v2037 = vpack.c.b16 %v2005, %v2001
    %v2038 = vpack.c.b16 %v2006, %v2002
    %v2039 = vpack.c.b16 %v2007, %v2003
    %v2040 = vpack.c.b16 %v2008, %v2004
    %2073 = vmatpush.bf16.msra.mxu0 %v2037
    %2074 = vmatpush.bf16.msra.mxu0 %v2033
    %2075 = vmatpush.bf16.msra.mxu0 %v2029
    %2076 = vmatpush.bf16.msra.mxu0 %v2025
    %2077 = vmatpush.bf16.msra.mxu0 %v2021
    %2078 = vmatpush.bf16.msra.mxu0 %v2017
    %2079 = vmatpush.bf16.msra.mxu0 %v2013
    %2080 = vmatpush.bf16.msra.mxu0 %v2009
    %2081 = vmatmul.bf16.gmra.mxu0 %v1903
    %v2082 = vpop.f32.mrf.mxu0
    %v2083 = vadd.f32 %v1877, %v2082
    %v2084 = vpop.f32.mrf.mxu0
    %v2085 = vadd.f32 %v1877, %v2084
    %2086 = vmatmul.bf16.gmra.mxu0 %v1904
    %v2087 = vpop.f32.mrf.mxu0
    %v2088 = vadd.f32 %v1877, %v2087
    %v2089 = vpop.f32.mrf.mxu0
    %v2090 = vadd.f32 %v1877, %v2089
    %2091 = vmatmul.bf16.gmra.mxu0 %v1905
    %v2092 = vpop.f32.mrf.mxu0
    %v2093 = vadd.f32 %v1877, %v2092
    %v2094 = vpop.f32.mrf.mxu0
    %v2095 = vadd.f32 %v1877, %v2094
    %2096 = vmatmul.bf16.gmra.mxu0 %v1906
    %v2097 = vpop.f32.mrf.mxu0
    %v2098 = vadd.f32 %v1877, %v2097
    %v2099 = vpop.f32.mrf.mxu0
    %v2100 = vadd.f32 %v1877, %v2099
    %2101 = vmatmul.bf16.gmra.mxu0 %v1907
    %v2102 = vpop.f32.mrf.mxu0
    %v2103 = vadd.f32 %v1877, %v2102
    %v2104 = vpop.f32.mrf.mxu0
    %2105 = vdwg.mxu0
    %2106 = vmatpush.bf16.msra.mxu0 %v2038
    %2107 = vmatpush.bf16.msra.mxu0 %v2034
    %2108 = vmatpush.bf16.msra.mxu0 %v2030
    %2109 = vmatpush.bf16.msra.mxu0 %v2026
    %2110 = vmatpush.bf16.msra.mxu0 %v2022
    %2111 = vmatpush.bf16.msra.mxu0 %v2018
    %2112 = vmatpush.bf16.msra.mxu0 %v2014
    %2113 = vmatpush.bf16.msra.mxu0 %v2010
    %2114 = vmatmul.bf16.gmra.mxu0 %v1903
    %v2115 = vpop.f32.mrf.mxu0
    %v2116 = vadd.f32 %v1878, %v2115
    %v2117 = vpop.f32.mrf.mxu0
    %v2118 = vadd.f32 %v1878, %v2117
    %2119 = vmatmul.bf16.gmra.mxu0 %v1904
    %v2120 = vpop.f32.mrf.mxu0
    %v2121 = vadd.f32 %v1878, %v2120
    %v2122 = vpop.f32.mrf.mxu0
    %v2123 = vadd.f32 %v1878, %v2122
    %2124 = vmatmul.bf16.gmra.mxu0 %v1905
    %v2125 = vpop.f32.mrf.mxu0
    %v2126 = vadd.f32 %v1878, %v2125
    %v2127 = vpop.f32.mrf.mxu0
    %v2128 = vadd.f32 %v1878, %v2127
    %2129 = vmatmul.bf16.gmra.mxu0 %v1906
    %v2130 = vpop.f32.mrf.mxu0
    %v2131 = vadd.f32 %v1878, %v2130
    %v2132 = vpop.f32.mrf.mxu0
    %v2133 = vadd.f32 %v1878, %v2132
    %2134 = vmatmul.bf16.gmra.mxu0 %v1907
    %v2135 = vpop.f32.mrf.mxu0
    %v2136 = vadd.f32 %v1878, %v2135
    %v2137 = vpop.f32.mrf.mxu0
    %2138 = vdwg.mxu0
    %2139 = vmatpush.bf16.msra.mxu0 %v2039
    %2140 = vmatpush.bf16.msra.mxu0 %v2035
    %2141 = vmatpush.bf16.msra.mxu0 %v2031
    %2142 = vmatpush.bf16.msra.mxu0 %v2027
    %2143 = vmatpush.bf16.msra.mxu0 %v2023
    %2144 = vmatpush.bf16.msra.mxu0 %v2019
    %2145 = vmatpush.bf16.msra.mxu0 %v2015
    %2146 = vmatpush.bf16.msra.mxu0 %v2011
    %2147 = vmatmul.bf16.gmra.mxu0 %v1903
    %v2148 = vpop.f32.mrf.mxu0
    %v2149 = vadd.f32 %v1879, %v2148
    %v2150 = vpop.f32.mrf.mxu0
    %v2151 = vadd.f32 %v1879, %v2150
    %2152 = vmatmul.bf16.gmra.mxu0 %v1904
    %v2153 = vpop.f32.mrf.mxu0
    %v2154 = vadd.f32 %v1879, %v2153
    %v2155 = vpop.f32.mrf.mxu0
    %v2156 = vadd.f32 %v1879, %v2155
    %2157 = vmatmul.bf16.gmra.mxu0 %v1905
    %v2158 = vpop.f32.mrf.mxu0
    %v2159 = vadd.f32 %v1879, %v2158
    %v2160 = vpop.f32.mrf.mxu0
    %v2161 = vadd.f32 %v1879, %v2160
    %2162 = vmatmul.bf16.gmra.mxu0 %v1906
    %v2163 = vpop.f32.mrf.mxu0
    %v2164 = vadd.f32 %v1879, %v2163
    %v2165 = vpop.f32.mrf.mxu0
    %v2166 = vadd.f32 %v1879, %v2165
    %2167 = vmatmul.bf16.gmra.mxu0 %v1907
    %v2168 = vpop.f32.mrf.mxu0
    %v2169 = vadd.f32 %v1879, %v2168
    %v2170 = vpop.f32.mrf.mxu0
    %2171 = vdwg.mxu0
    %2172 = vmatpush.bf16.msra.mxu0 %v2040
    %2173 = vmatpush.bf16.msra.mxu0 %v2036
    %2174 = vmatpush.bf16.msra.mxu0 %v2032
    %2175 = vmatpush.bf16.msra.mxu0 %v2028
    %2176 = vmatpush.bf16.msra.mxu0 %v2024
    %2177 = vmatpush.bf16.msra.mxu0 %v2020
    %2178 = vmatpush.bf16.msra.mxu0 %v2016
    %2179 = vmatpush.bf16.msra.mxu0 %v2012
    %2180 = vmatmul.bf16.gmra.mxu0 %v1903
    %v2181 = vpop.f32.mrf.mxu0
    %v2182 = vadd.f32 %v1880, %v2181
    %v2183 = vpop.f32.mrf.mxu0
    %v2184 = vadd.f32 %v1880, %v2183
    %2185 = vmatmul.bf16.gmra.mxu0 %v1904
    %v2186 = vpop.f32.mrf.mxu0
    %v2187 = vadd.f32 %v1880, %v2186
    %v2188 = vpop.f32.mrf.mxu0
    %v2189 = vadd.f32 %v1880, %v2188
    %2190 = vmatmul.bf16.gmra.mxu0 %v1905
    %v2191 = vpop.f32.mrf.mxu0
    %v2192 = vadd.f32 %v1880, %v2191
    %v2193 = vpop.f32.mrf.mxu0
    %v2194 = vadd.f32 %v1880, %v2193
    %2195 = vmatmul.bf16.gmra.mxu0 %v1906
    %v2196 = vpop.f32.mrf.mxu0
    %v2197 = vadd.f32 %v1880, %v2196
    %v2198 = vpop.f32.mrf.mxu0
    %v2199 = vadd.f32 %v1880, %v2198
    %2200 = vmatmul.bf16.gmra.mxu0 %v1907
    %v2201 = vpop.f32.mrf.mxu0
    %v2202 = vadd.f32 %v1880, %v2201
    %v2203 = vpop.f32.mrf.mxu0
    %2204 = vdwg.mxu0
    %2205 = vst [vmem:[#allocation4] sm:$0xff] %v2083
    %2206 = vst [vmem:[#allocation4 + $0x8] sm:$0xff] %v2116
    %2207 = vst [vmem:[#allocation4 + $0x10] sm:$0xff] %v2149
    %2208 = vst [vmem:[#allocation4 + $0x18] sm:$0xff] %v2182
    %2209 = vst [vmem:[#allocation4 + $0x20] sm:$0xff] %v2085
    %2210 = vst [vmem:[#allocation4 + $0x28] sm:$0xff] %v2118
    %2211 = vst [vmem:[#allocation4 + $0x30] sm:$0xff] %v2151
    %2212 = vst [vmem:[#allocation4 + $0x38] sm:$0xff] %v2184
    %2213 = vst [vmem:[#allocation4 + $0x40] sm:$0xff] %v2088
    %2214 = vst [vmem:[#allocation4 + $0x48] sm:$0xff] %v2121
    %2215 = vst [vmem:[#allocation4 + $0x50] sm:$0xff] %v2154
    %2216 = vst [vmem:[#allocation4 + $0x58] sm:$0xff] %v2187
    %2217 = vst [vmem:[#allocation4 + $0x60] sm:$0xff] %v2090
    %2218 = vst [vmem:[#allocation4 + $0x68] sm:$0xff] %v2123
    %2219 = vst [vmem:[#allocation4 + $0x70] sm:$0xff] %v2156
    %2220 = vst [vmem:[#allocation4 + $0x78] sm:$0xff] %v2189
    %2221 = vst [vmem:[#allocation4 + $0x80] sm:$0xff] %v2093
    %2222 = vst [vmem:[#allocation4 + $0x88] sm:$0xff] %v2126
    %2223 = vst [vmem:[#allocation4 + $0x90] sm:$0xff] %v2159
    %2224 = vst [vmem:[#allocation4 + $0x98] sm:$0xff] %v2192
    %2225 = vst [vmem:[#allocation4 + $0xa0] sm:$0xff] %v2095
    %2226 = vst [vmem:[#allocation4 + $0xa8] sm:$0xff] %v2128
    %2227 = vst [vmem:[#allocation4 + $0xb0] sm:$0xff] %v2161
    %2228 = vst [vmem:[#allocation4 + $0xb8] sm:$0xff] %v2194
    %2229 = vst [vmem:[#allocation4 + $0xc0] sm:$0xff] %v2098
    %2230 = vst [vmem:[#allocation4 + $0xc8] sm:$0xff] %v2131
    %2231 = vst [vmem:[#allocation4 + $0xd0] sm:$0xff] %v2164
    %2232 = vst [vmem:[#allocation4 + $0xd8] sm:$0xff] %v2197
    %2233 = vst [vmem:[#allocation4 + $0xe0] sm:$0xff] %v2100
    %2234 = vst [vmem:[#allocation4 + $0xe8] sm:$0xff] %v2133
    %2235 = vst [vmem:[#allocation4 + $0xf0] sm:$0xff] %v2166
    %2236 = vst [vmem:[#allocation4 + $0xf8] sm:$0xff] %v2199
    %2237 = vst [vmem:[#allocation4 + $0x100] sm:$0xff] %v2103
    %2238 = vst [vmem:[#allocation4 + $0x108] sm:$0xff] %v2136
    %2239 = vst [vmem:[#allocation4 + $0x110] sm:$0xff] %v2169
    %2240 = vst [vmem:[#allocation4 + $0x118] sm:$0xff] %v2202
    %2241 = vst [vmem:[#allocation5] sm:$0xff] 0.0
    %2242 = vst [vmem:[#allocation6] sm:$0xff] 0.0
    %s2243 = scalar_lea.vmem [#allocation12], 256
    %v2244 = vld [vmem:[%s2243] sm:$0xff]
    %v2245 = vld [vmem:[%s2243 + $0x8] sm:$0xff]
    %v2246 = vld [vmem:[%s2243 + $0x10] sm:$0xff]
    %v2247 = vld [vmem:[%s2243 + $0x18] sm:$0xff]
    %v2248 = vld [vmem:[%s2243 + $0x20] sm:$0xff]
    %v2249 = vld [vmem:[%s2243 + $0x28] sm:$0xff]
    %v2250 = vld [vmem:[%s2243 + $0x30] sm:$0xff]
    %v2251 = vld [vmem:[%s2243 + $0x38] sm:$0xff]
    %v2252 = vld [vmem:[%s2243 + $0x40] sm:$0xff]
    %v2253 = vld [vmem:[%s2243 + $0x48] sm:$0xff]
    %v2254 = vld [vmem:[%s2243 + $0x50] sm:$0xff]
    %v2255 = vld [vmem:[%s2243 + $0x58] sm:$0xff]
    %v2256 = vld [vmem:[%s2243 + $0x60] sm:$0xff]
    %v2257 = vld [vmem:[%s2243 + $0x68] sm:$0xff]
    %v2258 = vld [vmem:[%s2243 + $0x70] sm:$0xff]
    %v2259 = vld [vmem:[%s2243 + $0x78] sm:$0xff]
    %v2260 = vld [vmem:[%s2243 + $0x80] sm:$0xff]
    %v2261 = vld [vmem:[%s2243 + $0x88] sm:$0xff]
    %v2262 = vld [vmem:[%s2243 + $0x90] sm:$0xff]
    %v2263 = vld [vmem:[%s2243 + $0x98] sm:$0xff]
    %v2264 = vld [vmem:[%s2243 + $0xa0] sm:$0xff]
    %v2265 = vld [vmem:[%s2243 + $0xa8] sm:$0xff]
    %v2266 = vld [vmem:[%s2243 + $0xb0] sm:$0xff]
    %v2267 = vld [vmem:[%s2243 + $0xb8] sm:$0xff]
    %v2268 = vld [vmem:[%s2243 + $0xc0] sm:$0xff]
    %v2269 = vld [vmem:[%s2243 + $0xc8] sm:$0xff]
    %v2270 = vld [vmem:[%s2243 + $0xd0] sm:$0xff]
    %v2271 = vld [vmem:[%s2243 + $0xd8] sm:$0xff]
    %v2272 = vld [vmem:[%s2243 + $0xe0] sm:$0xff]
    %v2273 = vld [vmem:[%s2243 + $0xe8] sm:$0xff]
    %v2274 = vld [vmem:[%s2243 + $0xf0] sm:$0xff]
    %v2275 = vld [vmem:[%s2243 + $0xf8] sm:$0xff]
    %v2276 = vld [vmem:[#allocation5] sm:$0xff]
    %v2277 = vpack.c.bf16 %v2276, %v2276
    %v2278 = vld [vmem:[#allocation4] sm:$0xff]
    %v2279 = vld [vmem:[#allocation4 + $0x8] sm:$0xff]
    %v2280 = vld [vmem:[#allocation4 + $0x10] sm:$0xff]
    %v2281 = vld [vmem:[#allocation4 + $0x18] sm:$0xff]
    %v2314 = vunpack.c.l.b16 %v2244
    %v2315 = vunpack.c.h.b16 %v2244
    %v2316 = vunpack.c.l.b16 %v2245
    %v2317 = vunpack.c.h.b16 %v2245
    %v2318 = vunpack.c.l.b16 %v2246
    %v2319 = vunpack.c.h.b16 %v2246
    %v2320 = vunpack.c.l.b16 %v2247
    %v2321 = vunpack.c.h.b16 %v2247
    %v2322 = vunpack.c.l.b16 %v2248
    %v2323 = vunpack.c.h.b16 %v2248
    %v2324 = vunpack.c.l.b16 %v2249
    %v2325 = vunpack.c.h.b16 %v2249
    %v2326 = vunpack.c.l.b16 %v2250
    %v2327 = vunpack.c.h.b16 %v2250
    %v2328 = vunpack.c.l.b16 %v2251
    %v2329 = vunpack.c.h.b16 %v2251
    %v2330 = vunpack.c.l.b16 %v2252
    %v2331 = vunpack.c.h.b16 %v2252
    %v2332 = vunpack.c.l.b16 %v2253
    %v2333 = vunpack.c.h.b16 %v2253
    %v2334 = vunpack.c.l.b16 %v2254
    %v2335 = vunpack.c.h.b16 %v2254
    %v2336 = vunpack.c.l.b16 %v2255
    %v2337 = vunpack.c.h.b16 %v2255
    %v2338 = vunpack.c.l.b16 %v2256
    %v2339 = vunpack.c.h.b16 %v2256
    %v2340 = vunpack.c.l.b16 %v2257
    %v2341 = vunpack.c.h.b16 %v2257
    %v2342 = vunpack.c.l.b16 %v2258
    %v2343 = vunpack.c.h.b16 %v2258
    %v2344 = vunpack.c.l.b16 %v2259
    %v2345 = vunpack.c.h.b16 %v2259
    %v2346 = vunpack.c.l.b16 %v2260
    %v2347 = vunpack.c.h.b16 %v2260
    %v2348 = vunpack.c.l.b16 %v2261
    %v2349 = vunpack.c.h.b16 %v2261
    %v2350 = vunpack.c.l.b16 %v2262
    %v2351 = vunpack.c.h.b16 %v2262
    %v2352 = vunpack.c.l.b16 %v2263
    %v2353 = vunpack.c.h.b16 %v2263
    %v2354 = vunpack.c.l.b16 %v2264
    %v2355 = vunpack.c.h.b16 %v2264
    %v2356 = vunpack.c.l.b16 %v2265
    %v2357 = vunpack.c.h.b16 %v2265
    %v2358 = vunpack.c.l.b16 %v2266
    %v2359 = vunpack.c.h.b16 %v2266
    %v2360 = vunpack.c.l.b16 %v2267
    %v2361 = vunpack.c.h.b16 %v2267
    %v2362 = vunpack.c.l.b16 %v2268
    %v2363 = vunpack.c.h.b16 %v2268
    %v2364 = vunpack.c.l.b16 %v2269
    %v2365 = vunpack.c.h.b16 %v2269
    %v2366 = vunpack.c.l.b16 %v2270
    %v2367 = vunpack.c.h.b16 %v2270
    %v2368 = vunpack.c.l.b16 %v2271
    %v2369 = vunpack.c.h.b16 %v2271
    %v2370 = vunpack.c.l.b16 %v2272
    %v2371 = vunpack.c.h.b16 %v2272
    %v2372 = vunpack.c.l.b16 %v2273
    %v2373 = vunpack.c.h.b16 %v2273
    %v2374 = vunpack.c.l.b16 %v2274
    %v2375 = vunpack.c.h.b16 %v2274
    %v2376 = vunpack.c.l.b16 %v2275
    %v2377 = vunpack.c.h.b16 %v2275
    %v2378 = vpack.c.b16 %v2318, %v2314
    %v2379 = vpack.c.b16 %v2319, %v2315
    %v2380 = vpack.c.b16 %v2320, %v2316
    %v2381 = vpack.c.b16 %v2321, %v2317
    %v2382 = vpack.c.b16 %v2326, %v2322
    %v2383 = vpack.c.b16 %v2327, %v2323
    %v2384 = vpack.c.b16 %v2328, %v2324
    %v2385 = vpack.c.b16 %v2329, %v2325
    %v2386 = vpack.c.b16 %v2334, %v2330
    %v2387 = vpack.c.b16 %v2335, %v2331
    %v2388 = vpack.c.b16 %v2336, %v2332
    %v2389 = vpack.c.b16 %v2337, %v2333
    %v2390 = vpack.c.b16 %v2342, %v2338
    %v2391 = vpack.c.b16 %v2343, %v2339
    %v2392 = vpack.c.b16 %v2344, %v2340
    %v2393 = vpack.c.b16 %v2345, %v2341
    %v2394 = vpack.c.b16 %v2350, %v2346
    %v2395 = vpack.c.b16 %v2351, %v2347
    %v2396 = vpack.c.b16 %v2352, %v2348
    %v2397 = vpack.c.b16 %v2353, %v2349
    %v2398 = vpack.c.b16 %v2358, %v2354
    %v2399 = vpack.c.b16 %v2359, %v2355
    %v2400 = vpack.c.b16 %v2360, %v2356
    %v2401 = vpack.c.b16 %v2361, %v2357
    %v2402 = vpack.c.b16 %v2366, %v2362
    %v2403 = vpack.c.b16 %v2367, %v2363
    %v2404 = vpack.c.b16 %v2368, %v2364
    %v2405 = vpack.c.b16 %v2369, %v2365
    %v2406 = vpack.c.b16 %v2374, %v2370
    %v2407 = vpack.c.b16 %v2375, %v2371
    %v2408 = vpack.c.b16 %v2376, %v2372
    %v2409 = vpack.c.b16 %v2377, %v2373
    %2442 = vmatpush.bf16.msra.mxu0 %v2406
    %2443 = vmatpush.bf16.msra.mxu0 %v2402
    %2444 = vmatpush.bf16.msra.mxu0 %v2398
    %2445 = vmatpush.bf16.msra.mxu0 %v2394
    %2446 = vmatpush.bf16.msra.mxu0 %v2390
    %2447 = vmatpush.bf16.msra.mxu0 %v2386
    %2448 = vmatpush.bf16.msra.mxu0 %v2382
    %2449 = vmatpush.bf16.msra.mxu0 %v2378
    %2450 = vmatmul.bf16.gmra.mxu0 %v2277
    %v2451 = vpop.f32.mrf.mxu0
    %v2452 = vadd.f32 %v2278, %v2451
    %v2453 = vpop.f32.mrf.mxu0
    %2454 = vdwg.mxu0
    %2455 = vmatpush.bf16.msra.mxu0 %v2407
    %2456 = vmatpush.bf16.msra.mxu0 %v2403
    %2457 = vmatpush.bf16.msra.mxu0 %v2399
    %2458 = vmatpush.bf16.msra.mxu0 %v2395
    %2459 = vmatpush.bf16.msra.mxu0 %v2391
    %2460 = vmatpush.bf16.msra.mxu0 %v2387
    %2461 = vmatpush.bf16.msra.mxu0 %v2383
    %2462 = vmatpush.bf16.msra.mxu0 %v2379
    %2463 = vmatmul.bf16.gmra.mxu0 %v2277
    %v2464 = vpop.f32.mrf.mxu0
    %v2465 = vadd.f32 %v2279, %v2464
    %v2466 = vpop.f32.mrf.mxu0
    %2467 = vdwg.mxu0
    %2468 = vmatpush.bf16.msra.mxu0 %v2408
    %2469 = vmatpush.bf16.msra.mxu0 %v2404
    %2470 = vmatpush.bf16.msra.mxu0 %v2400
    %2471 = vmatpush.bf16.msra.mxu0 %v2396
    %2472 = vmatpush.bf16.msra.mxu0 %v2392
    %2473 = vmatpush.bf16.msra.mxu0 %v2388
    %2474 = vmatpush.bf16.msra.mxu0 %v2384
    %2475 = vmatpush.bf16.msra.mxu0 %v2380
    %2476 = vmatmul.bf16.gmra.mxu0 %v2277
    %v2477 = vpop.f32.mrf.mxu0
    %v2478 = vadd.f32 %v2280, %v2477
    %v2479 = vpop.f32.mrf.mxu0
    %2480 = vdwg.mxu0
    %2481 = vmatpush.bf16.msra.mxu0 %v2409
    %2482 = vmatpush.bf16.msra.mxu0 %v2405
    %2483 = vmatpush.bf16.msra.mxu0 %v2401
    %2484 = vmatpush.bf16.msra.mxu0 %v2397
    %2485 = vmatpush.bf16.msra.mxu0 %v2393
    %2486 = vmatpush.bf16.msra.mxu0 %v2389
    %2487 = vmatpush.bf16.msra.mxu0 %v2385
    %2488 = vmatpush.bf16.msra.mxu0 %v2381
    %2489 = vmatmul.bf16.gmra.mxu0 %v2277
    %v2490 = vpop.f32.mrf.mxu0
    %v2491 = vadd.f32 %v2281, %v2490
    %v2492 = vpop.f32.mrf.mxu0
    %2493 = vdwg.mxu0
    %v2494 = vxor.u32 %v2452, 2147483648
    %v2495 = vmul.f32 %v2494, 1.442695
    %v2496 = vpow.pop %v2495
    %v2497 = vadd.f32 %v2496, 1.0
    %v2498 = vrcp.pop %v2497
    %v2499 = vmul.f32 %v2497, %v2498
    %v2500 = vsub.f32 1.0, %v2499
    %v2501 = vmul.f32 %v2498, %v2500
    %v2502 = vadd.f32 %v2498, %v2501
    %vm2503 = vweird.f32 %v2497
    %vm2504 = vweird.f32 %v2498
    %vm2505 = vmor %vm2503, %vm2504
    %v2506 = vsel %vm2505, %v2498, %v2502
    %v2507 = vand.u32 2147483647, %v2497
    %vm2508 = vcmp.eq.f32.partialorder %v2507, 8.507059e+37
    %v2509 = vand.u32 %v2497, 2147483648
    %v2510 = vor.u32 1.1754944e-38, %v2509
    %v2511 = vsel %vm2508, %v2510, %v2506
    %v2512 = vmul.f32 1.0, %v2511
    %v2513 = vxor.u32 %v2465, 2147483648
    %v2514 = vmul.f32 %v2513, 1.442695
    %v2515 = vpow.pop %v2514
    %v2516 = vadd.f32 %v2515, 1.0
    %v2517 = vrcp.pop %v2516
    %v2518 = vmul.f32 %v2516, %v2517
    %v2519 = vsub.f32 1.0, %v2518
    %v2520 = vmul.f32 %v2517, %v2519
    %v2521 = vadd.f32 %v2517, %v2520
    %vm2522 = vweird.f32 %v2516
    %vm2523 = vweird.f32 %v2517
    %vm2524 = vmor %vm2522, %vm2523
    %v2525 = vsel %vm2524, %v2517, %v2521
    %v2526 = vand.u32 2147483647, %v2516
    %vm2527 = vcmp.eq.f32.partialorder %v2526, 8.507059e+37
    %v2528 = vand.u32 %v2516, 2147483648
    %v2529 = vor.u32 1.1754944e-38, %v2528
    %v2530 = vsel %vm2527, %v2529, %v2525
    %v2531 = vmul.f32 1.0, %v2530
    %v2532 = vtanh.pop %v2478
    %v2533 = vxor.u32 %v2491, 2147483648
    %v2534 = vmul.f32 %v2533, 1.442695
    %v2535 = vpow.pop %v2534
    %v2536 = vadd.f32 %v2535, 1.0
    %v2537 = vrcp.pop %v2536
    %v2538 = vmul.f32 %v2536, %v2537
    %v2539 = vsub.f32 1.0, %v2538
    %v2540 = vmul.f32 %v2537, %v2539
    %v2541 = vadd.f32 %v2537, %v2540
    %vm2542 = vweird.f32 %v2536
    %vm2543 = vweird.f32 %v2537
    %vm2544 = vmor %vm2542, %vm2543
    %v2545 = vsel %vm2544, %v2537, %v2541
    %v2546 = vand.u32 2147483647, %v2536
    %vm2547 = vcmp.eq.f32.partialorder %v2546, 8.507059e+37
    %v2548 = vand.u32 %v2536, 2147483648
    %v2549 = vor.u32 1.1754944e-38, %v2548
    %v2550 = vsel %vm2547, %v2549, %v2545
    %v2551 = vmul.f32 1.0, %v2550
    %v2552 = vld [vmem:[#allocation6] sm:$0xff]
    %v2553 = vmul.f32 %v2531, %v2552
    %v2554 = vmul.f32 %v2512, %v2532
    %v2555 = vadd.f32 %v2553, %v2554
    %v2556 = vtanh.pop %v2555
    %v2557 = vmul.f32 %v2551, %v2556
    %2558 = vst [vmem:[#allocation6] sm:$0xff] %v2555
    %2559 = vst [vmem:[#allocation5] sm:$0xff] %v2557
    %v2560 = vpack.c.bf16 %v2557, %v2557
    %2561 = vst [vmem:[#allocation15] sm:$0xf] %v2560
    %v2562 = vld [vmem:[#allocation5] sm:$0xff]
    %v2563 = vpack.c.bf16 %v2562, %v2562
    %v2564 = vld [vmem:[%s810] sm:$0xff]
    %v2565 = vld [vmem:[%s810 + $0x8] sm:$0xff]
    %v2566 = vld [vmem:[%s810 + $0x10] sm:$0xff]
    %v2567 = vld [vmem:[%s810 + $0x18] sm:$0xff]
    %2568 = vmatpush.bf16.msra.mxu0 %v2406
    %2569 = vmatpush.bf16.msra.mxu0 %v2402
    %2570 = vmatpush.bf16.msra.mxu0 %v2398
    %2571 = vmatpush.bf16.msra.mxu0 %v2394
    %2572 = vmatpush.bf16.msra.mxu0 %v2390
    %2573 = vmatpush.bf16.msra.mxu0 %v2386
    %2574 = vmatpush.bf16.msra.mxu0 %v2382
    %2575 = vmatpush.bf16.msra.mxu0 %v2378
    %2576 = vmatmul.bf16.gmra.mxu0 %v2563
    %v2577 = vpop.f32.mrf.mxu0
    %v2578 = vadd.f32 %v2564, %v2577
    %v2579 = vpop.f32.mrf.mxu0
    %2580 = vdwg.mxu0
    %2581 = vmatpush.bf16.msra.mxu0 %v2407
    %2582 = vmatpush.bf16.msra.mxu0 %v2403
    %2583 = vmatpush.bf16.msra.mxu0 %v2399
    %2584 = vmatpush.bf16.msra.mxu0 %v2395
    %2585 = vmatpush.bf16.msra.mxu0 %v2391
    %2586 = vmatpush.bf16.msra.mxu0 %v2387
    %2587 = vmatpush.bf16.msra.mxu0 %v2383
    %2588 = vmatpush.bf16.msra.mxu0 %v2379
    %2589 = vmatmul.bf16.gmra.mxu0 %v2563
    %v2590 = vpop.f32.mrf.mxu0
    %v2591 = vadd.f32 %v2565, %v2590
    %v2592 = vpop.f32.mrf.mxu0
    %2593 = vdwg.mxu0
    %2594 = vmatpush.bf16.msra.mxu0 %v2408
    %2595 = vmatpush.bf16.msra.mxu0 %v2404
    %2596 = vmatpush.bf16.msra.mxu0 %v2400
    %2597 = vmatpush.bf16.msra.mxu0 %v2396
    %2598 = vmatpush.bf16.msra.mxu0 %v2392
    %2599 = vmatpush.bf16.msra.mxu0 %v2388
    %2600 = vmatpush.bf16.msra.mxu0 %v2384
    %2601 = vmatpush.bf16.msra.mxu0 %v2380
    %2602 = vmatmul.bf16.gmra.mxu0 %v2563
    %v2603 = vpop.f32.mrf.mxu0
    %v2604 = vadd.f32 %v2566, %v2603
    %v2605 = vpop.f32.mrf.mxu0
    %2606 = vdwg.mxu0
    %2607 = vmatpush.bf16.msra.mxu0 %v2409
    %2608 = vmatpush.bf16.msra.mxu0 %v2405
    %2609 = vmatpush.bf16.msra.mxu0 %v2401
    %2610 = vmatpush.bf16.msra.mxu0 %v2397
    %2611 = vmatpush.bf16.msra.mxu0 %v2393
    %2612 = vmatpush.bf16.msra.mxu0 %v2389
    %2613 = vmatpush.bf16.msra.mxu0 %v2385
    %2614 = vmatpush.bf16.msra.mxu0 %v2381
    %2615 = vmatmul.bf16.gmra.mxu0 %v2563
    %v2616 = vpop.f32.mrf.mxu0
    %v2617 = vadd.f32 %v2567, %v2616
    %v2618 = vpop.f32.mrf.mxu0
    %2619 = vdwg.mxu0
    %v2620 = vxor.u32 %v2578, 2147483648
    %v2621 = vmul.f32 %v2620, 1.442695
    %v2622 = vpow.pop %v2621
    %v2623 = vadd.f32 %v2622, 1.0
    %v2624 = vrcp.pop %v2623
    %v2625 = vmul.f32 %v2623, %v2624
    %v2626 = vsub.f32 1.0, %v2625
    %v2627 = vmul.f32 %v2624, %v2626
    %v2628 = vadd.f32 %v2624, %v2627
    %vm2629 = vweird.f32 %v2623
    %vm2630 = vweird.f32 %v2624
    %vm2631 = vmor %vm2629, %vm2630
    %v2632 = vsel %vm2631, %v2624, %v2628
    %v2633 = vand.u32 2147483647, %v2623
    %vm2634 = vcmp.eq.f32.partialorder %v2633, 8.507059e+37
    %v2635 = vand.u32 %v2623, 2147483648
    %v2636 = vor.u32 1.1754944e-38, %v2635
    %v2637 = vsel %vm2634, %v2636, %v2632
    %v2638 = vmul.f32 1.0, %v2637
    %v2639 = vxor.u32 %v2591, 2147483648
    %v2640 = vmul.f32 %v2639, 1.442695
    %v2641 = vpow.pop %v2640
    %v2642 = vadd.f32 %v2641, 1.0
    %v2643 = vrcp.pop %v2642
    %v2644 = vmul.f32 %v2642, %v2643
    %v2645 = vsub.f32 1.0, %v2644
    %v2646 = vmul.f32 %v2643, %v2645
    %v2647 = vadd.f32 %v2643, %v2646
    %vm2648 = vweird.f32 %v2642
    %vm2649 = vweird.f32 %v2643
    %vm2650 = vmor %vm2648, %vm2649
    %v2651 = vsel %vm2650, %v2643, %v2647
    %v2652 = vand.u32 2147483647, %v2642
    %vm2653 = vcmp.eq.f32.partialorder %v2652, 8.507059e+37
    %v2654 = vand.u32 %v2642, 2147483648
    %v2655 = vor.u32 1.1754944e-38, %v2654
    %v2656 = vsel %vm2653, %v2655, %v2651
    %v2657 = vmul.f32 1.0, %v2656
    %v2658 = vtanh.pop %v2604
    %v2659 = vxor.u32 %v2617, 2147483648
    %v2660 = vmul.f32 %v2659, 1.442695
    %v2661 = vpow.pop %v2660
    %v2662 = vadd.f32 %v2661, 1.0
    %v2663 = vrcp.pop %v2662
    %v2664 = vmul.f32 %v2662, %v2663
    %v2665 = vsub.f32 1.0, %v2664
    %v2666 = vmul.f32 %v2663, %v2665
    %v2667 = vadd.f32 %v2663, %v2666
    %vm2668 = vweird.f32 %v2662
    %vm2669 = vweird.f32 %v2663
    %vm2670 = vmor %vm2668, %vm2669
    %v2671 = vsel %vm2670, %v2663, %v2667
    %v2672 = vand.u32 2147483647, %v2662
    %vm2673 = vcmp.eq.f32.partialorder %v2672, 8.507059e+37
    %v2674 = vand.u32 %v2662, 2147483648
    %v2675 = vor.u32 1.1754944e-38, %v2674
    %v2676 = vsel %vm2673, %v2675, %v2671
    %v2677 = vmul.f32 1.0, %v2676
    %v2678 = vld [vmem:[#allocation6] sm:$0xff]
    %v2679 = vmul.f32 %v2657, %v2678
    %v2680 = vmul.f32 %v2638, %v2658
    %v2681 = vadd.f32 %v2679, %v2680
    %v2682 = vtanh.pop %v2681
    %v2683 = vmul.f32 %v2677, %v2682
    %2684 = vst [vmem:[#allocation6] sm:$0xff] %v2681
    %2685 = vst [vmem:[#allocation5] sm:$0xff] %v2683
    %v2686 = vpack.c.bf16 %v2683, %v2683
    %s2687 = scalar_lea.vmem [#allocation15], 4
    %2688 = vst [vmem:[%s2687] sm:$0xf] %v2686
    %v2689 = vld [vmem:[#allocation5] sm:$0xff]
    %v2690 = vpack.c.bf16 %v2689, %v2689
    %v2691 = vld [vmem:[%s938] sm:$0xff]
    %v2692 = vld [vmem:[%s938 + $0x8] sm:$0xff]
    %v2693 = vld [vmem:[%s938 + $0x10] sm:$0xff]
    %v2694 = vld [vmem:[%s938 + $0x18] sm:$0xff]
    %2695 = vmatpush.bf16.msra.mxu0 %v2406
    %2696 = vmatpush.bf16.msra.mxu0 %v2402
    %2697 = vmatpush.bf16.msra.mxu0 %v2398
    %2698 = vmatpush.bf16.msra.mxu0 %v2394
    %2699 = vmatpush.bf16.msra.mxu0 %v2390
    %2700 = vmatpush.bf16.msra.mxu0 %v2386
    %2701 = vmatpush.bf16.msra.mxu0 %v2382
    %2702 = vmatpush.bf16.msra.mxu0 %v2378
    %2703 = vmatmul.bf16.gmra.mxu0 %v2690
    %v2704 = vpop.f32.mrf.mxu0
    %v2705 = vadd.f32 %v2691, %v2704
    %v2706 = vpop.f32.mrf.mxu0
    %2707 = vdwg.mxu0
    %2708 = vmatpush.bf16.msra.mxu0 %v2407
    %2709 = vmatpush.bf16.msra.mxu0 %v2403
    %2710 = vmatpush.bf16.msra.mxu0 %v2399
    %2711 = vmatpush.bf16.msra.mxu0 %v2395
    %2712 = vmatpush.bf16.msra.mxu0 %v2391
    %2713 = vmatpush.bf16.msra.mxu0 %v2387
    %2714 = vmatpush.bf16.msra.mxu0 %v2383
    %2715 = vmatpush.bf16.msra.mxu0 %v2379
    %2716 = vmatmul.bf16.gmra.mxu0 %v2690
    %v2717 = vpop.f32.mrf.mxu0
    %v2718 = vadd.f32 %v2692, %v2717
    %v2719 = vpop.f32.mrf.mxu0
    %2720 = vdwg.mxu0
    %2721 = vmatpush.bf16.msra.mxu0 %v2408
    %2722 = vmatpush.bf16.msra.mxu0 %v2404
    %2723 = vmatpush.bf16.msra.mxu0 %v2400
    %2724 = vmatpush.bf16.msra.mxu0 %v2396
    %2725 = vmatpush.bf16.msra.mxu0 %v2392
    %2726 = vmatpush.bf16.msra.mxu0 %v2388
    %2727 = vmatpush.bf16.msra.mxu0 %v2384
    %2728 = vmatpush.bf16.msra.mxu0 %v2380
    %2729 = vmatmul.bf16.gmra.mxu0 %v2690
    %v2730 = vpop.f32.mrf.mxu0
    %v2731 = vadd.f32 %v2693, %v2730
    %v2732 = vpop.f32.mrf.mxu0
    %2733 = vdwg.mxu0
    %2734 = vmatpush.bf16.msra.mxu0 %v2409
    %2735 = vmatpush.bf16.msra.mxu0 %v2405
    %2736 = vmatpush.bf16.msra.mxu0 %v2401
    %2737 = vmatpush.bf16.msra.mxu0 %v2397
    %2738 = vmatpush.bf16.msra.mxu0 %v2393
    %2739 = vmatpush.bf16.msra.mxu0 %v2389
    %2740 = vmatpush.bf16.msra.mxu0 %v2385
    %2741 = vmatpush.bf16.msra.mxu0 %v2381
    %2742 = vmatmul.bf16.gmra.mxu0 %v2690
    %v2743 = vpop.f32.mrf.mxu0
    %v2744 = vadd.f32 %v2694, %v2743
    %v2745 = vpop.f32.mrf.mxu0
    %2746 = vdwg.mxu0
    %v2747 = vxor.u32 %v2705, 2147483648
    %v2748 = vmul.f32 %v2747, 1.442695
    %v2749 = vpow.pop %v2748
    %v2750 = vadd.f32 %v2749, 1.0
    %v2751 = vrcp.pop %v2750
    %v2752 = vmul.f32 %v2750, %v2751
    %v2753 = vsub.f32 1.0, %v2752
    %v2754 = vmul.f32 %v2751, %v2753
    %v2755 = vadd.f32 %v2751, %v2754
    %vm2756 = vweird.f32 %v2750
    %vm2757 = vweird.f32 %v2751
    %vm2758 = vmor %vm2756, %vm2757
    %v2759 = vsel %vm2758, %v2751, %v2755
    %v2760 = vand.u32 2147483647, %v2750
    %vm2761 = vcmp.eq.f32.partialorder %v2760, 8.507059e+37
    %v2762 = vand.u32 %v2750, 2147483648
    %v2763 = vor.u32 1.1754944e-38, %v2762
    %v2764 = vsel %vm2761, %v2763, %v2759
    %v2765 = vmul.f32 1.0, %v2764
    %v2766 = vxor.u32 %v2718, 2147483648
    %v2767 = vmul.f32 %v2766, 1.442695
    %v2768 = vpow.pop %v2767
    %v2769 = vadd.f32 %v2768, 1.0
    %v2770 = vrcp.pop %v2769
    %v2771 = vmul.f32 %v2769, %v2770
    %v2772 = vsub.f32 1.0, %v2771
    %v2773 = vmul.f32 %v2770, %v2772
    %v2774 = vadd.f32 %v2770, %v2773
    %vm2775 = vweird.f32 %v2769
    %vm2776 = vweird.f32 %v2770
    %vm2777 = vmor %vm2775, %vm2776
    %v2778 = vsel %vm2777, %v2770, %v2774
    %v2779 = vand.u32 2147483647, %v2769
    %vm2780 = vcmp.eq.f32.partialorder %v2779, 8.507059e+37
    %v2781 = vand.u32 %v2769, 2147483648
    %v2782 = vor.u32 1.1754944e-38, %v2781
    %v2783 = vsel %vm2780, %v2782, %v2778
    %v2784 = vmul.f32 1.0, %v2783
    %v2785 = vtanh.pop %v2731
    %v2786 = vxor.u32 %v2744, 2147483648
    %v2787 = vmul.f32 %v2786, 1.442695
    %v2788 = vpow.pop %v2787
    %v2789 = vadd.f32 %v2788, 1.0
    %v2790 = vrcp.pop %v2789
    %v2791 = vmul.f32 %v2789, %v2790
    %v2792 = vsub.f32 1.0, %v2791
    %v2793 = vmul.f32 %v2790, %v2792
    %v2794 = vadd.f32 %v2790, %v2793
    %vm2795 = vweird.f32 %v2789
    %vm2796 = vweird.f32 %v2790
    %vm2797 = vmor %vm2795, %vm2796
    %v2798 = vsel %vm2797, %v2790, %v2794
    %v2799 = vand.u32 2147483647, %v2789
    %vm2800 = vcmp.eq.f32.partialorder %v2799, 8.507059e+37
    %v2801 = vand.u32 %v2789, 2147483648
    %v2802 = vor.u32 1.1754944e-38, %v2801
    %v2803 = vsel %vm2800, %v2802, %v2798
    %v2804 = vmul.f32 1.0, %v2803
    %v2805 = vld [vmem:[#allocation6] sm:$0xff]
    %v2806 = vmul.f32 %v2784, %v2805
    %v2807 = vmul.f32 %v2765, %v2785
    %v2808 = vadd.f32 %v2806, %v2807
    %v2809 = vtanh.pop %v2808
    %v2810 = vmul.f32 %v2804, %v2809
    %2811 = vst [vmem:[#allocation6] sm:$0xff] %v2808
    %2812 = vst [vmem:[#allocation5] sm:$0xff] %v2810
    %v2813 = vpack.c.bf16 %v2810, %v2810
    %s2814 = scalar_lea.vmem [#allocation15], 8
    %2815 = vst [vmem:[%s2814] sm:$0xf] %v2813
    %v2816 = vld [vmem:[#allocation5] sm:$0xff]
    %v2817 = vpack.c.bf16 %v2816, %v2816
    %v2818 = vld [vmem:[%s1066] sm:$0xff]
    %v2819 = vld [vmem:[%s1066 + $0x8] sm:$0xff]
    %v2820 = vld [vmem:[%s1066 + $0x10] sm:$0xff]
    %v2821 = vld [vmem:[%s1066 + $0x18] sm:$0xff]
    %2822 = vmatpush.bf16.msra.mxu0 %v2406
    %2823 = vmatpush.bf16.msra.mxu0 %v2402
    %2824 = vmatpush.bf16.msra.mxu0 %v2398
    %2825 = vmatpush.bf16.msra.mxu0 %v2394
    %2826 = vmatpush.bf16.msra.mxu0 %v2390
    %2827 = vmatpush.bf16.msra.mxu0 %v2386
    %2828 = vmatpush.bf16.msra.mxu0 %v2382
    %2829 = vmatpush.bf16.msra.mxu0 %v2378
    %2830 = vmatmul.bf16.gmra.mxu0 %v2817
    %v2831 = vpop.f32.mrf.mxu0
    %v2832 = vadd.f32 %v2818, %v2831
    %v2833 = vpop.f32.mrf.mxu0
    %2834 = vdwg.mxu0
    %2835 = vmatpush.bf16.msra.mxu0 %v2407
    %2836 = vmatpush.bf16.msra.mxu0 %v2403
    %2837 = vmatpush.bf16.msra.mxu0 %v2399
    %2838 = vmatpush.bf16.msra.mxu0 %v2395
    %2839 = vmatpush.bf16.msra.mxu0 %v2391
    %2840 = vmatpush.bf16.msra.mxu0 %v2387
    %2841 = vmatpush.bf16.msra.mxu0 %v2383
    %2842 = vmatpush.bf16.msra.mxu0 %v2379
    %2843 = vmatmul.bf16.gmra.mxu0 %v2817
    %v2844 = vpop.f32.mrf.mxu0
    %v2845 = vadd.f32 %v2819, %v2844
    %v2846 = vpop.f32.mrf.mxu0
    %2847 = vdwg.mxu0
    %2848 = vmatpush.bf16.msra.mxu0 %v2408
    %2849 = vmatpush.bf16.msra.mxu0 %v2404
    %2850 = vmatpush.bf16.msra.mxu0 %v2400
    %2851 = vmatpush.bf16.msra.mxu0 %v2396
    %2852 = vmatpush.bf16.msra.mxu0 %v2392
    %2853 = vmatpush.bf16.msra.mxu0 %v2388
    %2854 = vmatpush.bf16.msra.mxu0 %v2384
    %2855 = vmatpush.bf16.msra.mxu0 %v2380
    %2856 = vmatmul.bf16.gmra.mxu0 %v2817
    %v2857 = vpop.f32.mrf.mxu0
    %v2858 = vadd.f32 %v2820, %v2857
    %v2859 = vpop.f32.mrf.mxu0
    %2860 = vdwg.mxu0
    %2861 = vmatpush.bf16.msra.mxu0 %v2409
    %2862 = vmatpush.bf16.msra.mxu0 %v2405
    %2863 = vmatpush.bf16.msra.mxu0 %v2401
    %2864 = vmatpush.bf16.msra.mxu0 %v2397
    %2865 = vmatpush.bf16.msra.mxu0 %v2393
    %2866 = vmatpush.bf16.msra.mxu0 %v2389
    %2867 = vmatpush.bf16.msra.mxu0 %v2385
    %2868 = vmatpush.bf16.msra.mxu0 %v2381
    %2869 = vmatmul.bf16.gmra.mxu0 %v2817
    %v2870 = vpop.f32.mrf.mxu0
    %v2871 = vadd.f32 %v2821, %v2870
    %v2872 = vpop.f32.mrf.mxu0
    %2873 = vdwg.mxu0
    %v2874 = vxor.u32 %v2832, 2147483648
    %v2875 = vmul.f32 %v2874, 1.442695
    %v2876 = vpow.pop %v2875
    %v2877 = vadd.f32 %v2876, 1.0
    %v2878 = vrcp.pop %v2877
    %v2879 = vmul.f32 %v2877, %v2878
    %v2880 = vsub.f32 1.0, %v2879
    %v2881 = vmul.f32 %v2878, %v2880
    %v2882 = vadd.f32 %v2878, %v2881
    %vm2883 = vweird.f32 %v2877
    %vm2884 = vweird.f32 %v2878
    %vm2885 = vmor %vm2883, %vm2884
    %v2886 = vsel %vm2885, %v2878, %v2882
    %v2887 = vand.u32 2147483647, %v2877
    %vm2888 = vcmp.eq.f32.partialorder %v2887, 8.507059e+37
    %v2889 = vand.u32 %v2877, 2147483648
    %v2890 = vor.u32 1.1754944e-38, %v2889
    %v2891 = vsel %vm2888, %v2890, %v2886
    %v2892 = vmul.f32 1.0, %v2891
    %v2893 = vxor.u32 %v2845, 2147483648
    %v2894 = vmul.f32 %v2893, 1.442695
    %v2895 = vpow.pop %v2894
    %v2896 = vadd.f32 %v2895, 1.0
    %v2897 = vrcp.pop %v2896
    %v2898 = vmul.f32 %v2896, %v2897
    %v2899 = vsub.f32 1.0, %v2898
    %v2900 = vmul.f32 %v2897, %v2899
    %v2901 = vadd.f32 %v2897, %v2900
    %vm2902 = vweird.f32 %v2896
    %vm2903 = vweird.f32 %v2897
    %vm2904 = vmor %vm2902, %vm2903
    %v2905 = vsel %vm2904, %v2897, %v2901
    %v2906 = vand.u32 2147483647, %v2896
    %vm2907 = vcmp.eq.f32.partialorder %v2906, 8.507059e+37
    %v2908 = vand.u32 %v2896, 2147483648
    %v2909 = vor.u32 1.1754944e-38, %v2908
    %v2910 = vsel %vm2907, %v2909, %v2905
    %v2911 = vmul.f32 1.0, %v2910
    %v2912 = vtanh.pop %v2858
    %v2913 = vxor.u32 %v2871, 2147483648
    %v2914 = vmul.f32 %v2913, 1.442695
    %v2915 = vpow.pop %v2914
    %v2916 = vadd.f32 %v2915, 1.0
    %v2917 = vrcp.pop %v2916
    %v2918 = vmul.f32 %v2916, %v2917
    %v2919 = vsub.f32 1.0, %v2918
    %v2920 = vmul.f32 %v2917, %v2919
    %v2921 = vadd.f32 %v2917, %v2920
    %vm2922 = vweird.f32 %v2916
    %vm2923 = vweird.f32 %v2917
    %vm2924 = vmor %vm2922, %vm2923
    %v2925 = vsel %vm2924, %v2917, %v2921
    %v2926 = vand.u32 2147483647, %v2916
    %vm2927 = vcmp.eq.f32.partialorder %v2926, 8.507059e+37
    %v2928 = vand.u32 %v2916, 2147483648
    %v2929 = vor.u32 1.1754944e-38, %v2928
    %v2930 = vsel %vm2927, %v2929, %v2925
    %v2931 = vmul.f32 1.0, %v2930
    %v2932 = vld [vmem:[#allocation6] sm:$0xff]
    %v2933 = vmul.f32 %v2911, %v2932
    %v2934 = vmul.f32 %v2892, %v2912
    %v2935 = vadd.f32 %v2933, %v2934
    %v2936 = vtanh.pop %v2935
    %v2937 = vmul.f32 %v2931, %v2936
    %2938 = vst [vmem:[#allocation6] sm:$0xff] %v2935
    %2939 = vst [vmem:[#allocation5] sm:$0xff] %v2937
    %v2940 = vpack.c.bf16 %v2937, %v2937
    %s2941 = scalar_lea.vmem [#allocation15], 12
    %2942 = vst [vmem:[%s2941] sm:$0xf] %v2940
    %v2943 = vld [vmem:[#allocation5] sm:$0xff]
    %v2944 = vpack.c.bf16 %v2943, %v2943
    %v2945 = vld [vmem:[%s1194] sm:$0xff]
    %v2946 = vld [vmem:[%s1194 + $0x8] sm:$0xff]
    %v2947 = vld [vmem:[%s1194 + $0x10] sm:$0xff]
    %v2948 = vld [vmem:[%s1194 + $0x18] sm:$0xff]
    %2949 = vmatpush.bf16.msra.mxu0 %v2406
    %2950 = vmatpush.bf16.msra.mxu0 %v2402
    %2951 = vmatpush.bf16.msra.mxu0 %v2398
    %2952 = vmatpush.bf16.msra.mxu0 %v2394
    %2953 = vmatpush.bf16.msra.mxu0 %v2390
    %2954 = vmatpush.bf16.msra.mxu0 %v2386
    %2955 = vmatpush.bf16.msra.mxu0 %v2382
    %2956 = vmatpush.bf16.msra.mxu0 %v2378
    %2957 = vmatmul.bf16.gmra.mxu0 %v2944
    %v2958 = vpop.f32.mrf.mxu0
    %v2959 = vadd.f32 %v2945, %v2958
    %v2960 = vpop.f32.mrf.mxu0
    %2961 = vdwg.mxu0
    %2962 = vmatpush.bf16.msra.mxu0 %v2407
    %2963 = vmatpush.bf16.msra.mxu0 %v2403
    %2964 = vmatpush.bf16.msra.mxu0 %v2399
    %2965 = vmatpush.bf16.msra.mxu0 %v2395
    %2966 = vmatpush.bf16.msra.mxu0 %v2391
    %2967 = vmatpush.bf16.msra.mxu0 %v2387
    %2968 = vmatpush.bf16.msra.mxu0 %v2383
    %2969 = vmatpush.bf16.msra.mxu0 %v2379
    %2970 = vmatmul.bf16.gmra.mxu0 %v2944
    %v2971 = vpop.f32.mrf.mxu0
    %v2972 = vadd.f32 %v2946, %v2971
    %v2973 = vpop.f32.mrf.mxu0
    %2974 = vdwg.mxu0
    %2975 = vmatpush.bf16.msra.mxu0 %v2408
    %2976 = vmatpush.bf16.msra.mxu0 %v2404
    %2977 = vmatpush.bf16.msra.mxu0 %v2400
    %2978 = vmatpush.bf16.msra.mxu0 %v2396
    %2979 = vmatpush.bf16.msra.mxu0 %v2392
    %2980 = vmatpush.bf16.msra.mxu0 %v2388
    %2981 = vmatpush.bf16.msra.mxu0 %v2384
    %2982 = vmatpush.bf16.msra.mxu0 %v2380
    %2983 = vmatmul.bf16.gmra.mxu0 %v2944
    %v2984 = vpop.f32.mrf.mxu0
    %v2985 = vadd.f32 %v2947, %v2984
    %v2986 = vpop.f32.mrf.mxu0
    %2987 = vdwg.mxu0
    %2988 = vmatpush.bf16.msra.mxu0 %v2409
    %2989 = vmatpush.bf16.msra.mxu0 %v2405
    %2990 = vmatpush.bf16.msra.mxu0 %v2401
    %2991 = vmatpush.bf16.msra.mxu0 %v2397
    %2992 = vmatpush.bf16.msra.mxu0 %v2393
    %2993 = vmatpush.bf16.msra.mxu0 %v2389
    %2994 = vmatpush.bf16.msra.mxu0 %v2385
    %2995 = vmatpush.bf16.msra.mxu0 %v2381
    %2996 = vmatmul.bf16.gmra.mxu0 %v2944
    %v2997 = vpop.f32.mrf.mxu0
    %v2998 = vadd.f32 %v2948, %v2997
    %v2999 = vpop.f32.mrf.mxu0
    %3000 = vdwg.mxu0
    %v3001 = vxor.u32 %v2959, 2147483648
    %v3002 = vmul.f32 %v3001, 1.442695
    %v3003 = vpow.pop %v3002
    %v3004 = vadd.f32 %v3003, 1.0
    %v3005 = vrcp.pop %v3004
    %v3006 = vmul.f32 %v3004, %v3005
    %v3007 = vsub.f32 1.0, %v3006
    %v3008 = vmul.f32 %v3005, %v3007
    %v3009 = vadd.f32 %v3005, %v3008
    %vm3010 = vweird.f32 %v3004
    %vm3011 = vweird.f32 %v3005
    %vm3012 = vmor %vm3010, %vm3011
    %v3013 = vsel %vm3012, %v3005, %v3009
    %v3014 = vand.u32 2147483647, %v3004
    %vm3015 = vcmp.eq.f32.partialorder %v3014, 8.507059e+37
    %v3016 = vand.u32 %v3004, 2147483648
    %v3017 = vor.u32 1.1754944e-38, %v3016
    %v3018 = vsel %vm3015, %v3017, %v3013
    %v3019 = vmul.f32 1.0, %v3018
    %v3020 = vxor.u32 %v2972, 2147483648
    %v3021 = vmul.f32 %v3020, 1.442695
    %v3022 = vpow.pop %v3021
    %v3023 = vadd.f32 %v3022, 1.0
    %v3024 = vrcp.pop %v3023
    %v3025 = vmul.f32 %v3023, %v3024
    %v3026 = vsub.f32 1.0, %v3025
    %v3027 = vmul.f32 %v3024, %v3026
    %v3028 = vadd.f32 %v3024, %v3027
    %vm3029 = vweird.f32 %v3023
    %vm3030 = vweird.f32 %v3024
    %vm3031 = vmor %vm3029, %vm3030
    %v3032 = vsel %vm3031, %v3024, %v3028
    %v3033 = vand.u32 2147483647, %v3023
    %vm3034 = vcmp.eq.f32.partialorder %v3033, 8.507059e+37
    %v3035 = vand.u32 %v3023, 2147483648
    %v3036 = vor.u32 1.1754944e-38, %v3035
    %v3037 = vsel %vm3034, %v3036, %v3032
    %v3038 = vmul.f32 1.0, %v3037
    %v3039 = vtanh.pop %v2985
    %v3040 = vxor.u32 %v2998, 2147483648
    %v3041 = vmul.f32 %v3040, 1.442695
    %v3042 = vpow.pop %v3041
    %v3043 = vadd.f32 %v3042, 1.0
    %v3044 = vrcp.pop %v3043
    %v3045 = vmul.f32 %v3043, %v3044
    %v3046 = vsub.f32 1.0, %v3045
    %v3047 = vmul.f32 %v3044, %v3046
    %v3048 = vadd.f32 %v3044, %v3047
    %vm3049 = vweird.f32 %v3043
    %vm3050 = vweird.f32 %v3044
    %vm3051 = vmor %vm3049, %vm3050
    %v3052 = vsel %vm3051, %v3044, %v3048
    %v3053 = vand.u32 2147483647, %v3043
    %vm3054 = vcmp.eq.f32.partialorder %v3053, 8.507059e+37
    %v3055 = vand.u32 %v3043, 2147483648
    %v3056 = vor.u32 1.1754944e-38, %v3055
    %v3057 = vsel %vm3054, %v3056, %v3052
    %v3058 = vmul.f32 1.0, %v3057
    %v3059 = vld [vmem:[#allocation6] sm:$0xff]
    %v3060 = vmul.f32 %v3038, %v3059
    %v3061 = vmul.f32 %v3019, %v3039
    %v3062 = vadd.f32 %v3060, %v3061
    %v3063 = vtanh.pop %v3062
    %v3064 = vmul.f32 %v3058, %v3063
    %3065 = vst [vmem:[#allocation6] sm:$0xff] %v3062
    %3066 = vst [vmem:[#allocation5] sm:$0xff] %v3064
    %v3067 = vpack.c.bf16 %v3064, %v3064
    %s3068 = scalar_lea.vmem [#allocation15], 16
    %3069 = vst [vmem:[%s3068] sm:$0xf] %v3067
    %v3070 = vld [vmem:[#allocation5] sm:$0xff]
    %v3071 = vpack.c.bf16 %v3070, %v3070
    %v3072 = vld [vmem:[%s1322] sm:$0xff]
    %v3073 = vld [vmem:[%s1322 + $0x8] sm:$0xff]
    %v3074 = vld [vmem:[%s1322 + $0x10] sm:$0xff]
    %v3075 = vld [vmem:[%s1322 + $0x18] sm:$0xff]
    %3076 = vmatpush.bf16.msra.mxu0 %v2406
    %3077 = vmatpush.bf16.msra.mxu0 %v2402
    %3078 = vmatpush.bf16.msra.mxu0 %v2398
    %3079 = vmatpush.bf16.msra.mxu0 %v2394
    %3080 = vmatpush.bf16.msra.mxu0 %v2390
    %3081 = vmatpush.bf16.msra.mxu0 %v2386
    %3082 = vmatpush.bf16.msra.mxu0 %v2382
    %3083 = vmatpush.bf16.msra.mxu0 %v2378
    %3084 = vmatmul.bf16.gmra.mxu0 %v3071
    %v3085 = vpop.f32.mrf.mxu0
    %v3086 = vadd.f32 %v3072, %v3085
    %v3087 = vpop.f32.mrf.mxu0
    %3088 = vdwg.mxu0
    %3089 = vmatpush.bf16.msra.mxu0 %v2407
    %3090 = vmatpush.bf16.msra.mxu0 %v2403
    %3091 = vmatpush.bf16.msra.mxu0 %v2399
    %3092 = vmatpush.bf16.msra.mxu0 %v2395
    %3093 = vmatpush.bf16.msra.mxu0 %v2391
    %3094 = vmatpush.bf16.msra.mxu0 %v2387
    %3095 = vmatpush.bf16.msra.mxu0 %v2383
    %3096 = vmatpush.bf16.msra.mxu0 %v2379
    %3097 = vmatmul.bf16.gmra.mxu0 %v3071
    %v3098 = vpop.f32.mrf.mxu0
    %v3099 = vadd.f32 %v3073, %v3098
    %v3100 = vpop.f32.mrf.mxu0
    %3101 = vdwg.mxu0
    %3102 = vmatpush.bf16.msra.mxu0 %v2408
    %3103 = vmatpush.bf16.msra.mxu0 %v2404
    %3104 = vmatpush.bf16.msra.mxu0 %v2400
    %3105 = vmatpush.bf16.msra.mxu0 %v2396
    %3106 = vmatpush.bf16.msra.mxu0 %v2392
    %3107 = vmatpush.bf16.msra.mxu0 %v2388
    %3108 = vmatpush.bf16.msra.mxu0 %v2384
    %3109 = vmatpush.bf16.msra.mxu0 %v2380
    %3110 = vmatmul.bf16.gmra.mxu0 %v3071
    %v3111 = vpop.f32.mrf.mxu0
    %v3112 = vadd.f32 %v3074, %v3111
    %v3113 = vpop.f32.mrf.mxu0
    %3114 = vdwg.mxu0
    %3115 = vmatpush.bf16.msra.mxu0 %v2409
    %3116 = vmatpush.bf16.msra.mxu0 %v2405
    %3117 = vmatpush.bf16.msra.mxu0 %v2401
    %3118 = vmatpush.bf16.msra.mxu0 %v2397
    %3119 = vmatpush.bf16.msra.mxu0 %v2393
    %3120 = vmatpush.bf16.msra.mxu0 %v2389
    %3121 = vmatpush.bf16.msra.mxu0 %v2385
    %3122 = vmatpush.bf16.msra.mxu0 %v2381
    %3123 = vmatmul.bf16.gmra.mxu0 %v3071
    %v3124 = vpop.f32.mrf.mxu0
    %v3125 = vadd.f32 %v3075, %v3124
    %v3126 = vpop.f32.mrf.mxu0
    %3127 = vdwg.mxu0
    %v3128 = vxor.u32 %v3086, 2147483648
    %v3129 = vmul.f32 %v3128, 1.442695
    %v3130 = vpow.pop %v3129
    %v3131 = vadd.f32 %v3130, 1.0
    %v3132 = vrcp.pop %v3131
    %v3133 = vmul.f32 %v3131, %v3132
    %v3134 = vsub.f32 1.0, %v3133
    %v3135 = vmul.f32 %v3132, %v3134
    %v3136 = vadd.f32 %v3132, %v3135
    %vm3137 = vweird.f32 %v3131
    %vm3138 = vweird.f32 %v3132
    %vm3139 = vmor %vm3137, %vm3138
    %v3140 = vsel %vm3139, %v3132, %v3136
    %v3141 = vand.u32 2147483647, %v3131
    %vm3142 = vcmp.eq.f32.partialorder %v3141, 8.507059e+37
    %v3143 = vand.u32 %v3131, 2147483648
    %v3144 = vor.u32 1.1754944e-38, %v3143
    %v3145 = vsel %vm3142, %v3144, %v3140
    %v3146 = vmul.f32 1.0, %v3145
    %v3147 = vxor.u32 %v3099, 2147483648
    %v3148 = vmul.f32 %v3147, 1.442695
    %v3149 = vpow.pop %v3148
    %v3150 = vadd.f32 %v3149, 1.0
    %v3151 = vrcp.pop %v3150
    %v3152 = vmul.f32 %v3150, %v3151
    %v3153 = vsub.f32 1.0, %v3152
    %v3154 = vmul.f32 %v3151, %v3153
    %v3155 = vadd.f32 %v3151, %v3154
    %vm3156 = vweird.f32 %v3150
    %vm3157 = vweird.f32 %v3151
    %vm3158 = vmor %vm3156, %vm3157
    %v3159 = vsel %vm3158, %v3151, %v3155
    %v3160 = vand.u32 2147483647, %v3150
    %vm3161 = vcmp.eq.f32.partialorder %v3160, 8.507059e+37
    %v3162 = vand.u32 %v3150, 2147483648
    %v3163 = vor.u32 1.1754944e-38, %v3162
    %v3164 = vsel %vm3161, %v3163, %v3159
    %v3165 = vmul.f32 1.0, %v3164
    %v3166 = vtanh.pop %v3112
    %v3167 = vxor.u32 %v3125, 2147483648
    %v3168 = vmul.f32 %v3167, 1.442695
    %v3169 = vpow.pop %v3168
    %v3170 = vadd.f32 %v3169, 1.0
    %v3171 = vrcp.pop %v3170
    %v3172 = vmul.f32 %v3170, %v3171
    %v3173 = vsub.f32 1.0, %v3172
    %v3174 = vmul.f32 %v3171, %v3173
    %v3175 = vadd.f32 %v3171, %v3174
    %vm3176 = vweird.f32 %v3170
    %vm3177 = vweird.f32 %v3171
    %vm3178 = vmor %vm3176, %vm3177
    %v3179 = vsel %vm3178, %v3171, %v3175
    %v3180 = vand.u32 2147483647, %v3170
    %vm3181 = vcmp.eq.f32.partialorder %v3180, 8.507059e+37
    %v3182 = vand.u32 %v3170, 2147483648
    %v3183 = vor.u32 1.1754944e-38, %v3182
    %v3184 = vsel %vm3181, %v3183, %v3179
    %v3185 = vmul.f32 1.0, %v3184
    %v3186 = vld [vmem:[#allocation6] sm:$0xff]
    %v3187 = vmul.f32 %v3165, %v3186
    %v3188 = vmul.f32 %v3146, %v3166
    %v3189 = vadd.f32 %v3187, %v3188
    %v3190 = vtanh.pop %v3189
    %v3191 = vmul.f32 %v3185, %v3190
    %3192 = vst [vmem:[#allocation6] sm:$0xff] %v3189
    %3193 = vst [vmem:[#allocation5] sm:$0xff] %v3191
    %v3194 = vpack.c.bf16 %v3191, %v3191
    %s3195 = scalar_lea.vmem [#allocation15], 20
    %3196 = vst [vmem:[%s3195] sm:$0xf] %v3194
    %v3197 = vld [vmem:[#allocation5] sm:$0xff]
    %v3198 = vpack.c.bf16 %v3197, %v3197
    %v3199 = vld [vmem:[%s1450] sm:$0xff]
    %v3200 = vld [vmem:[%s1450 + $0x8] sm:$0xff]
    %v3201 = vld [vmem:[%s1450 + $0x10] sm:$0xff]
    %v3202 = vld [vmem:[%s1450 + $0x18] sm:$0xff]
    %3203 = vmatpush.bf16.msra.mxu0 %v2406
    %3204 = vmatpush.bf16.msra.mxu0 %v2402
    %3205 = vmatpush.bf16.msra.mxu0 %v2398
    %3206 = vmatpush.bf16.msra.mxu0 %v2394
    %3207 = vmatpush.bf16.msra.mxu0 %v2390
    %3208 = vmatpush.bf16.msra.mxu0 %v2386
    %3209 = vmatpush.bf16.msra.mxu0 %v2382
    %3210 = vmatpush.bf16.msra.mxu0 %v2378
    %3211 = vmatmul.bf16.gmra.mxu0 %v3198
    %v3212 = vpop.f32.mrf.mxu0
    %v3213 = vadd.f32 %v3199, %v3212
    %v3214 = vpop.f32.mrf.mxu0
    %3215 = vdwg.mxu0
    %3216 = vmatpush.bf16.msra.mxu0 %v2407
    %3217 = vmatpush.bf16.msra.mxu0 %v2403
    %3218 = vmatpush.bf16.msra.mxu0 %v2399
    %3219 = vmatpush.bf16.msra.mxu0 %v2395
    %3220 = vmatpush.bf16.msra.mxu0 %v2391
    %3221 = vmatpush.bf16.msra.mxu0 %v2387
    %3222 = vmatpush.bf16.msra.mxu0 %v2383
    %3223 = vmatpush.bf16.msra.mxu0 %v2379
    %3224 = vmatmul.bf16.gmra.mxu0 %v3198
    %v3225 = vpop.f32.mrf.mxu0
    %v3226 = vadd.f32 %v3200, %v3225
    %v3227 = vpop.f32.mrf.mxu0
    %3228 = vdwg.mxu0
    %3229 = vmatpush.bf16.msra.mxu0 %v2408
    %3230 = vmatpush.bf16.msra.mxu0 %v2404
    %3231 = vmatpush.bf16.msra.mxu0 %v2400
    %3232 = vmatpush.bf16.msra.mxu0 %v2396
    %3233 = vmatpush.bf16.msra.mxu0 %v2392
    %3234 = vmatpush.bf16.msra.mxu0 %v2388
    %3235 = vmatpush.bf16.msra.mxu0 %v2384
    %3236 = vmatpush.bf16.msra.mxu0 %v2380
    %3237 = vmatmul.bf16.gmra.mxu0 %v3198
    %v3238 = vpop.f32.mrf.mxu0
    %v3239 = vadd.f32 %v3201, %v3238
    %v3240 = vpop.f32.mrf.mxu0
    %3241 = vdwg.mxu0
    %3242 = vmatpush.bf16.msra.mxu0 %v2409
    %3243 = vmatpush.bf16.msra.mxu0 %v2405
    %3244 = vmatpush.bf16.msra.mxu0 %v2401
    %3245 = vmatpush.bf16.msra.mxu0 %v2397
    %3246 = vmatpush.bf16.msra.mxu0 %v2393
    %3247 = vmatpush.bf16.msra.mxu0 %v2389
    %3248 = vmatpush.bf16.msra.mxu0 %v2385
    %3249 = vmatpush.bf16.msra.mxu0 %v2381
    %3250 = vmatmul.bf16.gmra.mxu0 %v3198
    %v3251 = vpop.f32.mrf.mxu0
    %v3252 = vadd.f32 %v3202, %v3251
    %v3253 = vpop.f32.mrf.mxu0
    %3254 = vdwg.mxu0
    %v3255 = vxor.u32 %v3213, 2147483648
    %v3256 = vmul.f32 %v3255, 1.442695
    %v3257 = vpow.pop %v3256
    %v3258 = vadd.f32 %v3257, 1.0
    %v3259 = vrcp.pop %v3258
    %v3260 = vmul.f32 %v3258, %v3259
    %v3261 = vsub.f32 1.0, %v3260
    %v3262 = vmul.f32 %v3259, %v3261
    %v3263 = vadd.f32 %v3259, %v3262
    %vm3264 = vweird.f32 %v3258
    %vm3265 = vweird.f32 %v3259
    %vm3266 = vmor %vm3264, %vm3265
    %v3267 = vsel %vm3266, %v3259, %v3263
    %v3268 = vand.u32 2147483647, %v3258
    %vm3269 = vcmp.eq.f32.partialorder %v3268, 8.507059e+37
    %v3270 = vand.u32 %v3258, 2147483648
    %v3271 = vor.u32 1.1754944e-38, %v3270
    %v3272 = vsel %vm3269, %v3271, %v3267
    %v3273 = vmul.f32 1.0, %v3272
    %v3274 = vxor.u32 %v3226, 2147483648
    %v3275 = vmul.f32 %v3274, 1.442695
    %v3276 = vpow.pop %v3275
    %v3277 = vadd.f32 %v3276, 1.0
    %v3278 = vrcp.pop %v3277
    %v3279 = vmul.f32 %v3277, %v3278
    %v3280 = vsub.f32 1.0, %v3279
    %v3281 = vmul.f32 %v3278, %v3280
    %v3282 = vadd.f32 %v3278, %v3281
    %vm3283 = vweird.f32 %v3277
    %vm3284 = vweird.f32 %v3278
    %vm3285 = vmor %vm3283, %vm3284
    %v3286 = vsel %vm3285, %v3278, %v3282
    %v3287 = vand.u32 2147483647, %v3277
    %vm3288 = vcmp.eq.f32.partialorder %v3287, 8.507059e+37
    %v3289 = vand.u32 %v3277, 2147483648
    %v3290 = vor.u32 1.1754944e-38, %v3289
    %v3291 = vsel %vm3288, %v3290, %v3286
    %v3292 = vmul.f32 1.0, %v3291
    %v3293 = vtanh.pop %v3239
    %v3294 = vxor.u32 %v3252, 2147483648
    %v3295 = vmul.f32 %v3294, 1.442695
    %v3296 = vpow.pop %v3295
    %v3297 = vadd.f32 %v3296, 1.0
    %v3298 = vrcp.pop %v3297
    %v3299 = vmul.f32 %v3297, %v3298
    %v3300 = vsub.f32 1.0, %v3299
    %v3301 = vmul.f32 %v3298, %v3300
    %v3302 = vadd.f32 %v3298, %v3301
    %vm3303 = vweird.f32 %v3297
    %vm3304 = vweird.f32 %v3298
    %vm3305 = vmor %vm3303, %vm3304
    %v3306 = vsel %vm3305, %v3298, %v3302
    %v3307 = vand.u32 2147483647, %v3297
    %vm3308 = vcmp.eq.f32.partialorder %v3307, 8.507059e+37
    %v3309 = vand.u32 %v3297, 2147483648
    %v3310 = vor.u32 1.1754944e-38, %v3309
    %v3311 = vsel %vm3308, %v3310, %v3306
    %v3312 = vmul.f32 1.0, %v3311
    %v3313 = vld [vmem:[#allocation6] sm:$0xff]
    %v3314 = vmul.f32 %v3292, %v3313
    %v3315 = vmul.f32 %v3273, %v3293
    %v3316 = vadd.f32 %v3314, %v3315
    %v3317 = vtanh.pop %v3316
    %v3318 = vmul.f32 %v3312, %v3317
    %3319 = vst [vmem:[#allocation6] sm:$0xff] %v3316
    %3320 = vst [vmem:[#allocation5] sm:$0xff] %v3318
    %v3321 = vpack.c.bf16 %v3318, %v3318
    %s3322 = scalar_lea.vmem [#allocation15], 24
    %3323 = vst [vmem:[%s3322] sm:$0xf] %v3321
    %v3324 = vld [vmem:[#allocation5] sm:$0xff]
    %v3325 = vpack.c.bf16 %v3324, %v3324
    %v3326 = vld [vmem:[%s1578] sm:$0xff]
    %v3327 = vld [vmem:[%s1578 + $0x8] sm:$0xff]
    %v3328 = vld [vmem:[%s1578 + $0x10] sm:$0xff]
    %v3329 = vld [vmem:[%s1578 + $0x18] sm:$0xff]
    %3330 = vmatpush.bf16.msra.mxu0 %v2406
    %3331 = vmatpush.bf16.msra.mxu0 %v2402
    %3332 = vmatpush.bf16.msra.mxu0 %v2398
    %3333 = vmatpush.bf16.msra.mxu0 %v2394
    %3334 = vmatpush.bf16.msra.mxu0 %v2390
    %3335 = vmatpush.bf16.msra.mxu0 %v2386
    %3336 = vmatpush.bf16.msra.mxu0 %v2382
    %3337 = vmatpush.bf16.msra.mxu0 %v2378
    %3338 = vmatmul.bf16.gmra.mxu0 %v3325
    %v3339 = vpop.f32.mrf.mxu0
    %v3340 = vadd.f32 %v3326, %v3339
    %v3341 = vpop.f32.mrf.mxu0
    %3342 = vdwg.mxu0
    %3343 = vmatpush.bf16.msra.mxu0 %v2407
    %3344 = vmatpush.bf16.msra.mxu0 %v2403
    %3345 = vmatpush.bf16.msra.mxu0 %v2399
    %3346 = vmatpush.bf16.msra.mxu0 %v2395
    %3347 = vmatpush.bf16.msra.mxu0 %v2391
    %3348 = vmatpush.bf16.msra.mxu0 %v2387
    %3349 = vmatpush.bf16.msra.mxu0 %v2383
    %3350 = vmatpush.bf16.msra.mxu0 %v2379
    %3351 = vmatmul.bf16.gmra.mxu0 %v3325
    %v3352 = vpop.f32.mrf.mxu0
    %v3353 = vadd.f32 %v3327, %v3352
    %v3354 = vpop.f32.mrf.mxu0
    %3355 = vdwg.mxu0
    %3356 = vmatpush.bf16.msra.mxu0 %v2408
    %3357 = vmatpush.bf16.msra.mxu0 %v2404
    %3358 = vmatpush.bf16.msra.mxu0 %v2400
    %3359 = vmatpush.bf16.msra.mxu0 %v2396
    %3360 = vmatpush.bf16.msra.mxu0 %v2392
    %3361 = vmatpush.bf16.msra.mxu0 %v2388
    %3362 = vmatpush.bf16.msra.mxu0 %v2384
    %3363 = vmatpush.bf16.msra.mxu0 %v2380
    %3364 = vmatmul.bf16.gmra.mxu0 %v3325
    %v3365 = vpop.f32.mrf.mxu0
    %v3366 = vadd.f32 %v3328, %v3365
    %v3367 = vpop.f32.mrf.mxu0
    %3368 = vdwg.mxu0
    %3369 = vmatpush.bf16.msra.mxu0 %v2409
    %3370 = vmatpush.bf16.msra.mxu0 %v2405
    %3371 = vmatpush.bf16.msra.mxu0 %v2401
    %3372 = vmatpush.bf16.msra.mxu0 %v2397
    %3373 = vmatpush.bf16.msra.mxu0 %v2393
    %3374 = vmatpush.bf16.msra.mxu0 %v2389
    %3375 = vmatpush.bf16.msra.mxu0 %v2385
    %3376 = vmatpush.bf16.msra.mxu0 %v2381
    %3377 = vmatmul.bf16.gmra.mxu0 %v3325
    %v3378 = vpop.f32.mrf.mxu0
    %v3379 = vadd.f32 %v3329, %v3378
    %v3380 = vpop.f32.mrf.mxu0
    %3381 = vdwg.mxu0
    %v3382 = vxor.u32 %v3340, 2147483648
    %v3383 = vmul.f32 %v3382, 1.442695
    %v3384 = vpow.pop %v3383
    %v3385 = vadd.f32 %v3384, 1.0
    %v3386 = vrcp.pop %v3385
    %v3387 = vmul.f32 %v3385, %v3386
    %v3388 = vsub.f32 1.0, %v3387
    %v3389 = vmul.f32 %v3386, %v3388
    %v3390 = vadd.f32 %v3386, %v3389
    %vm3391 = vweird.f32 %v3385
    %vm3392 = vweird.f32 %v3386
    %vm3393 = vmor %vm3391, %vm3392
    %v3394 = vsel %vm3393, %v3386, %v3390
    %v3395 = vand.u32 2147483647, %v3385
    %vm3396 = vcmp.eq.f32.partialorder %v3395, 8.507059e+37
    %v3397 = vand.u32 %v3385, 2147483648
    %v3398 = vor.u32 1.1754944e-38, %v3397
    %v3399 = vsel %vm3396, %v3398, %v3394
    %v3400 = vmul.f32 1.0, %v3399
    %v3401 = vxor.u32 %v3353, 2147483648
    %v3402 = vmul.f32 %v3401, 1.442695
    %v3403 = vpow.pop %v3402
    %v3404 = vadd.f32 %v3403, 1.0
    %v3405 = vrcp.pop %v3404
    %v3406 = vmul.f32 %v3404, %v3405
    %v3407 = vsub.f32 1.0, %v3406
    %v3408 = vmul.f32 %v3405, %v3407
    %v3409 = vadd.f32 %v3405, %v3408
    %vm3410 = vweird.f32 %v3404
    %vm3411 = vweird.f32 %v3405
    %vm3412 = vmor %vm3410, %vm3411
    %v3413 = vsel %vm3412, %v3405, %v3409
    %v3414 = vand.u32 2147483647, %v3404
    %vm3415 = vcmp.eq.f32.partialorder %v3414, 8.507059e+37
    %v3416 = vand.u32 %v3404, 2147483648
    %v3417 = vor.u32 1.1754944e-38, %v3416
    %v3418 = vsel %vm3415, %v3417, %v3413
    %v3419 = vmul.f32 1.0, %v3418
    %v3420 = vtanh.pop %v3366
    %v3421 = vxor.u32 %v3379, 2147483648
    %v3422 = vmul.f32 %v3421, 1.442695
    %v3423 = vpow.pop %v3422
    %v3424 = vadd.f32 %v3423, 1.0
    %v3425 = vrcp.pop %v3424
    %v3426 = vmul.f32 %v3424, %v3425
    %v3427 = vsub.f32 1.0, %v3426
    %v3428 = vmul.f32 %v3425, %v3427
    %v3429 = vadd.f32 %v3425, %v3428
    %vm3430 = vweird.f32 %v3424
    %vm3431 = vweird.f32 %v3425
    %vm3432 = vmor %vm3430, %vm3431
    %v3433 = vsel %vm3432, %v3425, %v3429
    %v3434 = vand.u32 2147483647, %v3424
    %vm3435 = vcmp.eq.f32.partialorder %v3434, 8.507059e+37
    %v3436 = vand.u32 %v3424, 2147483648
    %v3437 = vor.u32 1.1754944e-38, %v3436
    %v3438 = vsel %vm3435, %v3437, %v3433
    %v3439 = vmul.f32 1.0, %v3438
    %v3440 = vld [vmem:[#allocation6] sm:$0xff]
    %v3441 = vmul.f32 %v3419, %v3440
    %v3442 = vmul.f32 %v3400, %v3420
    %v3443 = vadd.f32 %v3441, %v3442
    %v3444 = vtanh.pop %v3443
    %v3445 = vmul.f32 %v3439, %v3444
    %3446 = vst [vmem:[#allocation6] sm:$0xff] %v3443
    %3447 = vst [vmem:[#allocation5] sm:$0xff] %v3445
    %v3448 = vpack.c.bf16 %v3445, %v3445
    %s3449 = scalar_lea.vmem [#allocation15], 28
    %3450 = vst [vmem:[%s3449] sm:$0xf] %v3448
    %v3451 = vld [vmem:[#allocation5] sm:$0xff]
    %v3452 = vpack.c.bf16 %v3451, %v3451
    %v3453 = vld [vmem:[%s1706] sm:$0xff]
    %v3454 = vld [vmem:[%s1706 + $0x8] sm:$0xff]
    %v3455 = vld [vmem:[%s1706 + $0x10] sm:$0xff]
    %v3456 = vld [vmem:[%s1706 + $0x18] sm:$0xff]
    %3457 = vmatpush.bf16.msra.mxu0 %v2406
    %3458 = vmatpush.bf16.msra.mxu0 %v2402
    %3459 = vmatpush.bf16.msra.mxu0 %v2398
    %3460 = vmatpush.bf16.msra.mxu0 %v2394
    %3461 = vmatpush.bf16.msra.mxu0 %v2390
    %3462 = vmatpush.bf16.msra.mxu0 %v2386
    %3463 = vmatpush.bf16.msra.mxu0 %v2382
    %3464 = vmatpush.bf16.msra.mxu0 %v2378
    %3465 = vmatmul.bf16.gmra.mxu0 %v3452
    %v3466 = vpop.f32.mrf.mxu0
    %v3467 = vadd.f32 %v3453, %v3466
    %v3468 = vpop.f32.mrf.mxu0
    %3469 = vdwg.mxu0
    %3470 = vmatpush.bf16.msra.mxu0 %v2407
    %3471 = vmatpush.bf16.msra.mxu0 %v2403
    %3472 = vmatpush.bf16.msra.mxu0 %v2399
    %3473 = vmatpush.bf16.msra.mxu0 %v2395
    %3474 = vmatpush.bf16.msra.mxu0 %v2391
    %3475 = vmatpush.bf16.msra.mxu0 %v2387
    %3476 = vmatpush.bf16.msra.mxu0 %v2383
    %3477 = vmatpush.bf16.msra.mxu0 %v2379
    %3478 = vmatmul.bf16.gmra.mxu0 %v3452
    %v3479 = vpop.f32.mrf.mxu0
    %v3480 = vadd.f32 %v3454, %v3479
    %v3481 = vpop.f32.mrf.mxu0
    %3482 = vdwg.mxu0
    %3483 = vmatpush.bf16.msra.mxu0 %v2408
    %3484 = vmatpush.bf16.msra.mxu0 %v2404
    %3485 = vmatpush.bf16.msra.mxu0 %v2400
    %3486 = vmatpush.bf16.msra.mxu0 %v2396
    %3487 = vmatpush.bf16.msra.mxu0 %v2392
    %3488 = vmatpush.bf16.msra.mxu0 %v2388
    %3489 = vmatpush.bf16.msra.mxu0 %v2384
    %3490 = vmatpush.bf16.msra.mxu0 %v2380
    %3491 = vmatmul.bf16.gmra.mxu0 %v3452
    %v3492 = vpop.f32.mrf.mxu0
    %v3493 = vadd.f32 %v3455, %v3492
    %v3494 = vpop.f32.mrf.mxu0
    %3495 = vdwg.mxu0
    %3496 = vmatpush.bf16.msra.mxu0 %v2409
    %3497 = vmatpush.bf16.msra.mxu0 %v2405
    %3498 = vmatpush.bf16.msra.mxu0 %v2401
    %3499 = vmatpush.bf16.msra.mxu0 %v2397
    %3500 = vmatpush.bf16.msra.mxu0 %v2393
    %3501 = vmatpush.bf16.msra.mxu0 %v2389
    %3502 = vmatpush.bf16.msra.mxu0 %v2385
    %3503 = vmatpush.bf16.msra.mxu0 %v2381
    %3504 = vmatmul.bf16.gmra.mxu0 %v3452
    %v3505 = vpop.f32.mrf.mxu0
    %v3506 = vadd.f32 %v3456, %v3505
    %v3507 = vpop.f32.mrf.mxu0
    %3508 = vdwg.mxu0
    %v3509 = vxor.u32 %v3467, 2147483648
    %v3510 = vmul.f32 %v3509, 1.442695
    %v3511 = vpow.pop %v3510
    %v3512 = vadd.f32 %v3511, 1.0
    %v3513 = vrcp.pop %v3512
    %v3514 = vmul.f32 %v3512, %v3513
    %v3515 = vsub.f32 1.0, %v3514
    %v3516 = vmul.f32 %v3513, %v3515
    %v3517 = vadd.f32 %v3513, %v3516
    %vm3518 = vweird.f32 %v3512
    %vm3519 = vweird.f32 %v3513
    %vm3520 = vmor %vm3518, %vm3519
    %v3521 = vsel %vm3520, %v3513, %v3517
    %v3522 = vand.u32 2147483647, %v3512
    %vm3523 = vcmp.eq.f32.partialorder %v3522, 8.507059e+37
    %v3524 = vand.u32 %v3512, 2147483648
    %v3525 = vor.u32 1.1754944e-38, %v3524
    %v3526 = vsel %vm3523, %v3525, %v3521
    %v3527 = vmul.f32 1.0, %v3526
    %v3528 = vxor.u32 %v3480, 2147483648
    %v3529 = vmul.f32 %v3528, 1.442695
    %v3530 = vpow.pop %v3529
    %v3531 = vadd.f32 %v3530, 1.0
    %v3532 = vrcp.pop %v3531
    %v3533 = vmul.f32 %v3531, %v3532
    %v3534 = vsub.f32 1.0, %v3533
    %v3535 = vmul.f32 %v3532, %v3534
    %v3536 = vadd.f32 %v3532, %v3535
    %vm3537 = vweird.f32 %v3531
    %vm3538 = vweird.f32 %v3532
    %vm3539 = vmor %vm3537, %vm3538
    %v3540 = vsel %vm3539, %v3532, %v3536
    %v3541 = vand.u32 2147483647, %v3531
    %vm3542 = vcmp.eq.f32.partialorder %v3541, 8.507059e+37
    %v3543 = vand.u32 %v3531, 2147483648
    %v3544 = vor.u32 1.1754944e-38, %v3543
    %v3545 = vsel %vm3542, %v3544, %v3540
    %v3546 = vmul.f32 1.0, %v3545
    %v3547 = vtanh.pop %v3493
    %v3548 = vxor.u32 %v3506, 2147483648
    %v3549 = vmul.f32 %v3548, 1.442695
    %v3550 = vpow.pop %v3549
    %v3551 = vadd.f32 %v3550, 1.0
    %v3552 = vrcp.pop %v3551
    %v3553 = vmul.f32 %v3551, %v3552
    %v3554 = vsub.f32 1.0, %v3553
    %v3555 = vmul.f32 %v3552, %v3554
    %v3556 = vadd.f32 %v3552, %v3555
    %vm3557 = vweird.f32 %v3551
    %vm3558 = vweird.f32 %v3552
    %vm3559 = vmor %vm3557, %vm3558
    %v3560 = vsel %vm3559, %v3552, %v3556
    %v3561 = vand.u32 2147483647, %v3551
    %vm3562 = vcmp.eq.f32.partialorder %v3561, 8.507059e+37
    %v3563 = vand.u32 %v3551, 2147483648
    %v3564 = vor.u32 1.1754944e-38, %v3563
    %v3565 = vsel %vm3562, %v3564, %v3560
    %v3566 = vmul.f32 1.0, %v3565
    %v3567 = vld [vmem:[#allocation6] sm:$0xff]
    %v3568 = vmul.f32 %v3546, %v3567
    %v3569 = vmul.f32 %v3527, %v3547
    %v3570 = vadd.f32 %v3568, %v3569
    %v3571 = vtanh.pop %v3570
    %v3572 = vmul.f32 %v3566, %v3571
    %3573 = vst [vmem:[#allocation6] sm:$0xff] %v3570
    %3574 = vst [vmem:[#allocation5] sm:$0xff] %v3572
    %v3575 = vpack.c.bf16 %v3572, %v3572
    %s3576 = scalar_lea.vmem [#allocation15], 32
    %3577 = vst [vmem:[%s3576] sm:$0xf] %v3575
    // Predicated region
    $region34: #{tpu_custom_call.1} parent=1 // pred_check
      _
    $region35: #{tpu_custom_call.1} parent=1 // pred_check_branch
      %3579 = sbr.rel (0) target = $region37
    $region36: #{tpu_custom_call.1} parent=1 // pred_region
      %3581 = vsyncadd [#allocation9], 0
      %s3582 = sshll.u32 [#allocation15], 4
      %s3583 = int_to_ptr.vmem [resolvable:$true] %s3582
      %s3584 = sshll.u32 %s4, 4
      %s3585 = int_to_ptr.hbm [resolvable:$true] %s3584
      %3590 = dma.vmem_to_hbm [thread:$0]  %s3583, 576, %s3585, [#allocation9], 64, 64, 4
    $region37: #{tpu_custom_call.1} parent=1 // pred_fallthru
      _
    // Predicated region
    $region38: #{tpu_custom_call.1} parent=1 // pred_check
      _
    $region39: #{tpu_custom_call.1} parent=1 // pred_check_branch
      %3592 = sbr.rel (0) target = $region41
    $region40: #{tpu_custom_call.1} parent=1 // pred_region
      %3594 = dma.done [#allocation9], 576
    $region41: #{tpu_custom_call.1} parent=1 // pred_fallthru
      _
    %3595 = vsyncpa [#allocation8], 1
    %3596 = vsyncpa [#allocation11], 1
    %3597 = vsyncpa [#allocation14], 1
    %3598 = vsyncpa [#allocation9], 1

</llo_original>
